<compile_context>
chip_gen: v7x
topology: tpu7x:2x2x1
jax: 0.10.0
libtpu: 0.0.40
codegen_flags: <defaults>
</compile_context>

<pallas_src>
import functools
import math

import jax
import jax.numpy as jnp
from jax import lax
from jax.experimental import pallas as pl
from jax.experimental.pallas import tpu as pltpu


# ----------------------------------------------------------------------------
# Fused kernel: depthwise 7x7 conv -> Linear -> GELU -> Linear(+gamma folded)
# -> residual add, for one H row-strip of one batch element.
# ----------------------------------------------------------------------------
def _cnblock_fused_kernel(x_ref, wdw_ref, bdw_ref, w1_ref, b1_ref, w2_ref,
                          b2_ref, out_ref, *, TH, W, K, PAD):
    # x_ref  : (1, H+2*PAD, W+2*PAD, C)  -- whole padded image (VMEM resident)
    # wdw_ref: (K, K, C)   bdw_ref: (1, C)
    # w1_ref : (C, 4C) bf16   b1_ref: (1, 4C) f32
    # w2_ref : (4C, C) bf16 (layer_scale folded)   b2_ref: (1, C) f32 (folded)
    # out_ref: (1, TH*W, C)
    C = x_ref.shape[-1]
    strip = pl.program_id(1)
    row0 = strip * TH                      # start row of this strip (padded coords)

    # Load the (TH+K-1, W+K-1, C) halo window for this strip once.
    xw = x_ref[0, pl.ds(row0, TH + K - 1), :, :].astype(jnp.float32)

    # Depthwise 7x7 conv (cross-correlation, matches torch Conv2d), f32 on VPU.
    wdw = wdw_ref[...]                     # (K, K, C)
    acc = jnp.zeros((TH, W, C), jnp.float32)
    for kh in range(K):
        for kw in range(K):
            tap = wdw[kh, kw].reshape(1, 1, C)
            acc = acc + xw[kh:kh + TH, kw:kw + W, :] * tap
    y = (acc + bdw_ref[...].reshape(1, 1, C)).reshape(TH * W, C)   # (rows, C)

    # Pointwise MLP: Linear -> GELU(exact) -> Linear, bf16 MXU, f32 accumulate.
    h = jnp.dot(y.astype(jnp.bfloat16), w1_ref[...],
                preferred_element_type=jnp.float32) + b1_ref[...]     # (rows, 4C)
    h = 0.5 * h * (1.0 + lax.erf(h * (1.0 / math.sqrt(2.0))))
    o = jnp.dot(h.astype(jnp.bfloat16), w2_ref[...],
                preferred_element_type=jnp.float32) + b2_ref[...]     # (rows, C)

    # Residual from the interior of the already-loaded padded window.
    res = xw[PAD:PAD + TH, PAD:PAD + W, :].reshape(TH * W, C)
    out_ref[0] = (o + res).astype(out_ref.dtype)


def _pick_strip_height(H, W, target_rows):
    """Largest TH dividing H with TH*W <= target_rows and TH*W % 8 == 0."""
    cands = [th for th in range(1, H + 1)
             if H % th == 0 and (th * W) % 8 == 0 and th * W <= target_rows]
    if cands:
        return max(cands)
    return H  # fall back to whole image (block == full dim is always legal)


# ----------------------------------------------------------------------------
# Wrapper
# ----------------------------------------------------------------------------
def cnblock_forward(x_nchw, params, *, block_rows=512):
    """x_nchw: (B, C, H, W) float32. Returns (B, C, H, W)."""
    B, C, H, W = x_nchw.shape
    K, PAD = 7, 3
    Hp, Wp = H + 2 * PAD, W + 2 * PAD

    x_nhwc = jnp.transpose(x_nchw, (0, 2, 3, 1))                        # (B,H,W,C)
    x_pad = jnp.pad(x_nhwc, ((0, 0), (PAD, PAD), (PAD, PAD), (0, 0)))   # (B,Hp,Wp,C)

    TH = _pick_strip_height(H, W, block_rows)
    n_strips = H // TH
    TM = TH * W

    # Fold layer_scale into the second linear layer; cast matmul weights to bf16.
    gamma = params["gamma"].reshape(1, C).astype(jnp.float32)
    w1 = params["w1"].astype(jnp.bfloat16)                              # (C, 4C)
    b1 = params["b1"].reshape(1, 4 * C).astype(jnp.float32)
    w2 = (params["w2"].astype(jnp.float32) * gamma).astype(jnp.bfloat16)  # (4C, C)
    b2 = (params["b2"].reshape(1, C).astype(jnp.float32) * gamma)
    dw_w = params["dw_w"].astype(jnp.float32)                           # (K, K, C)
    dw_b = params["dw_b"].reshape(1, C).astype(jnp.float32)

    # Advisory cost estimate + explicit VMEM budget.
    flops = int(B * H * W * C * (K * K * 2 + 16 * C))
    transcendentals = int(B * H * W * 4 * C)
    bytes_accessed = int(x_pad.size * 4 + B * H * W * C * 4
                         + (w1.size + w2.size) * 2 + (b1.size + b2.size) * 4)
    vmem_need = (2 * Hp * Wp * C * 4            # resident padded image (dbl-buffered)
                 + 2 * TM * C * 4               # output block (dbl-buffered)
                 + (TH + K - 1) * Wp * C * 4    # strip window temp
                 + TM * 4 * C * 4               # hidden temp
                 + (w1.size + w2.size) * 2 + (K * K * C + 8 * C) * 4)
    vmem_limit = int(min(100 * 2 ** 20, max(32 * 2 ** 20, 2 * vmem_need)))

    out_flat = pl.pallas_call(
        functools.partial(_cnblock_fused_kernel, TH=TH, W=W, K=K, PAD=PAD),
        out_shape=jax.ShapeDtypeStruct((B, H * W, C), x_nchw.dtype),
        grid_spec=pltpu.PrefetchScalarGridSpec(
            num_scalar_prefetch=0,
            grid=(B, n_strips),
            in_specs=[
                # padded image: index ignores the strip axis -> VMEM resident
                pl.BlockSpec((1, Hp, Wp, C), lambda b, h: (b, 0, 0, 0)),
                pl.BlockSpec((K, K, C), lambda b, h: (0, 0, 0)),
                pl.BlockSpec((1, C), lambda b, h: (0, 0)),
                pl.BlockSpec((C, 4 * C), lambda b, h: (0, 0)),
                pl.BlockSpec((1, 4 * C), lambda b, h: (0, 0)),
                pl.BlockSpec((4 * C, C), lambda b, h: (0, 0)),
                pl.BlockSpec((1, C), lambda b, h: (0, 0)),
            ],
            out_specs=pl.BlockSpec((1, TM, C), lambda b, h: (b, h, 0)),
        ),
        compiler_params=pltpu.CompilerParams(
            dimension_semantics=("parallel", "parallel"),
            vmem_limit_bytes=vmem_limit),
        cost_estimate=pl.CostEstimate(flops=flops,
                                      transcendentals=transcendentals,
                                      bytes_accessed=bytes_accessed),
    )(x_pad, dw_w, dw_b, w1, b1, w2, b2)

    out_nhwc = out_flat.reshape(B, H, W, C)
    return jnp.transpose(out_nhwc, (0, 3, 1, 2))                        # NCHW


# ----------------------------------------------------------------------------
# Pure-JAX f32 reference (for the correctness check)
# ----------------------------------------------------------------------------
def cnblock_reference(x_nchw, params):
    B, C, H, W = x_nchw.shape
    K, PAD = 7, 3
    x = jnp.transpose(x_nchw, (0, 2, 3, 1)).astype(jnp.float32)          # (B,H,W,C)
    xp = jnp.pad(x, ((0, 0), (PAD, PAD), (PAD, PAD), (0, 0)))
    y = jnp.zeros_like(x)
    for kh in range(K):
        for kw in range(K):
            y = y + xp[:, kh:kh + H, kw:kw + W, :] * params["dw_w"][kh, kw]
    y = y + params["dw_b"].reshape(1, 1, 1, C)
    h = jnp.einsum("bhwc,cd->bhwd", y, params["w1"]) + params["b1"].reshape(1, 1, 1, 4 * C)
    h = 0.5 * h * (1.0 + lax.erf(h / math.sqrt(2.0)))
    o = jnp.einsum("bhwd,dc->bhwc", h, params["w2"]) + params["b2"].reshape(1, 1, 1, C)
    o = o * params["gamma"].reshape(1, 1, 1, C)
    o = o + x
    return jnp.transpose(o, (0, 3, 1, 2))


def init_params(key, dim, layer_scale=1e-6):
    ks = jax.random.split(key, 6)
    return {
        "dw_w": jax.random.normal(ks[0], (7, 7, dim), jnp.float32) * 0.1,
        "dw_b": jax.random.normal(ks[1], (dim,), jnp.float32) * 0.05,
        "w1": jax.random.normal(ks[2], (dim, 4 * dim), jnp.float32) * 0.1,
        "b1": jax.random.normal(ks[3], (4 * dim,), jnp.float32) * 0.05,
        "w2": jax.random.normal(ks[4], (4 * dim, dim), jnp.float32) * 0.1,
        "b2": jax.random.normal(ks[5], (dim,), jnp.float32) * 0.05,
        "gamma": jnp.full((dim,), layer_scale, jnp.float32),
    }


if __name__ == "__main__":
    B, C, H, W = 2, 32, 16, 16
    key = jax.random.PRNGKey(0)
    k_x, k_p = jax.random.split(key)
    x = jax.random.normal(k_x, (B, C, H, W), jnp.float32)
    # layer_scale=0.1 keeps the block branch numerically significant so the
    # check is meaningful (bf16 MXU error after scaling is << tolerance).
    params = init_params(k_p, C, layer_scale=0.1)

    # block_rows=128 -> TH=8 -> 2 row-strips per image: exercises the strip grid.
    out = cnblock_forward(x, params, block_rows=128)
    out = jax.block_until_ready(out)

    ref = cnblock_reference(x, params)
    assert out.shape == (B, C, H, W)
    max_err = float(jnp.max(jnp.abs(out - ref)))
    assert jnp.allclose(out, ref, atol=3e-2, rtol=3e-2), f"mismatch vs reference (max err {max_err})"

    print("KERNEL_OK")
</pallas_src>

<mosaic_0001>
module attributes {stable_mosaic.version = 11 : i64} {
  func.func @_cnblock_fused_kernel(%arg0: i32, %arg1: i32, %arg2: memref<1x22x22x32xf32, #tpu.memory_space<vmem>>, %arg3: memref<7x7x32xf32, #tpu.memory_space<vmem>>, %arg4: memref<1x32xf32, #tpu.memory_space<vmem>>, %arg5: memref<32x128xbf16, #tpu.memory_space<vmem>>, %arg6: memref<1x128xf32, #tpu.memory_space<vmem>>, %arg7: memref<128x32xbf16, #tpu.memory_space<vmem>>, %arg8: memref<1x32xf32, #tpu.memory_space<vmem>>, %arg9: memref<1x128x32xf32, #tpu.memory_space<vmem>>) attributes {dimension_semantics = [#tpu.dimension_semantics<parallel>, #tpu.dimension_semantics<parallel>], iteration_bounds = array<i64: 2, 2>, scalar_prefetch = 0 : i64, scratch_operands = 0 : i64, tpu.core_type = #tpu.core_type<tc>, window_params = [{transform_indices = @transform_0, window_bounds = array<i64: 1, 22, 22, 32>}, {pipeline_mode = #tpu.pipeline_mode<synchronous>, transform_indices = @transform_1, window_bounds = array<i64: 7, 7, 32>}, {pipeline_mode = #tpu.pipeline_mode<synchronous>, transform_indices = @transform_2, window_bounds = array<i64: 1, 32>}, {pipeline_mode = #tpu.pipeline_mode<synchronous>, transform_indices = @transform_3, window_bounds = array<i64: 32, 128>}, {pipeline_mode = #tpu.pipeline_mode<synchronous>, transform_indices = @transform_4, window_bounds = array<i64: 1, 128>}, {pipeline_mode = #tpu.pipeline_mode<synchronous>, transform_indices = @transform_5, window_bounds = array<i64: 128, 32>}, {pipeline_mode = #tpu.pipeline_mode<synchronous>, transform_indices = @transform_6, window_bounds = array<i64: 1, 32>}, {transform_indices = @transform_7, window_bounds = array<i64: 1, 128, 32>}]} {
    %c8_i32 = arith.constant 8 : i32
    %0 = arith.muli %arg1, %c8_i32 : i32
    %c0 = arith.constant 0 : index
    %1 = arith.index_cast %0 : i32 to index
    %c0_0 = arith.constant 0 : index
    %c0_1 = arith.constant 0 : index
    %2 = vector.load %arg2[%c0, %1, %c0_0, %c0_1] : memref<1x22x22x32xf32, #tpu.memory_space<vmem>>, vector<1x14x22x32xf32>
    %3 = vector.shape_cast %2 : vector<1x14x22x32xf32> to vector<14x22x32xf32>
    %c0_2 = arith.constant 0 : index
    %c0_3 = arith.constant 0 : index
    %c0_4 = arith.constant 0 : index
    %4 = vector.load %arg3[%c0_2, %c0_3, %c0_4] : memref<7x7x32xf32, #tpu.memory_space<vmem>>, vector<7x7x32xf32>
    %cst = arith.constant 0.000000e+00 : f32
    %5 = vector.broadcast %cst : f32 to vector<8x16x32xf32>
    %6 = vector.extract_strided_slice %4 {offsets = [0, 0, 0], sizes = [1, 1, 32], strides = [1, 1, 1]} : vector<7x7x32xf32> to vector<1x1x32xf32>
    %7 = vector.shape_cast %6 : vector<1x1x32xf32> to vector<32xf32>
    %8 = vector.shape_cast %7 : vector<32xf32> to vector<1x1x32xf32>
    %9 = vector.extract_strided_slice %3 {offsets = [0, 0, 0], sizes = [8, 16, 32], strides = [1, 1, 1]} : vector<14x22x32xf32> to vector<8x16x32xf32>
    %10 = vector.broadcast %8 : vector<1x1x32xf32> to vector<8x16x32xf32>
    %11 = arith.mulf %9, %10 : vector<8x16x32xf32>
    %12 = arith.addf %5, %11 : vector<8x16x32xf32>
    %13 = vector.extract_strided_slice %4 {offsets = [0, 1, 0], sizes = [1, 1, 32], strides = [1, 1, 1]} : vector<7x7x32xf32> to vector<1x1x32xf32>
    %14 = vector.shape_cast %13 : vector<1x1x32xf32> to vector<32xf32>
    %15 = vector.shape_cast %14 : vector<32xf32> to vector<1x1x32xf32>
    %16 = vector.extract_strided_slice %3 {offsets = [0, 1, 0], sizes = [8, 16, 32], strides = [1, 1, 1]} : vector<14x22x32xf32> to vector<8x16x32xf32>
    %17 = vector.broadcast %15 : vector<1x1x32xf32> to vector<8x16x32xf32>
    %18 = arith.mulf %16, %17 : vector<8x16x32xf32>
    %19 = arith.addf %12, %18 : vector<8x16x32xf32>
    %20 = vector.extract_strided_slice %4 {offsets = [0, 2, 0], sizes = [1, 1, 32], strides = [1, 1, 1]} : vector<7x7x32xf32> to vector<1x1x32xf32>
    %21 = vector.shape_cast %20 : vector<1x1x32xf32> to vector<32xf32>
    %22 = vector.shape_cast %21 : vector<32xf32> to vector<1x1x32xf32>
    %23 = vector.extract_strided_slice %3 {offsets = [0, 2, 0], sizes = [8, 16, 32], strides = [1, 1, 1]} : vector<14x22x32xf32> to vector<8x16x32xf32>
    %24 = vector.broadcast %22 : vector<1x1x32xf32> to vector<8x16x32xf32>
    %25 = arith.mulf %23, %24 : vector<8x16x32xf32>
    %26 = arith.addf %19, %25 : vector<8x16x32xf32>
    %27 = vector.extract_strided_slice %4 {offsets = [0, 3, 0], sizes = [1, 1, 32], strides = [1, 1, 1]} : vector<7x7x32xf32> to vector<1x1x32xf32>
    %28 = vector.shape_cast %27 : vector<1x1x32xf32> to vector<32xf32>
    %29 = vector.shape_cast %28 : vector<32xf32> to vector<1x1x32xf32>
    %30 = vector.extract_strided_slice %3 {offsets = [0, 3, 0], sizes = [8, 16, 32], strides = [1, 1, 1]} : vector<14x22x32xf32> to vector<8x16x32xf32>
    %31 = vector.broadcast %29 : vector<1x1x32xf32> to vector<8x16x32xf32>
    %32 = arith.mulf %30, %31 : vector<8x16x32xf32>
    %33 = arith.addf %26, %32 : vector<8x16x32xf32>
    %34 = vector.extract_strided_slice %4 {offsets = [0, 4, 0], sizes = [1, 1, 32], strides = [1, 1, 1]} : vector<7x7x32xf32> to vector<1x1x32xf32>
    %35 = vector.shape_cast %34 : vector<1x1x32xf32> to vector<32xf32>
    %36 = vector.shape_cast %35 : vector<32xf32> to vector<1x1x32xf32>
    %37 = vector.extract_strided_slice %3 {offsets = [0, 4, 0], sizes = [8, 16, 32], strides = [1, 1, 1]} : vector<14x22x32xf32> to vector<8x16x32xf32>
    %38 = vector.broadcast %36 : vector<1x1x32xf32> to vector<8x16x32xf32>
    %39 = arith.mulf %37, %38 : vector<8x16x32xf32>
    %40 = arith.addf %33, %39 : vector<8x16x32xf32>
    %41 = vector.extract_strided_slice %4 {offsets = [0, 5, 0], sizes = [1, 1, 32], strides = [1, 1, 1]} : vector<7x7x32xf32> to vector<1x1x32xf32>
    %42 = vector.shape_cast %41 : vector<1x1x32xf32> to vector<32xf32>
    %43 = vector.shape_cast %42 : vector<32xf32> to vector<1x1x32xf32>
    %44 = vector.extract_strided_slice %3 {offsets = [0, 5, 0], sizes = [8, 16, 32], strides = [1, 1, 1]} : vector<14x22x32xf32> to vector<8x16x32xf32>
    %45 = vector.broadcast %43 : vector<1x1x32xf32> to vector<8x16x32xf32>
    %46 = arith.mulf %44, %45 : vector<8x16x32xf32>
    %47 = arith.addf %40, %46 : vector<8x16x32xf32>
    %48 = vector.extract_strided_slice %4 {offsets = [0, 6, 0], sizes = [1, 1, 32], strides = [1, 1, 1]} : vector<7x7x32xf32> to vector<1x1x32xf32>
    %49 = vector.shape_cast %48 : vector<1x1x32xf32> to vector<32xf32>
    %50 = vector.shape_cast %49 : vector<32xf32> to vector<1x1x32xf32>
    %51 = vector.extract_strided_slice %3 {offsets = [0, 6, 0], sizes = [8, 16, 32], strides = [1, 1, 1]} : vector<14x22x32xf32> to vector<8x16x32xf32>
    %52 = vector.broadcast %50 : vector<1x1x32xf32> to vector<8x16x32xf32>
    %53 = arith.mulf %51, %52 : vector<8x16x32xf32>
    %54 = arith.addf %47, %53 : vector<8x16x32xf32>
    %55 = vector.extract_strided_slice %4 {offsets = [1, 0, 0], sizes = [1, 1, 32], strides = [1, 1, 1]} : vector<7x7x32xf32> to vector<1x1x32xf32>
    %56 = vector.shape_cast %55 : vector<1x1x32xf32> to vector<32xf32>
    %57 = vector.shape_cast %56 : vector<32xf32> to vector<1x1x32xf32>
    %58 = vector.extract_strided_slice %3 {offsets = [1, 0, 0], sizes = [8, 16, 32], strides = [1, 1, 1]} : vector<14x22x32xf32> to vector<8x16x32xf32>
    %59 = vector.broadcast %57 : vector<1x1x32xf32> to vector<8x16x32xf32>
    %60 = arith.mulf %58, %59 : vector<8x16x32xf32>
    %61 = arith.addf %54, %60 : vector<8x16x32xf32>
    %62 = vector.extract_strided_slice %4 {offsets = [1, 1, 0], sizes = [1, 1, 32], strides = [1, 1, 1]} : vector<7x7x32xf32> to vector<1x1x32xf32>
    %63 = vector.shape_cast %62 : vector<1x1x32xf32> to vector<32xf32>
    %64 = vector.shape_cast %63 : vector<32xf32> to vector<1x1x32xf32>
    %65 = vector.extract_strided_slice %3 {offsets = [1, 1, 0], sizes = [8, 16, 32], strides = [1, 1, 1]} : vector<14x22x32xf32> to vector<8x16x32xf32>
    %66 = vector.broadcast %64 : vector<1x1x32xf32> to vector<8x16x32xf32>
    %67 = arith.mulf %65, %66 : vector<8x16x32xf32>
    %68 = arith.addf %61, %67 : vector<8x16x32xf32>
    %69 = vector.extract_strided_slice %4 {offsets = [1, 2, 0], sizes = [1, 1, 32], strides = [1, 1, 1]} : vector<7x7x32xf32> to vector<1x1x32xf32>
    %70 = vector.shape_cast %69 : vector<1x1x32xf32> to vector<32xf32>
    %71 = vector.shape_cast %70 : vector<32xf32> to vector<1x1x32xf32>
    %72 = vector.extract_strided_slice %3 {offsets = [1, 2, 0], sizes = [8, 16, 32], strides = [1, 1, 1]} : vector<14x22x32xf32> to vector<8x16x32xf32>
    %73 = vector.broadcast %71 : vector<1x1x32xf32> to vector<8x16x32xf32>
    %74 = arith.mulf %72, %73 : vector<8x16x32xf32>
    %75 = arith.addf %68, %74 : vector<8x16x32xf32>
    %76 = vector.extract_strided_slice %4 {offsets = [1, 3, 0], sizes = [1, 1, 32], strides = [1, 1, 1]} : vector<7x7x32xf32> to vector<1x1x32xf32>
    %77 = vector.shape_cast %76 : vector<1x1x32xf32> to vector<32xf32>
    %78 = vector.shape_cast %77 : vector<32xf32> to vector<1x1x32xf32>
    %79 = vector.extract_strided_slice %3 {offsets = [1, 3, 0], sizes = [8, 16, 32], strides = [1, 1, 1]} : vector<14x22x32xf32> to vector<8x16x32xf32>
    %80 = vector.broadcast %78 : vector<1x1x32xf32> to vector<8x16x32xf32>
    %81 = arith.mulf %79, %80 : vector<8x16x32xf32>
    %82 = arith.addf %75, %81 : vector<8x16x32xf32>
    %83 = vector.extract_strided_slice %4 {offsets = [1, 4, 0], sizes = [1, 1, 32], strides = [1, 1, 1]} : vector<7x7x32xf32> to vector<1x1x32xf32>
    %84 = vector.shape_cast %83 : vector<1x1x32xf32> to vector<32xf32>
    %85 = vector.shape_cast %84 : vector<32xf32> to vector<1x1x32xf32>
    %86 = vector.extract_strided_slice %3 {offsets = [1, 4, 0], sizes = [8, 16, 32], strides = [1, 1, 1]} : vector<14x22x32xf32> to vector<8x16x32xf32>
    %87 = vector.broadcast %85 : vector<1x1x32xf32> to vector<8x16x32xf32>
    %88 = arith.mulf %86, %87 : vector<8x16x32xf32>
    %89 = arith.addf %82, %88 : vector<8x16x32xf32>
    %90 = vector.extract_strided_slice %4 {offsets = [1, 5, 0], sizes = [1, 1, 32], strides = [1, 1, 1]} : vector<7x7x32xf32> to vector<1x1x32xf32>
    %91 = vector.shape_cast %90 : vector<1x1x32xf32> to vector<32xf32>
    %92 = vector.shape_cast %91 : vector<32xf32> to vector<1x1x32xf32>
    %93 = vector.extract_strided_slice %3 {offsets = [1, 5, 0], sizes = [8, 16, 32], strides = [1, 1, 1]} : vector<14x22x32xf32> to vector<8x16x32xf32>
    %94 = vector.broadcast %92 : vector<1x1x32xf32> to vector<8x16x32xf32>
    %95 = arith.mulf %93, %94 : vector<8x16x32xf32>
    %96 = arith.addf %89, %95 : vector<8x16x32xf32>
    %97 = vector.extract_strided_slice %4 {offsets = [1, 6, 0], sizes = [1, 1, 32], strides = [1, 1, 1]} : vector<7x7x32xf32> to vector<1x1x32xf32>
    %98 = vector.shape_cast %97 : vector<1x1x32xf32> to vector<32xf32>
    %99 = vector.shape_cast %98 : vector<32xf32> to vector<1x1x32xf32>
    %100 = vector.extract_strided_slice %3 {offsets = [1, 6, 0], sizes = [8, 16, 32], strides = [1, 1, 1]} : vector<14x22x32xf32> to vector<8x16x32xf32>
    %101 = vector.broadcast %99 : vector<1x1x32xf32> to vector<8x16x32xf32>
    %102 = arith.mulf %100, %101 : vector<8x16x32xf32>
    %103 = arith.addf %96, %102 : vector<8x16x32xf32>
    %104 = vector.extract_strided_slice %4 {offsets = [2, 0, 0], sizes = [1, 1, 32], strides = [1, 1, 1]} : vector<7x7x32xf32> to vector<1x1x32xf32>
    %105 = vector.shape_cast %104 : vector<1x1x32xf32> to vector<32xf32>
    %106 = vector.shape_cast %105 : vector<32xf32> to vector<1x1x32xf32>
    %107 = vector.extract_strided_slice %3 {offsets = [2, 0, 0], sizes = [8, 16, 32], strides = [1, 1, 1]} : vector<14x22x32xf32> to vector<8x16x32xf32>
    %108 = vector.broadcast %106 : vector<1x1x32xf32> to vector<8x16x32xf32>
    %109 = arith.mulf %107, %108 : vector<8x16x32xf32>
    %110 = arith.addf %103, %109 : vector<8x16x32xf32>
    %111 = vector.extract_strided_slice %4 {offsets = [2, 1, 0], sizes = [1, 1, 32], strides = [1, 1, 1]} : vector<7x7x32xf32> to vector<1x1x32xf32>
    %112 = vector.shape_cast %111 : vector<1x1x32xf32> to vector<32xf32>
    %113 = vector.shape_cast %112 : vector<32xf32> to vector<1x1x32xf32>
    %114 = vector.extract_strided_slice %3 {offsets = [2, 1, 0], sizes = [8, 16, 32], strides = [1, 1, 1]} : vector<14x22x32xf32> to vector<8x16x32xf32>
    %115 = vector.broadcast %113 : vector<1x1x32xf32> to vector<8x16x32xf32>
    %116 = arith.mulf %114, %115 : vector<8x16x32xf32>
    %117 = arith.addf %110, %116 : vector<8x16x32xf32>
    %118 = vector.extract_strided_slice %4 {offsets = [2, 2, 0], sizes = [1, 1, 32], strides = [1, 1, 1]} : vector<7x7x32xf32> to vector<1x1x32xf32>
    %119 = vector.shape_cast %118 : vector<1x1x32xf32> to vector<32xf32>
    %120 = vector.shape_cast %119 : vector<32xf32> to vector<1x1x32xf32>
    %121 = vector.extract_strided_slice %3 {offsets = [2, 2, 0], sizes = [8, 16, 32], strides = [1, 1, 1]} : vector<14x22x32xf32> to vector<8x16x32xf32>
    %122 = vector.broadcast %120 : vector<1x1x32xf32> to vector<8x16x32xf32>
    %123 = arith.mulf %121, %122 : vector<8x16x32xf32>
    %124 = arith.addf %117, %123 : vector<8x16x32xf32>
    %125 = vector.extract_strided_slice %4 {offsets = [2, 3, 0], sizes = [1, 1, 32], strides = [1, 1, 1]} : vector<7x7x32xf32> to vector<1x1x32xf32>
    %126 = vector.shape_cast %125 : vector<1x1x32xf32> to vector<32xf32>
    %127 = vector.shape_cast %126 : vector<32xf32> to vector<1x1x32xf32>
    %128 = vector.extract_strided_slice %3 {offsets = [2, 3, 0], sizes = [8, 16, 32], strides = [1, 1, 1]} : vector<14x22x32xf32> to vector<8x16x32xf32>
    %129 = vector.broadcast %127 : vector<1x1x32xf32> to vector<8x16x32xf32>
    %130 = arith.mulf %128, %129 : vector<8x16x32xf32>
    %131 = arith.addf %124, %130 : vector<8x16x32xf32>
    %132 = vector.extract_strided_slice %4 {offsets = [2, 4, 0], sizes = [1, 1, 32], strides = [1, 1, 1]} : vector<7x7x32xf32> to vector<1x1x32xf32>
    %133 = vector.shape_cast %132 : vector<1x1x32xf32> to vector<32xf32>
    %134 = vector.shape_cast %133 : vector<32xf32> to vector<1x1x32xf32>
    %135 = vector.extract_strided_slice %3 {offsets = [2, 4, 0], sizes = [8, 16, 32], strides = [1, 1, 1]} : vector<14x22x32xf32> to vector<8x16x32xf32>
    %136 = vector.broadcast %134 : vector<1x1x32xf32> to vector<8x16x32xf32>
    %137 = arith.mulf %135, %136 : vector<8x16x32xf32>
    %138 = arith.addf %131, %137 : vector<8x16x32xf32>
    %139 = vector.extract_strided_slice %4 {offsets = [2, 5, 0], sizes = [1, 1, 32], strides = [1, 1, 1]} : vector<7x7x32xf32> to vector<1x1x32xf32>
    %140 = vector.shape_cast %139 : vector<1x1x32xf32> to vector<32xf32>
    %141 = vector.shape_cast %140 : vector<32xf32> to vector<1x1x32xf32>
    %142 = vector.extract_strided_slice %3 {offsets = [2, 5, 0], sizes = [8, 16, 32], strides = [1, 1, 1]} : vector<14x22x32xf32> to vector<8x16x32xf32>
    %143 = vector.broadcast %141 : vector<1x1x32xf32> to vector<8x16x32xf32>
    %144 = arith.mulf %142, %143 : vector<8x16x32xf32>
    %145 = arith.addf %138, %144 : vector<8x16x32xf32>
    %146 = vector.extract_strided_slice %4 {offsets = [2, 6, 0], sizes = [1, 1, 32], strides = [1, 1, 1]} : vector<7x7x32xf32> to vector<1x1x32xf32>
    %147 = vector.shape_cast %146 : vector<1x1x32xf32> to vector<32xf32>
    %148 = vector.shape_cast %147 : vector<32xf32> to vector<1x1x32xf32>
    %149 = vector.extract_strided_slice %3 {offsets = [2, 6, 0], sizes = [8, 16, 32], strides = [1, 1, 1]} : vector<14x22x32xf32> to vector<8x16x32xf32>
    %150 = vector.broadcast %148 : vector<1x1x32xf32> to vector<8x16x32xf32>
    %151 = arith.mulf %149, %150 : vector<8x16x32xf32>
    %152 = arith.addf %145, %151 : vector<8x16x32xf32>
    %153 = vector.extract_strided_slice %4 {offsets = [3, 0, 0], sizes = [1, 1, 32], strides = [1, 1, 1]} : vector<7x7x32xf32> to vector<1x1x32xf32>
    %154 = vector.shape_cast %153 : vector<1x1x32xf32> to vector<32xf32>
    %155 = vector.shape_cast %154 : vector<32xf32> to vector<1x1x32xf32>
    %156 = vector.extract_strided_slice %3 {offsets = [3, 0, 0], sizes = [8, 16, 32], strides = [1, 1, 1]} : vector<14x22x32xf32> to vector<8x16x32xf32>
    %157 = vector.broadcast %155 : vector<1x1x32xf32> to vector<8x16x32xf32>
    %158 = arith.mulf %156, %157 : vector<8x16x32xf32>
    %159 = arith.addf %152, %158 : vector<8x16x32xf32>
    %160 = vector.extract_strided_slice %4 {offsets = [3, 1, 0], sizes = [1, 1, 32], strides = [1, 1, 1]} : vector<7x7x32xf32> to vector<1x1x32xf32>
    %161 = vector.shape_cast %160 : vector<1x1x32xf32> to vector<32xf32>
    %162 = vector.shape_cast %161 : vector<32xf32> to vector<1x1x32xf32>
    %163 = vector.extract_strided_slice %3 {offsets = [3, 1, 0], sizes = [8, 16, 32], strides = [1, 1, 1]} : vector<14x22x32xf32> to vector<8x16x32xf32>
    %164 = vector.broadcast %162 : vector<1x1x32xf32> to vector<8x16x32xf32>
    %165 = arith.mulf %163, %164 : vector<8x16x32xf32>
    %166 = arith.addf %159, %165 : vector<8x16x32xf32>
    %167 = vector.extract_strided_slice %4 {offsets = [3, 2, 0], sizes = [1, 1, 32], strides = [1, 1, 1]} : vector<7x7x32xf32> to vector<1x1x32xf32>
    %168 = vector.shape_cast %167 : vector<1x1x32xf32> to vector<32xf32>
    %169 = vector.shape_cast %168 : vector<32xf32> to vector<1x1x32xf32>
    %170 = vector.extract_strided_slice %3 {offsets = [3, 2, 0], sizes = [8, 16, 32], strides = [1, 1, 1]} : vector<14x22x32xf32> to vector<8x16x32xf32>
    %171 = vector.broadcast %169 : vector<1x1x32xf32> to vector<8x16x32xf32>
    %172 = arith.mulf %170, %171 : vector<8x16x32xf32>
    %173 = arith.addf %166, %172 : vector<8x16x32xf32>
    %174 = vector.extract_strided_slice %4 {offsets = [3, 3, 0], sizes = [1, 1, 32], strides = [1, 1, 1]} : vector<7x7x32xf32> to vector<1x1x32xf32>
    %175 = vector.shape_cast %174 : vector<1x1x32xf32> to vector<32xf32>
    %176 = vector.shape_cast %175 : vector<32xf32> to vector<1x1x32xf32>
    %177 = vector.extract_strided_slice %3 {offsets = [3, 3, 0], sizes = [8, 16, 32], strides = [1, 1, 1]} : vector<14x22x32xf32> to vector<8x16x32xf32>
    %178 = vector.broadcast %176 : vector<1x1x32xf32> to vector<8x16x32xf32>
    %179 = arith.mulf %177, %178 : vector<8x16x32xf32>
    %180 = arith.addf %173, %179 : vector<8x16x32xf32>
    %181 = vector.extract_strided_slice %4 {offsets = [3, 4, 0], sizes = [1, 1, 32], strides = [1, 1, 1]} : vector<7x7x32xf32> to vector<1x1x32xf32>
    %182 = vector.shape_cast %181 : vector<1x1x32xf32> to vector<32xf32>
    %183 = vector.shape_cast %182 : vector<32xf32> to vector<1x1x32xf32>
    %184 = vector.extract_strided_slice %3 {offsets = [3, 4, 0], sizes = [8, 16, 32], strides = [1, 1, 1]} : vector<14x22x32xf32> to vector<8x16x32xf32>
    %185 = vector.broadcast %183 : vector<1x1x32xf32> to vector<8x16x32xf32>
    %186 = arith.mulf %184, %185 : vector<8x16x32xf32>
    %187 = arith.addf %180, %186 : vector<8x16x32xf32>
    %188 = vector.extract_strided_slice %4 {offsets = [3, 5, 0], sizes = [1, 1, 32], strides = [1, 1, 1]} : vector<7x7x32xf32> to vector<1x1x32xf32>
    %189 = vector.shape_cast %188 : vector<1x1x32xf32> to vector<32xf32>
    %190 = vector.shape_cast %189 : vector<32xf32> to vector<1x1x32xf32>
    %191 = vector.extract_strided_slice %3 {offsets = [3, 5, 0], sizes = [8, 16, 32], strides = [1, 1, 1]} : vector<14x22x32xf32> to vector<8x16x32xf32>
    %192 = vector.broadcast %190 : vector<1x1x32xf32> to vector<8x16x32xf32>
    %193 = arith.mulf %191, %192 : vector<8x16x32xf32>
    %194 = arith.addf %187, %193 : vector<8x16x32xf32>
    %195 = vector.extract_strided_slice %4 {offsets = [3, 6, 0], sizes = [1, 1, 32], strides = [1, 1, 1]} : vector<7x7x32xf32> to vector<1x1x32xf32>
    %196 = vector.shape_cast %195 : vector<1x1x32xf32> to vector<32xf32>
    %197 = vector.shape_cast %196 : vector<32xf32> to vector<1x1x32xf32>
    %198 = vector.extract_strided_slice %3 {offsets = [3, 6, 0], sizes = [8, 16, 32], strides = [1, 1, 1]} : vector<14x22x32xf32> to vector<8x16x32xf32>
    %199 = vector.broadcast %197 : vector<1x1x32xf32> to vector<8x16x32xf32>
    %200 = arith.mulf %198, %199 : vector<8x16x32xf32>
    %201 = arith.addf %194, %200 : vector<8x16x32xf32>
    %202 = vector.extract_strided_slice %4 {offsets = [4, 0, 0], sizes = [1, 1, 32], strides = [1, 1, 1]} : vector<7x7x32xf32> to vector<1x1x32xf32>
    %203 = vector.shape_cast %202 : vector<1x1x32xf32> to vector<32xf32>
    %204 = vector.shape_cast %203 : vector<32xf32> to vector<1x1x32xf32>
    %205 = vector.extract_strided_slice %3 {offsets = [4, 0, 0], sizes = [8, 16, 32], strides = [1, 1, 1]} : vector<14x22x32xf32> to vector<8x16x32xf32>
    %206 = vector.broadcast %204 : vector<1x1x32xf32> to vector<8x16x32xf32>
    %207 = arith.mulf %205, %206 : vector<8x16x32xf32>
    %208 = arith.addf %201, %207 : vector<8x16x32xf32>
    %209 = vector.extract_strided_slice %4 {offsets = [4, 1, 0], sizes = [1, 1, 32], strides = [1, 1, 1]} : vector<7x7x32xf32> to vector<1x1x32xf32>
    %210 = vector.shape_cast %209 : vector<1x1x32xf32> to vector<32xf32>
    %211 = vector.shape_cast %210 : vector<32xf32> to vector<1x1x32xf32>
    %212 = vector.extract_strided_slice %3 {offsets = [4, 1, 0], sizes = [8, 16, 32], strides = [1, 1, 1]} : vector<14x22x32xf32> to vector<8x16x32xf32>
    %213 = vector.broadcast %211 : vector<1x1x32xf32> to vector<8x16x32xf32>
    %214 = arith.mulf %212, %213 : vector<8x16x32xf32>
    %215 = arith.addf %208, %214 : vector<8x16x32xf32>
    %216 = vector.extract_strided_slice %4 {offsets = [4, 2, 0], sizes = [1, 1, 32], strides = [1, 1, 1]} : vector<7x7x32xf32> to vector<1x1x32xf32>
    %217 = vector.shape_cast %216 : vector<1x1x32xf32> to vector<32xf32>
    %218 = vector.shape_cast %217 : vector<32xf32> to vector<1x1x32xf32>
    %219 = vector.extract_strided_slice %3 {offsets = [4, 2, 0], sizes = [8, 16, 32], strides = [1, 1, 1]} : vector<14x22x32xf32> to vector<8x16x32xf32>
    %220 = vector.broadcast %218 : vector<1x1x32xf32> to vector<8x16x32xf32>
    %221 = arith.mulf %219, %220 : vector<8x16x32xf32>
    %222 = arith.addf %215, %221 : vector<8x16x32xf32>
    %223 = vector.extract_strided_slice %4 {offsets = [4, 3, 0], sizes = [1, 1, 32], strides = [1, 1, 1]} : vector<7x7x32xf32> to vector<1x1x32xf32>
    %224 = vector.shape_cast %223 : vector<1x1x32xf32> to vector<32xf32>
    %225 = vector.shape_cast %224 : vector<32xf32> to vector<1x1x32xf32>
    %226 = vector.extract_strided_slice %3 {offsets = [4, 3, 0], sizes = [8, 16, 32], strides = [1, 1, 1]} : vector<14x22x32xf32> to vector<8x16x32xf32>
    %227 = vector.broadcast %225 : vector<1x1x32xf32> to vector<8x16x32xf32>
    %228 = arith.mulf %226, %227 : vector<8x16x32xf32>
    %229 = arith.addf %222, %228 : vector<8x16x32xf32>
    %230 = vector.extract_strided_slice %4 {offsets = [4, 4, 0], sizes = [1, 1, 32], strides = [1, 1, 1]} : vector<7x7x32xf32> to vector<1x1x32xf32>
    %231 = vector.shape_cast %230 : vector<1x1x32xf32> to vector<32xf32>
    %232 = vector.shape_cast %231 : vector<32xf32> to vector<1x1x32xf32>
    %233 = vector.extract_strided_slice %3 {offsets = [4, 4, 0], sizes = [8, 16, 32], strides = [1, 1, 1]} : vector<14x22x32xf32> to vector<8x16x32xf32>
    %234 = vector.broadcast %232 : vector<1x1x32xf32> to vector<8x16x32xf32>
    %235 = arith.mulf %233, %234 : vector<8x16x32xf32>
    %236 = arith.addf %229, %235 : vector<8x16x32xf32>
    %237 = vector.extract_strided_slice %4 {offsets = [4, 5, 0], sizes = [1, 1, 32], strides = [1, 1, 1]} : vector<7x7x32xf32> to vector<1x1x32xf32>
    %238 = vector.shape_cast %237 : vector<1x1x32xf32> to vector<32xf32>
    %239 = vector.shape_cast %238 : vector<32xf32> to vector<1x1x32xf32>
    %240 = vector.extract_strided_slice %3 {offsets = [4, 5, 0], sizes = [8, 16, 32], strides = [1, 1, 1]} : vector<14x22x32xf32> to vector<8x16x32xf32>
    %241 = vector.broadcast %239 : vector<1x1x32xf32> to vector<8x16x32xf32>
    %242 = arith.mulf %240, %241 : vector<8x16x32xf32>
    %243 = arith.addf %236, %242 : vector<8x16x32xf32>
    %244 = vector.extract_strided_slice %4 {offsets = [4, 6, 0], sizes = [1, 1, 32], strides = [1, 1, 1]} : vector<7x7x32xf32> to vector<1x1x32xf32>
    %245 = vector.shape_cast %244 : vector<1x1x32xf32> to vector<32xf32>
    %246 = vector.shape_cast %245 : vector<32xf32> to vector<1x1x32xf32>
    %247 = vector.extract_strided_slice %3 {offsets = [4, 6, 0], sizes = [8, 16, 32], strides = [1, 1, 1]} : vector<14x22x32xf32> to vector<8x16x32xf32>
    %248 = vector.broadcast %246 : vector<1x1x32xf32> to vector<8x16x32xf32>
    %249 = arith.mulf %247, %248 : vector<8x16x32xf32>
    %250 = arith.addf %243, %249 : vector<8x16x32xf32>
    %251 = vector.extract_strided_slice %4 {offsets = [5, 0, 0], sizes = [1, 1, 32], strides = [1, 1, 1]} : vector<7x7x32xf32> to vector<1x1x32xf32>
    %252 = vector.shape_cast %251 : vector<1x1x32xf32> to vector<32xf32>
    %253 = vector.shape_cast %252 : vector<32xf32> to vector<1x1x32xf32>
    %254 = vector.extract_strided_slice %3 {offsets = [5, 0, 0], sizes = [8, 16, 32], strides = [1, 1, 1]} : vector<14x22x32xf32> to vector<8x16x32xf32>
    %255 = vector.broadcast %253 : vector<1x1x32xf32> to vector<8x16x32xf32>
    %256 = arith.mulf %254, %255 : vector<8x16x32xf32>
    %257 = arith.addf %250, %256 : vector<8x16x32xf32>
    %258 = vector.extract_strided_slice %4 {offsets = [5, 1, 0], sizes = [1, 1, 32], strides = [1, 1, 1]} : vector<7x7x32xf32> to vector<1x1x32xf32>
    %259 = vector.shape_cast %258 : vector<1x1x32xf32> to vector<32xf32>
    %260 = vector.shape_cast %259 : vector<32xf32> to vector<1x1x32xf32>
    %261 = vector.extract_strided_slice %3 {offsets = [5, 1, 0], sizes = [8, 16, 32], strides = [1, 1, 1]} : vector<14x22x32xf32> to vector<8x16x32xf32>
    %262 = vector.broadcast %260 : vector<1x1x32xf32> to vector<8x16x32xf32>
    %263 = arith.mulf %261, %262 : vector<8x16x32xf32>
    %264 = arith.addf %257, %263 : vector<8x16x32xf32>
    %265 = vector.extract_strided_slice %4 {offsets = [5, 2, 0], sizes = [1, 1, 32], strides = [1, 1, 1]} : vector<7x7x32xf32> to vector<1x1x32xf32>
    %266 = vector.shape_cast %265 : vector<1x1x32xf32> to vector<32xf32>
    %267 = vector.shape_cast %266 : vector<32xf32> to vector<1x1x32xf32>
    %268 = vector.extract_strided_slice %3 {offsets = [5, 2, 0], sizes = [8, 16, 32], strides = [1, 1, 1]} : vector<14x22x32xf32> to vector<8x16x32xf32>
    %269 = vector.broadcast %267 : vector<1x1x32xf32> to vector<8x16x32xf32>
    %270 = arith.mulf %268, %269 : vector<8x16x32xf32>
    %271 = arith.addf %264, %270 : vector<8x16x32xf32>
    %272 = vector.extract_strided_slice %4 {offsets = [5, 3, 0], sizes = [1, 1, 32], strides = [1, 1, 1]} : vector<7x7x32xf32> to vector<1x1x32xf32>
    %273 = vector.shape_cast %272 : vector<1x1x32xf32> to vector<32xf32>
    %274 = vector.shape_cast %273 : vector<32xf32> to vector<1x1x32xf32>
    %275 = vector.extract_strided_slice %3 {offsets = [5, 3, 0], sizes = [8, 16, 32], strides = [1, 1, 1]} : vector<14x22x32xf32> to vector<8x16x32xf32>
    %276 = vector.broadcast %274 : vector<1x1x32xf32> to vector<8x16x32xf32>
    %277 = arith.mulf %275, %276 : vector<8x16x32xf32>
    %278 = arith.addf %271, %277 : vector<8x16x32xf32>
    %279 = vector.extract_strided_slice %4 {offsets = [5, 4, 0], sizes = [1, 1, 32], strides = [1, 1, 1]} : vector<7x7x32xf32> to vector<1x1x32xf32>
    %280 = vector.shape_cast %279 : vector<1x1x32xf32> to vector<32xf32>
    %281 = vector.shape_cast %280 : vector<32xf32> to vector<1x1x32xf32>
    %282 = vector.extract_strided_slice %3 {offsets = [5, 4, 0], sizes = [8, 16, 32], strides = [1, 1, 1]} : vector<14x22x32xf32> to vector<8x16x32xf32>
    %283 = vector.broadcast %281 : vector<1x1x32xf32> to vector<8x16x32xf32>
    %284 = arith.mulf %282, %283 : vector<8x16x32xf32>
    %285 = arith.addf %278, %284 : vector<8x16x32xf32>
    %286 = vector.extract_strided_slice %4 {offsets = [5, 5, 0], sizes = [1, 1, 32], strides = [1, 1, 1]} : vector<7x7x32xf32> to vector<1x1x32xf32>
    %287 = vector.shape_cast %286 : vector<1x1x32xf32> to vector<32xf32>
    %288 = vector.shape_cast %287 : vector<32xf32> to vector<1x1x32xf32>
    %289 = vector.extract_strided_slice %3 {offsets = [5, 5, 0], sizes = [8, 16, 32], strides = [1, 1, 1]} : vector<14x22x32xf32> to vector<8x16x32xf32>
    %290 = vector.broadcast %288 : vector<1x1x32xf32> to vector<8x16x32xf32>
    %291 = arith.mulf %289, %290 : vector<8x16x32xf32>
    %292 = arith.addf %285, %291 : vector<8x16x32xf32>
    %293 = vector.extract_strided_slice %4 {offsets = [5, 6, 0], sizes = [1, 1, 32], strides = [1, 1, 1]} : vector<7x7x32xf32> to vector<1x1x32xf32>
    %294 = vector.shape_cast %293 : vector<1x1x32xf32> to vector<32xf32>
    %295 = vector.shape_cast %294 : vector<32xf32> to vector<1x1x32xf32>
    %296 = vector.extract_strided_slice %3 {offsets = [5, 6, 0], sizes = [8, 16, 32], strides = [1, 1, 1]} : vector<14x22x32xf32> to vector<8x16x32xf32>
    %297 = vector.broadcast %295 : vector<1x1x32xf32> to vector<8x16x32xf32>
    %298 = arith.mulf %296, %297 : vector<8x16x32xf32>
    %299 = arith.addf %292, %298 : vector<8x16x32xf32>
    %300 = vector.extract_strided_slice %4 {offsets = [6, 0, 0], sizes = [1, 1, 32], strides = [1, 1, 1]} : vector<7x7x32xf32> to vector<1x1x32xf32>
    %301 = vector.shape_cast %300 : vector<1x1x32xf32> to vector<32xf32>
    %302 = vector.shape_cast %301 : vector<32xf32> to vector<1x1x32xf32>
    %303 = vector.extract_strided_slice %3 {offsets = [6, 0, 0], sizes = [8, 16, 32], strides = [1, 1, 1]} : vector<14x22x32xf32> to vector<8x16x32xf32>
    %304 = vector.broadcast %302 : vector<1x1x32xf32> to vector<8x16x32xf32>
    %305 = arith.mulf %303, %304 : vector<8x16x32xf32>
    %306 = arith.addf %299, %305 : vector<8x16x32xf32>
    %307 = vector.extract_strided_slice %4 {offsets = [6, 1, 0], sizes = [1, 1, 32], strides = [1, 1, 1]} : vector<7x7x32xf32> to vector<1x1x32xf32>
    %308 = vector.shape_cast %307 : vector<1x1x32xf32> to vector<32xf32>
    %309 = vector.shape_cast %308 : vector<32xf32> to vector<1x1x32xf32>
    %310 = vector.extract_strided_slice %3 {offsets = [6, 1, 0], sizes = [8, 16, 32], strides = [1, 1, 1]} : vector<14x22x32xf32> to vector<8x16x32xf32>
    %311 = vector.broadcast %309 : vector<1x1x32xf32> to vector<8x16x32xf32>
    %312 = arith.mulf %310, %311 : vector<8x16x32xf32>
    %313 = arith.addf %306, %312 : vector<8x16x32xf32>
    %314 = vector.extract_strided_slice %4 {offsets = [6, 2, 0], sizes = [1, 1, 32], strides = [1, 1, 1]} : vector<7x7x32xf32> to vector<1x1x32xf32>
    %315 = vector.shape_cast %314 : vector<1x1x32xf32> to vector<32xf32>
    %316 = vector.shape_cast %315 : vector<32xf32> to vector<1x1x32xf32>
    %317 = vector.extract_strided_slice %3 {offsets = [6, 2, 0], sizes = [8, 16, 32], strides = [1, 1, 1]} : vector<14x22x32xf32> to vector<8x16x32xf32>
    %318 = vector.broadcast %316 : vector<1x1x32xf32> to vector<8x16x32xf32>
    %319 = arith.mulf %317, %318 : vector<8x16x32xf32>
    %320 = arith.addf %313, %319 : vector<8x16x32xf32>
    %321 = vector.extract_strided_slice %4 {offsets = [6, 3, 0], sizes = [1, 1, 32], strides = [1, 1, 1]} : vector<7x7x32xf32> to vector<1x1x32xf32>
    %322 = vector.shape_cast %321 : vector<1x1x32xf32> to vector<32xf32>
    %323 = vector.shape_cast %322 : vector<32xf32> to vector<1x1x32xf32>
    %324 = vector.extract_strided_slice %3 {offsets = [6, 3, 0], sizes = [8, 16, 32], strides = [1, 1, 1]} : vector<14x22x32xf32> to vector<8x16x32xf32>
    %325 = vector.broadcast %323 : vector<1x1x32xf32> to vector<8x16x32xf32>
    %326 = arith.mulf %324, %325 : vector<8x16x32xf32>
    %327 = arith.addf %320, %326 : vector<8x16x32xf32>
    %328 = vector.extract_strided_slice %4 {offsets = [6, 4, 0], sizes = [1, 1, 32], strides = [1, 1, 1]} : vector<7x7x32xf32> to vector<1x1x32xf32>
    %329 = vector.shape_cast %328 : vector<1x1x32xf32> to vector<32xf32>
    %330 = vector.shape_cast %329 : vector<32xf32> to vector<1x1x32xf32>
    %331 = vector.extract_strided_slice %3 {offsets = [6, 4, 0], sizes = [8, 16, 32], strides = [1, 1, 1]} : vector<14x22x32xf32> to vector<8x16x32xf32>
    %332 = vector.broadcast %330 : vector<1x1x32xf32> to vector<8x16x32xf32>
    %333 = arith.mulf %331, %332 : vector<8x16x32xf32>
    %334 = arith.addf %327, %333 : vector<8x16x32xf32>
    %335 = vector.extract_strided_slice %4 {offsets = [6, 5, 0], sizes = [1, 1, 32], strides = [1, 1, 1]} : vector<7x7x32xf32> to vector<1x1x32xf32>
    %336 = vector.shape_cast %335 : vector<1x1x32xf32> to vector<32xf32>
    %337 = vector.shape_cast %336 : vector<32xf32> to vector<1x1x32xf32>
    %338 = vector.extract_strided_slice %3 {offsets = [6, 5, 0], sizes = [8, 16, 32], strides = [1, 1, 1]} : vector<14x22x32xf32> to vector<8x16x32xf32>
    %339 = vector.broadcast %337 : vector<1x1x32xf32> to vector<8x16x32xf32>
    %340 = arith.mulf %338, %339 : vector<8x16x32xf32>
    %341 = arith.addf %334, %340 : vector<8x16x32xf32>
    %342 = vector.extract_strided_slice %4 {offsets = [6, 6, 0], sizes = [1, 1, 32], strides = [1, 1, 1]} : vector<7x7x32xf32> to vector<1x1x32xf32>
    %343 = vector.shape_cast %342 : vector<1x1x32xf32> to vector<32xf32>
    %344 = vector.shape_cast %343 : vector<32xf32> to vector<1x1x32xf32>
    %345 = vector.extract_strided_slice %3 {offsets = [6, 6, 0], sizes = [8, 16, 32], strides = [1, 1, 1]} : vector<14x22x32xf32> to vector<8x16x32xf32>
    %346 = vector.broadcast %344 : vector<1x1x32xf32> to vector<8x16x32xf32>
    %347 = arith.mulf %345, %346 : vector<8x16x32xf32>
    %348 = arith.addf %341, %347 : vector<8x16x32xf32>
    %c0_5 = arith.constant 0 : index
    %c0_6 = arith.constant 0 : index
    %349 = vector.load %arg4[%c0_5, %c0_6] : memref<1x32xf32, #tpu.memory_space<vmem>>, vector<1x32xf32>
    %350 = vector.shape_cast %349 : vector<1x32xf32> to vector<1x1x32xf32>
    %351 = vector.broadcast %350 : vector<1x1x32xf32> to vector<8x16x32xf32>
    %352 = arith.addf %348, %351 : vector<8x16x32xf32>
    %353 = vector.shape_cast %352 : vector<8x16x32xf32> to vector<128x32xf32>
    %354 = arith.truncf %353 : vector<128x32xf32> to vector<128x32xbf16>
    %c0_7 = arith.constant 0 : index
    %c0_8 = arith.constant 0 : index
    %355 = vector.load %arg5[%c0_7, %c0_8] : memref<32x128xbf16, #tpu.memory_space<vmem>>, vector<32x128xbf16>
    %cst_9 = arith.constant dense<0.000000e+00> : vector<128x128xf32>
    %356 = tpu.matmul %354, %355, %cst_9 {dimension_numbers = #tpu.dot_dimension_numbers<[1], [0], [0], [1], [0, 0, 1, 1], [], []>} : vector<128x32xbf16>, vector<32x128xbf16>, vector<128x128xf32> -> vector<128x128xf32>
    %c0_10 = arith.constant 0 : index
    %c0_11 = arith.constant 0 : index
    %357 = vector.load %arg6[%c0_10, %c0_11] : memref<1x128xf32, #tpu.memory_space<vmem>>, vector<1x128xf32>
    %358 = vector.broadcast %357 : vector<1x128xf32> to vector<128x128xf32>
    %359 = arith.addf %356, %358 : vector<128x128xf32>
    %cst_12 = arith.constant 5.000000e-01 : f32
    %360 = vector.broadcast %cst_12 : f32 to vector<128x128xf32>
    %361 = arith.mulf %360, %359 : vector<128x128xf32>
    %cst_13 = arith.constant 0.707106769 : f32
    %362 = vector.broadcast %cst_13 : f32 to vector<128x128xf32>
    %363 = arith.mulf %359, %362 : vector<128x128xf32>
    %364 = math.erf %363 : vector<128x128xf32>
    %cst_14 = arith.constant 1.000000e+00 : f32
    %365 = vector.broadcast %cst_14 : f32 to vector<128x128xf32>
    %366 = arith.addf %365, %364 : vector<128x128xf32>
    %367 = arith.mulf %361, %366 : vector<128x128xf32>
    %368 = arith.truncf %367 : vector<128x128xf32> to vector<128x128xbf16>
    %c0_15 = arith.constant 0 : index
    %c0_16 = arith.constant 0 : index
    %369 = vector.load %arg7[%c0_15, %c0_16] : memref<128x32xbf16, #tpu.memory_space<vmem>>, vector<128x32xbf16>
    %cst_17 = arith.constant dense<0.000000e+00> : vector<128x32xf32>
    %370 = tpu.matmul %368, %369, %cst_17 {dimension_numbers = #tpu.dot_dimension_numbers<[1], [0], [0], [1], [0, 0, 1, 1], [], []>} : vector<128x128xbf16>, vector<128x32xbf16>, vector<128x32xf32> -> vector<128x32xf32>
    %c0_18 = arith.constant 0 : index
    %c0_19 = arith.constant 0 : index
    %371 = vector.load %arg8[%c0_18, %c0_19] : memref<1x32xf32, #tpu.memory_space<vmem>>, vector<1x32xf32>
    %372 = vector.broadcast %371 : vector<1x32xf32> to vector<128x32xf32>
    %373 = arith.addf %370, %372 : vector<128x32xf32>
    %374 = vector.extract_strided_slice %3 {offsets = [3, 3, 0], sizes = [8, 16, 32], strides = [1, 1, 1]} : vector<14x22x32xf32> to vector<8x16x32xf32>
    %375 = vector.shape_cast %374 : vector<8x16x32xf32> to vector<128x32xf32>
    %376 = arith.addf %373, %375 : vector<128x32xf32>
    %c0_20 = arith.constant 0 : index
    %c0_21 = arith.constant 0 : index
    %c0_22 = arith.constant 0 : index
    %377 = vector.load %arg9[%c0_20, %c0_21, %c0_22] : memref<1x128x32xf32, #tpu.memory_space<vmem>>, vector<1x128x32xf32>
    %378 = vector.shape_cast %377 : vector<1x128x32xf32> to vector<128x32xf32>
    %379 = vector.shape_cast %376 : vector<128x32xf32> to vector<1x128x32xf32>
    tpu.vector_store %arg9[%c0_20, %c0_21, %c0_22], %379 {strides = array<i32>} : memref<1x128x32xf32, #tpu.memory_space<vmem>>, vector<1x128x32xf32>,
    return
  }
  func.func @transform_0(%arg0: i32, %arg1: i32) -> (i32, i32, i32, i32) {
    %c0_i32 = arith.constant 0 : i32
    %c0_i32_0 = arith.constant 0 : i32
    %c0_i32_1 = arith.constant 0 : i32
    %c0_i32_2 = arith.constant 0 : i32
    return %arg0, %c0_i32, %c0_i32_0, %c0_i32_1 : i32, i32, i32, i32
  }
  func.func @transform_1(%arg0: i32, %arg1: i32) -> (i32, i32, i32) {
    %c0_i32 = arith.constant 0 : i32
    %c0_i32_0 = arith.constant 0 : i32
    %c0_i32_1 = arith.constant 0 : i32
    %c0_i32_2 = arith.constant 0 : i32
    return %c0_i32, %c0_i32_0, %c0_i32_1 : i32, i32, i32
  }
  func.func @transform_2(%arg0: i32, %arg1: i32) -> (i32, i32) {
    %c0_i32 = arith.constant 0 : i32
    %c0_i32_0 = arith.constant 0 : i32
    %c0_i32_1 = arith.constant 0 : i32
    return %c0_i32, %c0_i32_0 : i32, i32
  }
  func.func @transform_3(%arg0: i32, %arg1: i32) -> (i32, i32) {
    %c0_i32 = arith.constant 0 : i32
    %c0_i32_0 = arith.constant 0 : i32
    %c0_i32_1 = arith.constant 0 : i32
    return %c0_i32, %c0_i32_0 : i32, i32
  }
  func.func @transform_4(%arg0: i32, %arg1: i32) -> (i32, i32) {
    %c0_i32 = arith.constant 0 : i32
    %c0_i32_0 = arith.constant 0 : i32
    %c0_i32_1 = arith.constant 0 : i32
    return %c0_i32, %c0_i32_0 : i32, i32
  }
  func.func @transform_5(%arg0: i32, %arg1: i32) -> (i32, i32) {
    %c0_i32 = arith.constant 0 : i32
    %c0_i32_0 = arith.constant 0 : i32
    %c0_i32_1 = arith.constant 0 : i32
    return %c0_i32, %c0_i32_0 : i32, i32
  }
  func.func @transform_6(%arg0: i32, %arg1: i32) -> (i32, i32) {
    %c0_i32 = arith.constant 0 : i32
    %c0_i32_0 = arith.constant 0 : i32
    %c0_i32_1 = arith.constant 0 : i32
    return %c0_i32, %c0_i32_0 : i32, i32
  }
  func.func @transform_7(%arg0: i32, %arg1: i32) -> (i32, i32, i32) {
    %c0_i32 = arith.constant 0 : i32
    %c0_i32_0 = arith.constant 0 : i32
    return %arg0, %arg1, %c0_i32 : i32, i32, i32
  }
}

</mosaic_0001>

<llo_original>
// kernel: tpu_custom_call.1
$region0: #{tpu_custom_call.1}
  #allocation0 [shape = 'u32[]', space=smem, size = 0x4, offset = 0x4, fixed_abs, tag = 'smem constant byte address 0x4 - core index']
  #allocation1 [shape = 'u32[144,128]{1,0:T(1,128)}', space=vmem, size = 0x12000, scoped, tag = 'internal scratch']
  %s0 = inlined_call_operand.vmem [shape: f32[2,22,22,32], index: 0, kind: input, shape index: {}]
  %s1 = inlined_call_operand.vmem [shape: f32[7,7,32], index: 1, kind: input, shape index: {}]
  %s2 = inlined_call_operand.vmem [shape: f32[1,32], index: 2, kind: input, shape index: {}]
  %s3 = inlined_call_operand.vmem [shape: bf16[32,128], index: 3, kind: input, shape index: {}]
  %s4 = inlined_call_operand.vmem [shape: f32[1,128], index: 4, kind: input, shape index: {}]
  %s5 = inlined_call_operand.vmem [shape: bf16[128,32], index: 5, kind: input, shape index: {}]
  %s6 = inlined_call_operand.vmem [shape: f32[1,32], index: 6, kind: input, shape index: {}]
  %s7 = inlined_call_operand.vmem [shape: f32[2,256,32], index: 7, kind: output, shape index: {}]
  %s8 = sld [smem:[#allocation0]]
  $region61: #{tpu_custom_call.1} parent=0
    _
  %s10 = ssub.s32 1, %s8
  %s11 = scalar_select 0, %s10, %s8
  loop: start=0, step=1, limit=6
  $region2: #{tpu_custom_call.1} parent=0 // loop_pre_header
    _
  $region3: #{tpu_custom_call.1} parent=0 // loop_header
    %s13 = sphi 0, %s17
    %p14 = scmp.ge.s32.totalorder %s13, 6
    %s20 = sphi 0, %s32
    %s21 = sphi 0, %s28
    %s22 = sphi 0, %s20
    %s23 = sphi 0, %s21
    %s24 = sphi 0, %s22
    %s25 = sphi 0, %s23
    %s35 = sphi 0, %s37
    %s38 = sphi 0, %s35
    %s39 = sphi 0, %s38
    %s55 = sphi 0, %s39
    %s59 = sphi 0, %s59
    %s61 = sphi 0, %s59
    %s62 = sphi 0, %s61
    %s76 = sphi 0, %s62
    %s80 = sphi 0, %s80
    %s82 = sphi 0, %s80
    %s83 = sphi 0, %s82
    %s97 = sphi 0, %s83
    %s101 = sphi 0, %s101
    %s103 = sphi 0, %s101
    %s104 = sphi 0, %s103
    %s118 = sphi 0, %s104
    %s122 = sphi 0, %s122
    %s124 = sphi 0, %s122
    %s125 = sphi 0, %s124
    %s139 = sphi 0, %s125
    %s143 = sphi 0, %s143
    %s145 = sphi 0, %s143
    %s146 = sphi 0, %s145
    %s160 = sphi 0, %s146
    %s164 = sphi 0, %s164
    %s166 = sphi 0, %s164
    %s167 = sphi 0, %s166
    %s181 = sphi 0, %s167
    %s189 = sphi 0, %s191
    %s192 = sphi 0, %s189
    %s193 = sphi 0, %s192
    %s209 = sphi 0, %s193
  $region4: #{tpu_custom_call.1} parent=0 // loop_header_branch
    %16 = sbr.rel (%p14) target = $region8
  $region5: #{tpu_custom_call.1} parent=0 // loop_body
    %s18 = ssub.s32 %s13, 1
    %s19 = ssub.s32 %s13, 2
    %s26 = sadd.s32 1, %s21
    %p27 = scmp.ge.s32.totalorder %s26, 2
    %s28 = scalar_select %p27, 0, %s26
    %s29 = sadd.s32 1, %s20
    %s30 = scalar_select %p27, %s29, %s20
    %p31 = scmp.ge.s32.totalorder %s30, 2
    %s32 = scalar_select %p31, 0, %s30
    %s33 = ssub.s32 %s20, %s32
    %p34 = scmp.eq.s32.totalorder %s33, 0
    %s36 = sadd.s32 %s35, 1
    %s37 = scalar_select %p34, %s35, %s36
    %p40 = pneg %p34
    %p41 = scmp.eq.s32.totalorder %s13, 3
    %p42 = por %p40, %p41
    %p43 = scmp.ne.s32.totalorder %s35, %s38
    %p44 = scmp.eq.s32.totalorder %s13, 0
    %p45 = por %p43, %p44
    %p46 = scmp.ne.s32.totalorder %s35, %s38
    %p47 = scmp.eq.s32.totalorder %s18, 3
    %p48 = por %p46, %p47
    %p49 = scmp.ne.s32.totalorder %s38, %s39
    %p50 = scmp.eq.s32.totalorder %s18, 0
    %p51 = por %p49, %p50
    %p52 = scmp.ne.s32.totalorder %s38, %s39
    %p53 = scmp.eq.s32.totalorder %s19, 3
    %p54 = por %p52, %p53
    %p56 = scmp.ne.s32.totalorder %s39, %s55
    %p57 = scmp.eq.s32.totalorder %s19, 0
    %p58 = por %p56, %p57
    %s60 = sadd.s32 %s59, 1
    %p63 = scmp.eq.s32.totalorder %s13, 3
    %p64 = scmp.ne.s32.totalorder %s59, %s61
    %p65 = scmp.eq.s32.totalorder %s13, 0
    %p66 = por %p64, %p65
    %p67 = scmp.ne.s32.totalorder %s59, %s61
    %p68 = scmp.eq.s32.totalorder %s18, 3
    %p69 = por %p67, %p68
    %p70 = scmp.ne.s32.totalorder %s61, %s62
    %p71 = scmp.eq.s32.totalorder %s18, 0
    %p72 = por %p70, %p71
    %p73 = scmp.ne.s32.totalorder %s61, %s62
    %p74 = scmp.eq.s32.totalorder %s19, 3
    %p75 = por %p73, %p74
    %p77 = scmp.ne.s32.totalorder %s62, %s76
    %p78 = scmp.eq.s32.totalorder %s19, 0
    %p79 = por %p77, %p78
    %s81 = sadd.s32 %s80, 1
    %p84 = scmp.eq.s32.totalorder %s13, 3
    %p85 = scmp.ne.s32.totalorder %s80, %s82
    %p86 = scmp.eq.s32.totalorder %s13, 0
    %p87 = por %p85, %p86
    %p88 = scmp.ne.s32.totalorder %s80, %s82
    %p89 = scmp.eq.s32.totalorder %s18, 3
    %p90 = por %p88, %p89
    %p91 = scmp.ne.s32.totalorder %s82, %s83
    %p92 = scmp.eq.s32.totalorder %s18, 0
    %p93 = por %p91, %p92
    %p94 = scmp.ne.s32.totalorder %s82, %s83
    %p95 = scmp.eq.s32.totalorder %s19, 3
    %p96 = por %p94, %p95
    %p98 = scmp.ne.s32.totalorder %s83, %s97
    %p99 = scmp.eq.s32.totalorder %s19, 0
    %p100 = por %p98, %p99
    %s102 = sadd.s32 %s101, 1
    %p105 = scmp.eq.s32.totalorder %s13, 3
    %p106 = scmp.ne.s32.totalorder %s101, %s103
    %p107 = scmp.eq.s32.totalorder %s13, 0
    %p108 = por %p106, %p107
    %p109 = scmp.ne.s32.totalorder %s101, %s103
    %p110 = scmp.eq.s32.totalorder %s18, 3
    %p111 = por %p109, %p110
    %p112 = scmp.ne.s32.totalorder %s103, %s104
    %p113 = scmp.eq.s32.totalorder %s18, 0
    %p114 = por %p112, %p113
    %p115 = scmp.ne.s32.totalorder %s103, %s104
    %p116 = scmp.eq.s32.totalorder %s19, 3
    %p117 = por %p115, %p116
    %p119 = scmp.ne.s32.totalorder %s104, %s118
    %p120 = scmp.eq.s32.totalorder %s19, 0
    %p121 = por %p119, %p120
    %s123 = sadd.s32 %s122, 1
    %p126 = scmp.eq.s32.totalorder %s13, 3
    %p127 = scmp.ne.s32.totalorder %s122, %s124
    %p128 = scmp.eq.s32.totalorder %s13, 0
    %p129 = por %p127, %p128
    %p130 = scmp.ne.s32.totalorder %s122, %s124
    %p131 = scmp.eq.s32.totalorder %s18, 3
    %p132 = por %p130, %p131
    %p133 = scmp.ne.s32.totalorder %s124, %s125
    %p134 = scmp.eq.s32.totalorder %s18, 0
    %p135 = por %p133, %p134
    %p136 = scmp.ne.s32.totalorder %s124, %s125
    %p137 = scmp.eq.s32.totalorder %s19, 3
    %p138 = por %p136, %p137
    %p140 = scmp.ne.s32.totalorder %s125, %s139
    %p141 = scmp.eq.s32.totalorder %s19, 0
    %p142 = por %p140, %p141
    %s144 = sadd.s32 %s143, 1
    %p147 = scmp.eq.s32.totalorder %s13, 3
    %p148 = scmp.ne.s32.totalorder %s143, %s145
    %p149 = scmp.eq.s32.totalorder %s13, 0
    %p150 = por %p148, %p149
    %p151 = scmp.ne.s32.totalorder %s143, %s145
    %p152 = scmp.eq.s32.totalorder %s18, 3
    %p153 = por %p151, %p152
    %p154 = scmp.ne.s32.totalorder %s145, %s146
    %p155 = scmp.eq.s32.totalorder %s18, 0
    %p156 = por %p154, %p155
    %p157 = scmp.ne.s32.totalorder %s145, %s146
    %p158 = scmp.eq.s32.totalorder %s19, 3
    %p159 = por %p157, %p158
    %p161 = scmp.ne.s32.totalorder %s146, %s160
    %p162 = scmp.eq.s32.totalorder %s19, 0
    %p163 = por %p161, %p162
    %s165 = sadd.s32 %s164, 1
    %p168 = scmp.eq.s32.totalorder %s13, 3
    %p169 = scmp.ne.s32.totalorder %s164, %s166
    %p170 = scmp.eq.s32.totalorder %s13, 0
    %p171 = por %p169, %p170
    %p172 = scmp.ne.s32.totalorder %s164, %s166
    %p173 = scmp.eq.s32.totalorder %s18, 3
    %p174 = por %p172, %p173
    %p175 = scmp.ne.s32.totalorder %s166, %s167
    %p176 = scmp.eq.s32.totalorder %s18, 0
    %p177 = por %p175, %p176
    %p178 = scmp.ne.s32.totalorder %s166, %s167
    %p179 = scmp.eq.s32.totalorder %s19, 3
    %p180 = por %p178, %p179
    %p182 = scmp.ne.s32.totalorder %s167, %s181
    %p183 = scmp.eq.s32.totalorder %s19, 0
    %p184 = por %p182, %p183
    %s185 = ssub.s32 %s20, %s32
    %s186 = ssub.s32 %s21, %s28
    %s187 = sor.u32 %s185, %s186
    %p188 = scmp.eq.s32.totalorder %s187, 0
    %s190 = sadd.s32 %s189, 1
    %s191 = scalar_select %p188, %s189, %s190
    %p194 = pneg %p188
    %p195 = scmp.eq.s32.totalorder %s13, 3
    %p196 = por %p194, %p195
    %p197 = scmp.ne.s32.totalorder %s189, %s192
    %p198 = scmp.eq.s32.totalorder %s13, 0
    %p199 = por %p197, %p198
    %p200 = scmp.ne.s32.totalorder %s189, %s192
    %p201 = scmp.eq.s32.totalorder %s18, 3
    %p202 = por %p200, %p201
    %p203 = scmp.ne.s32.totalorder %s192, %s193
    %p204 = scmp.eq.s32.totalorder %s18, 0
    %p205 = por %p203, %p204
    %p206 = scmp.ne.s32.totalorder %s192, %s193
    %p207 = scmp.eq.s32.totalorder %s19, 3
    %p208 = por %p206, %p207
    %p210 = scmp.ne.s32.totalorder %s193, %s209
    %p211 = scmp.eq.s32.totalorder %s19, 0
    %p212 = por %p210, %p211
    %p213 = scmp.le.s32.totalorder 1, %s13
    %p214 = scmp.lt.s32.totalorder %s13, 5
    %p215 = pnand %p213, %p214
    %p216 = pneg %p215
    // Predicated region
    $region9: #{tpu_custom_call.1} parent=5 // pred_check
      _
    $region10: #{tpu_custom_call.1} parent=5 // pred_check_branch
      %218 = sbr.rel (%p215) target = $region12
    $region11: #{tpu_custom_call.1} parent=5 // pred_region
      %s219 = ssub.s32 %s13, 1
      // Predicated region
      $region13: #{tpu_custom_call.1} parent=11 // pred_check
        %p220 = pneg %p72
      $region14: #{tpu_custom_call.1} parent=11 // pred_check_branch
        %222 = sbr.rel (%p220) target = $region16
      $region15: #{tpu_custom_call.1} parent=11 // pred_region
        _
      $region16: #{tpu_custom_call.1} parent=11 // pred_fallthru
        _
      // Predicated region
      $region17: #{tpu_custom_call.1} parent=11 // pred_check
        %p223 = pneg %p93
      $region18: #{tpu_custom_call.1} parent=11 // pred_check_branch
        %225 = sbr.rel (%p223) target = $region20
      $region19: #{tpu_custom_call.1} parent=11 // pred_region
        _
      $region20: #{tpu_custom_call.1} parent=11 // pred_fallthru
        _
      // Predicated region
      $region21: #{tpu_custom_call.1} parent=11 // pred_check
        %p226 = pneg %p114
      $region22: #{tpu_custom_call.1} parent=11 // pred_check_branch
        %228 = sbr.rel (%p226) target = $region24
      $region23: #{tpu_custom_call.1} parent=11 // pred_region
        _
      $region24: #{tpu_custom_call.1} parent=11 // pred_fallthru
        _
      // Predicated region
      $region25: #{tpu_custom_call.1} parent=11 // pred_check
        %p229 = pneg %p135
      $region26: #{tpu_custom_call.1} parent=11 // pred_check_branch
        %231 = sbr.rel (%p229) target = $region28
      $region27: #{tpu_custom_call.1} parent=11 // pred_region
        _
      $region28: #{tpu_custom_call.1} parent=11 // pred_fallthru
        _
      // Predicated region
      $region29: #{tpu_custom_call.1} parent=11 // pred_check
        %p232 = pneg %p156
      $region30: #{tpu_custom_call.1} parent=11 // pred_check_branch
        %234 = sbr.rel (%p232) target = $region32
      $region31: #{tpu_custom_call.1} parent=11 // pred_region
        _
      $region32: #{tpu_custom_call.1} parent=11 // pred_fallthru
        _
      // Predicated region
      $region33: #{tpu_custom_call.1} parent=11 // pred_check
        %p235 = pneg %p177
      $region34: #{tpu_custom_call.1} parent=11 // pred_check_branch
        %237 = sbr.rel (%p235) target = $region36
      $region35: #{tpu_custom_call.1} parent=11 // pred_region
        _
      $region36: #{tpu_custom_call.1} parent=11 // pred_fallthru
        _
    $region12: #{tpu_custom_call.1} parent=5 // pred_fallthru
      _
    %p238 = scmp.lt.s32.totalorder %s13, 4
    // Predicated region
    $region37: #{tpu_custom_call.1} parent=5 // pred_check
      %p239 = pneg %p238
    $region38: #{tpu_custom_call.1} parent=5 // pred_check_branch
      %241 = sbr.rel (%p239) target = $region40
    $region39: #{tpu_custom_call.1} parent=5 // pred_region
      // Predicated region
      $region41: #{tpu_custom_call.1} parent=39 // pred_check
        %p242 = pneg %p45
      $region42: #{tpu_custom_call.1} parent=39 // pred_check_branch
        %244 = sbr.rel (%p242) target = $region44
      $region43: #{tpu_custom_call.1} parent=39 // pred_region
        %p245 = scmp.lt.s32.totalorder %s20, 1
        %s246 = scalar_select %p245, %s20, 1
        %s247 = smul.addr %s246, 66
        %s248 = smul.addr %s247, 8
        %s249 = scalar_lea.vmem %s0, %s248
      $region44: #{tpu_custom_call.1} parent=39 // pred_fallthru
        _
    $region40: #{tpu_custom_call.1} parent=5 // pred_fallthru
      _
    %p250 = scmp.le.s32.totalorder 1, %s13
    %p251 = scmp.lt.s32.totalorder %s13, 5
    %p252 = pnand %p250, %p251
    %p253 = pneg %p252
    // Predicated region
    $region45: #{tpu_custom_call.1} parent=5 // pred_check
      _
    $region46: #{tpu_custom_call.1} parent=5 // pred_check_branch
      %255 = sbr.rel (%p252) target = $region48
    $region47: #{tpu_custom_call.1} parent=5 // pred_region
      %s256 = ssub.s32 %s13, 1
      %p257 = scmp.lt.s32.totalorder %s22, 1
      %s258 = scalar_select %p257, %s22, 1
      %s259 = smul.addr %s258, 66
      %s260 = smul.addr %s259, 8
      %s261 = scalar_lea.vmem %s0, %s260
      %p262 = pneg %p51
      %p263 = pneg %p48
      %p264 = pneg %p72
      %p265 = pneg %p69
      %p266 = pneg %p93
      %p267 = pneg %p90
      %p268 = pneg %p114
      %p269 = pneg %p111
      %p270 = pneg %p135
      %p271 = pneg %p132
      %p272 = pneg %p156
      %p273 = pneg %p153
      %p274 = pneg %p177
      %p275 = pneg %p174
      %p276 = pneg %p205
      %p277 = pneg %p202
      %s278 = smul.u32 16, %s23
      %p279 = scmp.lt.s32.totalorder %s22, 1
      %s280 = scalar_select %p279, %s22, 1
      %p281 = scmp.lt.s32.totalorder %s278, 31
      %s282 = scalar_select %p281, %s278, 31
      %s283 = smul.addr %s280, 32
      %s284 = sadd.s32 %s282, %s283
      %s285 = smul.addr %s284, 8
      %s286 = scalar_lea.vmem %s7, %s285
      %p287 = scmp.lt.s32.totalorder %s22, 1
      %s288 = scalar_select %p287, %s22, 1
      %s289 = smul.addr %s288, 66
      %s290 = smul.addr %s289, 8
      %s291 = scalar_lea.vmem %s0, %s290
      %s292 = smul.u32 16, %s23
      %p293 = scmp.lt.s32.totalorder %s22, 1
      %s294 = scalar_select %p293, %s22, 1
      %p295 = scmp.lt.s32.totalorder %s292, 31
      %s296 = scalar_select %p295, %s292, 31
      %s297 = smul.addr %s294, 32
      %s298 = sadd.s32 %s296, %s297
      %s299 = smul.addr %s298, 8
      %s300 = scalar_lea.vmem %s7, %s299
      %s301 = smul.u32 16, %s23
      %s303 = smul.u32 %s23, 8
      %s304 = smul.u32 %s303, 24
      %s305 = scalar_lea.vmem %s291, %s304
      %v306 = vld [vmem:[%s305] sm:$0xff]
      %v307 = vld [vmem:[%s305 + $0x8] sm:$0xff]
      %v308 = vld [vmem:[%s305 + $0x10] sm:$0x3f]
      %v309 = vld [vmem:[%s305 + $0x18] sm:$0xff]
      %v310 = vld [vmem:[%s305 + $0x20] sm:$0xff]
      %v311 = vld [vmem:[%s305 + $0x28] sm:$0x3f]
      %v312 = vld [vmem:[%s305 + $0x30] sm:$0xff]
      %v313 = vld [vmem:[%s305 + $0x38] sm:$0xff]
      %v314 = vld [vmem:[%s305 + $0x40] sm:$0x3f]
      %v315 = vld [vmem:[%s305 + $0x48] sm:$0xff]
      %v316 = vld [vmem:[%s305 + $0x50] sm:$0xff]
      %v317 = vld [vmem:[%s305 + $0x58] sm:$0x3f]
      %v318 = vld [vmem:[%s305 + $0x60] sm:$0xff]
      %v319 = vld [vmem:[%s305 + $0x68] sm:$0xff]
      %v320 = vld [vmem:[%s305 + $0x70] sm:$0x3f]
      %v321 = vld [vmem:[%s305 + $0x78] sm:$0xff]
      %v322 = vld [vmem:[%s305 + $0x80] sm:$0xff]
      %v323 = vld [vmem:[%s305 + $0x88] sm:$0x3f]
      %v324 = vld [vmem:[%s305 + $0x90] sm:$0xff]
      %v325 = vld [vmem:[%s305 + $0x98] sm:$0xff]
      %v326 = vld [vmem:[%s305 + $0xa0] sm:$0x3f]
      %v327 = vld [vmem:[%s305 + $0xa8] sm:$0xff]
      %v328 = vld [vmem:[%s305 + $0xb0] sm:$0xff]
      %v329 = vld [vmem:[%s305 + $0xb8] sm:$0x3f]
      %v330 = vld [vmem:[%s305 + $0xc0] sm:$0xff]
      %v331 = vld [vmem:[%s305 + $0xc8] sm:$0xff]
      %v332 = vld [vmem:[%s305 + $0xd0] sm:$0x3f]
      %v333 = vld [vmem:[%s305 + $0xd8] sm:$0xff]
      %v334 = vld [vmem:[%s305 + $0xe0] sm:$0xff]
      %v335 = vld [vmem:[%s305 + $0xe8] sm:$0x3f]
      %v336 = vld [vmem:[%s305 + $0xf0] sm:$0xff]
      %v337 = vld [vmem:[%s305 + $0xf8] sm:$0xff]
      %v338 = vld [vmem:[%s305 + $0x100] sm:$0x3f]
      %v339 = vld [vmem:[%s305 + $0x108] sm:$0xff]
      %v340 = vld [vmem:[%s305 + $0x110] sm:$0xff]
      %v341 = vld [vmem:[%s305 + $0x118] sm:$0x3f]
      %v342 = vld [vmem:[%s305 + $0x120] sm:$0xff]
      %v343 = vld [vmem:[%s305 + $0x128] sm:$0xff]
      %v344 = vld [vmem:[%s305 + $0x130] sm:$0x3f]
      %v345 = vld [vmem:[%s305 + $0x138] sm:$0xff]
      %v346 = vld [vmem:[%s305 + $0x140] sm:$0xff]
      %v347 = vld [vmem:[%s305 + $0x148] sm:$0x3f]
      %v348 = vld [vmem:[%s1] sm:$0x7f]
      %v349 = vld [vmem:[%s1 + $0x8] sm:$0x7f]
      %v350 = vld [vmem:[%s1 + $0x10] sm:$0x7f]
      %v351 = vld [vmem:[%s1 + $0x18] sm:$0x7f]
      %v352 = vld [vmem:[%s1 + $0x20] sm:$0x7f]
      %v353 = vld [vmem:[%s1 + $0x28] sm:$0x7f]
      %v354 = vld [vmem:[%s1 + $0x30] sm:$0x7f]
      %v355 = vlaneseq
      %v356 = vshrl.u32 %v355, 7
      %v357 = vsub.s32 0, %v356
      %v358 = vrot.slane %v348, %v357
      %v359 = vmul.f32 %v306, %v358
      %v360 = vmul.f32 %v307, %v358
      %v361 = vmul.f32 %v309, %v358
      %v362 = vmul.f32 %v310, %v358
      %v363 = vmul.f32 %v312, %v358
      %v364 = vmul.f32 %v313, %v358
      %v365 = vmul.f32 %v315, %v358
      %v366 = vmul.f32 %v316, %v358
      %v367 = vmul.f32 %v318, %v358
      %v368 = vmul.f32 %v319, %v358
      %v369 = vmul.f32 %v321, %v358
      %v370 = vmul.f32 %v322, %v358
      %v371 = vmul.f32 %v324, %v358
      %v372 = vmul.f32 %v325, %v358
      %v373 = vmul.f32 %v327, %v358
      %v374 = vmul.f32 %v328, %v358
      %v375 = vadd.f32 %v359, 0.0
      %v376 = vadd.f32 %v360, 0.0
      %v377 = vadd.f32 %v361, 0.0
      %v378 = vadd.f32 %v362, 0.0
      %v379 = vadd.f32 %v363, 0.0
      %v380 = vadd.f32 %v364, 0.0
      %v381 = vadd.f32 %v365, 0.0
      %v382 = vadd.f32 %v366, 0.0
      %v383 = vadd.f32 %v367, 0.0
      %v384 = vadd.f32 %v368, 0.0
      %v385 = vadd.f32 %v369, 0.0
      %v386 = vadd.f32 %v370, 0.0
      %v387 = vadd.f32 %v371, 0.0
      %v388 = vadd.f32 %v372, 0.0
      %v389 = vadd.f32 %v373, 0.0
      %v390 = vadd.f32 %v374, 0.0
      %v391 = vlaneseq
      %v392 = vshrl.u32 %v391, 7
      %v393 = vsub.s32 1, %v392
      %v394 = vrot.slane %v348, %v393
      %v395 = vmul.f32 %v306, %v394
      %v396 = vmul.f32 %v307, %v394
      %v397 = vmul.f32 %v308, %v394
      %v398 = vmul.f32 %v309, %v394
      %v399 = vmul.f32 %v310, %v394
      %v400 = vmul.f32 %v311, %v394
      %v401 = vmul.f32 %v312, %v394
      %v402 = vmul.f32 %v313, %v394
      %v403 = vmul.f32 %v314, %v394
      %v404 = vmul.f32 %v315, %v394
      %v405 = vmul.f32 %v316, %v394
      %v406 = vmul.f32 %v317, %v394
      %v407 = vmul.f32 %v318, %v394
      %v408 = vmul.f32 %v319, %v394
      %v409 = vmul.f32 %v320, %v394
      %v410 = vmul.f32 %v321, %v394
      %v411 = vmul.f32 %v322, %v394
      %v412 = vmul.f32 %v323, %v394
      %v413 = vmul.f32 %v324, %v394
      %v414 = vmul.f32 %v325, %v394
      %v415 = vmul.f32 %v326, %v394
      %v416 = vmul.f32 %v327, %v394
      %v417 = vmul.f32 %v328, %v394
      %v418 = vmul.f32 %v329, %v394
      %vm443 = vcmask 1046528
      %v444 = vrot.slane %v395, 1
      %v445 = vrot.slane %v396, 1
      %v446 = vsel %vm443, %v444, %v445
      %v447 = vrot.slane %v397, 1
      %v448 = vsel %vm443, %v445, %v447
      %v449 = vrot.slane %v398, 1
      %v450 = vrot.slane %v399, 1
      %v451 = vsel %vm443, %v449, %v450
      %v452 = vrot.slane %v400, 1
      %v453 = vsel %vm443, %v450, %v452
      %v454 = vrot.slane %v401, 1
      %v455 = vrot.slane %v402, 1
      %v456 = vsel %vm443, %v454, %v455
      %v457 = vrot.slane %v403, 1
      %v458 = vsel %vm443, %v455, %v457
      %v459 = vrot.slane %v404, 1
      %v460 = vrot.slane %v405, 1
      %v461 = vsel %vm443, %v459, %v460
      %v462 = vrot.slane %v406, 1
      %v463 = vsel %vm443, %v460, %v462
      %v464 = vrot.slane %v407, 1
      %v465 = vrot.slane %v408, 1
      %v466 = vsel %vm443, %v464, %v465
      %v467 = vrot.slane %v409, 1
      %v468 = vsel %vm443, %v465, %v467
      %v469 = vrot.slane %v410, 1
      %v470 = vrot.slane %v411, 1
      %v471 = vsel %vm443, %v469, %v470
      %v472 = vrot.slane %v412, 1
      %v473 = vsel %vm443, %v470, %v472
      %v474 = vrot.slane %v413, 1
      %v475 = vrot.slane %v414, 1
      %v476 = vsel %vm443, %v474, %v475
      %v477 = vrot.slane %v415, 1
      %v478 = vsel %vm443, %v475, %v477
      %v479 = vrot.slane %v416, 1
      %v480 = vrot.slane %v417, 1
      %v481 = vsel %vm443, %v479, %v480
      %v482 = vrot.slane %v418, 1
      %v483 = vsel %vm443, %v480, %v482
      %v500 = vadd.f32 %v375, %v446
      %v501 = vadd.f32 %v376, %v448
      %v502 = vadd.f32 %v377, %v451
      %v503 = vadd.f32 %v378, %v453
      %v504 = vadd.f32 %v379, %v456
      %v505 = vadd.f32 %v380, %v458
      %v506 = vadd.f32 %v381, %v461
      %v507 = vadd.f32 %v382, %v463
      %v508 = vadd.f32 %v383, %v466
      %v509 = vadd.f32 %v384, %v468
      %v510 = vadd.f32 %v385, %v471
      %v511 = vadd.f32 %v386, %v473
      %v512 = vadd.f32 %v387, %v476
      %v513 = vadd.f32 %v388, %v478
      %v514 = vadd.f32 %v389, %v481
      %v515 = vadd.f32 %v390, %v483
      %v516 = vlaneseq
      %v517 = vshrl.u32 %v516, 7
      %v518 = vsub.s32 2, %v517
      %v519 = vrot.slane %v348, %v518
      %v520 = vmul.f32 %v306, %v519
      %v521 = vmul.f32 %v307, %v519
      %v522 = vmul.f32 %v308, %v519
      %v523 = vmul.f32 %v309, %v519
      %v524 = vmul.f32 %v310, %v519
      %v525 = vmul.f32 %v311, %v519
      %v526 = vmul.f32 %v312, %v519
      %v527 = vmul.f32 %v313, %v519
      %v528 = vmul.f32 %v314, %v519
      %v529 = vmul.f32 %v315, %v519
      %v530 = vmul.f32 %v316, %v519
      %v531 = vmul.f32 %v317, %v519
      %v532 = vmul.f32 %v318, %v519
      %v533 = vmul.f32 %v319, %v519
      %v534 = vmul.f32 %v320, %v519
      %v535 = vmul.f32 %v321, %v519
      %v536 = vmul.f32 %v322, %v519
      %v537 = vmul.f32 %v323, %v519
      %v538 = vmul.f32 %v324, %v519
      %v539 = vmul.f32 %v325, %v519
      %v540 = vmul.f32 %v326, %v519
      %v541 = vmul.f32 %v327, %v519
      %v542 = vmul.f32 %v328, %v519
      %v543 = vmul.f32 %v329, %v519
      %vm568 = vcmask 1045504
      %v569 = vrot.slane %v520, 2
      %v570 = vrot.slane %v521, 2
      %v571 = vsel %vm568, %v569, %v570
      %v572 = vrot.slane %v522, 2
      %v573 = vsel %vm568, %v570, %v572
      %v574 = vrot.slane %v523, 2
      %v575 = vrot.slane %v524, 2
      %v576 = vsel %vm568, %v574, %v575
      %v577 = vrot.slane %v525, 2
      %v578 = vsel %vm568, %v575, %v577
      %v579 = vrot.slane %v526, 2
      %v580 = vrot.slane %v527, 2
      %v581 = vsel %vm568, %v579, %v580
      %v582 = vrot.slane %v528, 2
      %v583 = vsel %vm568, %v580, %v582
      %v584 = vrot.slane %v529, 2
      %v585 = vrot.slane %v530, 2
      %v586 = vsel %vm568, %v584, %v585
      %v587 = vrot.slane %v531, 2
      %v588 = vsel %vm568, %v585, %v587
      %v589 = vrot.slane %v532, 2
      %v590 = vrot.slane %v533, 2
      %v591 = vsel %vm568, %v589, %v590
      %v592 = vrot.slane %v534, 2
      %v593 = vsel %vm568, %v590, %v592
      %v594 = vrot.slane %v535, 2
      %v595 = vrot.slane %v536, 2
      %v596 = vsel %vm568, %v594, %v595
      %v597 = vrot.slane %v537, 2
      %v598 = vsel %vm568, %v595, %v597
      %v599 = vrot.slane %v538, 2
      %v600 = vrot.slane %v539, 2
      %v601 = vsel %vm568, %v599, %v600
      %v602 = vrot.slane %v540, 2
      %v603 = vsel %vm568, %v600, %v602
      %v604 = vrot.slane %v541, 2
      %v605 = vrot.slane %v542, 2
      %v606 = vsel %vm568, %v604, %v605
      %v607 = vrot.slane %v543, 2
      %v608 = vsel %vm568, %v605, %v607
      %v625 = vadd.f32 %v500, %v571
      %v626 = vadd.f32 %v501, %v573
      %v627 = vadd.f32 %v502, %v576
      %v628 = vadd.f32 %v503, %v578
      %v629 = vadd.f32 %v504, %v581
      %v630 = vadd.f32 %v505, %v583
      %v631 = vadd.f32 %v506, %v586
      %v632 = vadd.f32 %v507, %v588
      %v633 = vadd.f32 %v508, %v591
      %v634 = vadd.f32 %v509, %v593
      %v635 = vadd.f32 %v510, %v596
      %v636 = vadd.f32 %v511, %v598
      %v637 = vadd.f32 %v512, %v601
      %v638 = vadd.f32 %v513, %v603
      %v639 = vadd.f32 %v514, %v606
      %v640 = vadd.f32 %v515, %v608
      %v641 = vlaneseq
      %v642 = vshrl.u32 %v641, 7
      %v643 = vsub.s32 3, %v642
      %v644 = vrot.slane %v348, %v643
      %v645 = vmul.f32 %v306, %v644
      %v646 = vmul.f32 %v307, %v644
      %v647 = vmul.f32 %v308, %v644
      %v648 = vmul.f32 %v309, %v644
      %v649 = vmul.f32 %v310, %v644
      %v650 = vmul.f32 %v311, %v644
      %v651 = vmul.f32 %v312, %v644
      %v652 = vmul.f32 %v313, %v644
      %v653 = vmul.f32 %v314, %v644
      %v654 = vmul.f32 %v315, %v644
      %v655 = vmul.f32 %v316, %v644
      %v656 = vmul.f32 %v317, %v644
      %v657 = vmul.f32 %v318, %v644
      %v658 = vmul.f32 %v319, %v644
      %v659 = vmul.f32 %v320, %v644
      %v660 = vmul.f32 %v321, %v644
      %v661 = vmul.f32 %v322, %v644
      %v662 = vmul.f32 %v323, %v644
      %v663 = vmul.f32 %v324, %v644
      %v664 = vmul.f32 %v325, %v644
      %v665 = vmul.f32 %v326, %v644
      %v666 = vmul.f32 %v327, %v644
      %v667 = vmul.f32 %v328, %v644
      %v668 = vmul.f32 %v329, %v644
      %vm693 = vcmask 1044480
      %v694 = vrot.slane %v645, 3
      %v695 = vrot.slane %v646, 3
      %v696 = vsel %vm693, %v694, %v695
      %v697 = vrot.slane %v647, 3
      %v698 = vsel %vm693, %v695, %v697
      %v699 = vrot.slane %v648, 3
      %v700 = vrot.slane %v649, 3
      %v701 = vsel %vm693, %v699, %v700
      %v702 = vrot.slane %v650, 3
      %v703 = vsel %vm693, %v700, %v702
      %v704 = vrot.slane %v651, 3
      %v705 = vrot.slane %v652, 3
      %v706 = vsel %vm693, %v704, %v705
      %v707 = vrot.slane %v653, 3
      %v708 = vsel %vm693, %v705, %v707
      %v709 = vrot.slane %v654, 3
      %v710 = vrot.slane %v655, 3
      %v711 = vsel %vm693, %v709, %v710
      %v712 = vrot.slane %v656, 3
      %v713 = vsel %vm693, %v710, %v712
      %v714 = vrot.slane %v657, 3
      %v715 = vrot.slane %v658, 3
      %v716 = vsel %vm693, %v714, %v715
      %v717 = vrot.slane %v659, 3
      %v718 = vsel %vm693, %v715, %v717
      %v719 = vrot.slane %v660, 3
      %v720 = vrot.slane %v661, 3
      %v721 = vsel %vm693, %v719, %v720
      %v722 = vrot.slane %v662, 3
      %v723 = vsel %vm693, %v720, %v722
      %v724 = vrot.slane %v663, 3
      %v725 = vrot.slane %v664, 3
      %v726 = vsel %vm693, %v724, %v725
      %v727 = vrot.slane %v665, 3
      %v728 = vsel %vm693, %v725, %v727
      %v729 = vrot.slane %v666, 3
      %v730 = vrot.slane %v667, 3
      %v731 = vsel %vm693, %v729, %v730
      %v732 = vrot.slane %v668, 3
      %v733 = vsel %vm693, %v730, %v732
      %v750 = vadd.f32 %v625, %v696
      %v751 = vadd.f32 %v626, %v698
      %v752 = vadd.f32 %v627, %v701
      %v753 = vadd.f32 %v628, %v703
      %v754 = vadd.f32 %v629, %v706
      %v755 = vadd.f32 %v630, %v708
      %v756 = vadd.f32 %v631, %v711
      %v757 = vadd.f32 %v632, %v713
      %v758 = vadd.f32 %v633, %v716
      %v759 = vadd.f32 %v634, %v718
      %v760 = vadd.f32 %v635, %v721
      %v761 = vadd.f32 %v636, %v723
      %v762 = vadd.f32 %v637, %v726
      %v763 = vadd.f32 %v638, %v728
      %v764 = vadd.f32 %v639, %v731
      %v765 = vadd.f32 %v640, %v733
      %v766 = vlaneseq
      %v767 = vshrl.u32 %v766, 7
      %v768 = vsub.s32 4, %v767
      %v769 = vrot.slane %v348, %v768
      %v770 = vmul.f32 %v306, %v769
      %v771 = vmul.f32 %v307, %v769
      %v772 = vmul.f32 %v308, %v769
      %v773 = vmul.f32 %v309, %v769
      %v774 = vmul.f32 %v310, %v769
      %v775 = vmul.f32 %v311, %v769
      %v776 = vmul.f32 %v312, %v769
      %v777 = vmul.f32 %v313, %v769
      %v778 = vmul.f32 %v314, %v769
      %v779 = vmul.f32 %v315, %v769
      %v780 = vmul.f32 %v316, %v769
      %v781 = vmul.f32 %v317, %v769
      %v782 = vmul.f32 %v318, %v769
      %v783 = vmul.f32 %v319, %v769
      %v784 = vmul.f32 %v320, %v769
      %v785 = vmul.f32 %v321, %v769
      %v786 = vmul.f32 %v322, %v769
      %v787 = vmul.f32 %v323, %v769
      %v788 = vmul.f32 %v324, %v769
      %v789 = vmul.f32 %v325, %v769
      %v790 = vmul.f32 %v326, %v769
      %v791 = vmul.f32 %v327, %v769
      %v792 = vmul.f32 %v328, %v769
      %v793 = vmul.f32 %v329, %v769
      %vm818 = vcmask 1043456
      %v819 = vrot.slane %v770, 4
      %v820 = vrot.slane %v771, 4
      %v821 = vsel %vm818, %v819, %v820
      %v822 = vrot.slane %v772, 4
      %v823 = vsel %vm818, %v820, %v822
      %v824 = vrot.slane %v773, 4
      %v825 = vrot.slane %v774, 4
      %v826 = vsel %vm818, %v824, %v825
      %v827 = vrot.slane %v775, 4
      %v828 = vsel %vm818, %v825, %v827
      %v829 = vrot.slane %v776, 4
      %v830 = vrot.slane %v777, 4
      %v831 = vsel %vm818, %v829, %v830
      %v832 = vrot.slane %v778, 4
      %v833 = vsel %vm818, %v830, %v832
      %v834 = vrot.slane %v779, 4
      %v835 = vrot.slane %v780, 4
      %v836 = vsel %vm818, %v834, %v835
      %v837 = vrot.slane %v781, 4
      %v838 = vsel %vm818, %v835, %v837
      %v839 = vrot.slane %v782, 4
      %v840 = vrot.slane %v783, 4
      %v841 = vsel %vm818, %v839, %v840
      %v842 = vrot.slane %v784, 4
      %v843 = vsel %vm818, %v840, %v842
      %v844 = vrot.slane %v785, 4
      %v845 = vrot.slane %v786, 4
      %v846 = vsel %vm818, %v844, %v845
      %v847 = vrot.slane %v787, 4
      %v848 = vsel %vm818, %v845, %v847
      %v849 = vrot.slane %v788, 4
      %v850 = vrot.slane %v789, 4
      %v851 = vsel %vm818, %v849, %v850
      %v852 = vrot.slane %v790, 4
      %v853 = vsel %vm818, %v850, %v852
      %v854 = vrot.slane %v791, 4
      %v855 = vrot.slane %v792, 4
      %v856 = vsel %vm818, %v854, %v855
      %v857 = vrot.slane %v793, 4
      %v858 = vsel %vm818, %v855, %v857
      %v875 = vadd.f32 %v750, %v821
      %v876 = vadd.f32 %v751, %v823
      %v877 = vadd.f32 %v752, %v826
      %v878 = vadd.f32 %v753, %v828
      %v879 = vadd.f32 %v754, %v831
      %v880 = vadd.f32 %v755, %v833
      %v881 = vadd.f32 %v756, %v836
      %v882 = vadd.f32 %v757, %v838
      %v883 = vadd.f32 %v758, %v841
      %v884 = vadd.f32 %v759, %v843
      %v885 = vadd.f32 %v760, %v846
      %v886 = vadd.f32 %v761, %v848
      %v887 = vadd.f32 %v762, %v851
      %v888 = vadd.f32 %v763, %v853
      %v889 = vadd.f32 %v764, %v856
      %v890 = vadd.f32 %v765, %v858
      %v891 = vlaneseq
      %v892 = vshrl.u32 %v891, 7
      %v893 = vsub.s32 5, %v892
      %v894 = vrot.slane %v348, %v893
      %v895 = vmul.f32 %v306, %v894
      %v896 = vmul.f32 %v307, %v894
      %v897 = vmul.f32 %v308, %v894
      %v898 = vmul.f32 %v309, %v894
      %v899 = vmul.f32 %v310, %v894
      %v900 = vmul.f32 %v311, %v894
      %v901 = vmul.f32 %v312, %v894
      %v902 = vmul.f32 %v313, %v894
      %v903 = vmul.f32 %v314, %v894
      %v904 = vmul.f32 %v315, %v894
      %v905 = vmul.f32 %v316, %v894
      %v906 = vmul.f32 %v317, %v894
      %v907 = vmul.f32 %v318, %v894
      %v908 = vmul.f32 %v319, %v894
      %v909 = vmul.f32 %v320, %v894
      %v910 = vmul.f32 %v321, %v894
      %v911 = vmul.f32 %v322, %v894
      %v912 = vmul.f32 %v323, %v894
      %v913 = vmul.f32 %v324, %v894
      %v914 = vmul.f32 %v325, %v894
      %v915 = vmul.f32 %v326, %v894
      %v916 = vmul.f32 %v327, %v894
      %v917 = vmul.f32 %v328, %v894
      %v918 = vmul.f32 %v329, %v894
      %vm943 = vcmask 1042432
      %v944 = vrot.slane %v895, 5
      %v945 = vrot.slane %v896, 5
      %v946 = vsel %vm943, %v944, %v945
      %v947 = vrot.slane %v897, 5
      %v948 = vsel %vm943, %v945, %v947
      %v949 = vrot.slane %v898, 5
      %v950 = vrot.slane %v899, 5
      %v951 = vsel %vm943, %v949, %v950
      %v952 = vrot.slane %v900, 5
      %v953 = vsel %vm943, %v950, %v952
      %v954 = vrot.slane %v901, 5
      %v955 = vrot.slane %v902, 5
      %v956 = vsel %vm943, %v954, %v955
      %v957 = vrot.slane %v903, 5
      %v958 = vsel %vm943, %v955, %v957
      %v959 = vrot.slane %v904, 5
      %v960 = vrot.slane %v905, 5
      %v961 = vsel %vm943, %v959, %v960
      %v962 = vrot.slane %v906, 5
      %v963 = vsel %vm943, %v960, %v962
      %v964 = vrot.slane %v907, 5
      %v965 = vrot.slane %v908, 5
      %v966 = vsel %vm943, %v964, %v965
      %v967 = vrot.slane %v909, 5
      %v968 = vsel %vm943, %v965, %v967
      %v969 = vrot.slane %v910, 5
      %v970 = vrot.slane %v911, 5
      %v971 = vsel %vm943, %v969, %v970
      %v972 = vrot.slane %v912, 5
      %v973 = vsel %vm943, %v970, %v972
      %v974 = vrot.slane %v913, 5
      %v975 = vrot.slane %v914, 5
      %v976 = vsel %vm943, %v974, %v975
      %v977 = vrot.slane %v915, 5
      %v978 = vsel %vm943, %v975, %v977
      %v979 = vrot.slane %v916, 5
      %v980 = vrot.slane %v917, 5
      %v981 = vsel %vm943, %v979, %v980
      %v982 = vrot.slane %v918, 5
      %v983 = vsel %vm943, %v980, %v982
      %v1000 = vadd.f32 %v875, %v946
      %v1001 = vadd.f32 %v876, %v948
      %v1002 = vadd.f32 %v877, %v951
      %v1003 = vadd.f32 %v878, %v953
      %v1004 = vadd.f32 %v879, %v956
      %v1005 = vadd.f32 %v880, %v958
      %v1006 = vadd.f32 %v881, %v961
      %v1007 = vadd.f32 %v882, %v963
      %v1008 = vadd.f32 %v883, %v966
      %v1009 = vadd.f32 %v884, %v968
      %v1010 = vadd.f32 %v885, %v971
      %v1011 = vadd.f32 %v886, %v973
      %v1012 = vadd.f32 %v887, %v976
      %v1013 = vadd.f32 %v888, %v978
      %v1014 = vadd.f32 %v889, %v981
      %v1015 = vadd.f32 %v890, %v983
      %v1016 = vlaneseq
      %v1017 = vshrl.u32 %v1016, 7
      %v1018 = vsub.s32 6, %v1017
      %v1019 = vrot.slane %v348, %v1018
      %v1020 = vmul.f32 %v306, %v1019
      %v1021 = vmul.f32 %v307, %v1019
      %v1022 = vmul.f32 %v308, %v1019
      %v1023 = vmul.f32 %v309, %v1019
      %v1024 = vmul.f32 %v310, %v1019
      %v1025 = vmul.f32 %v311, %v1019
      %v1026 = vmul.f32 %v312, %v1019
      %v1027 = vmul.f32 %v313, %v1019
      %v1028 = vmul.f32 %v314, %v1019
      %v1029 = vmul.f32 %v315, %v1019
      %v1030 = vmul.f32 %v316, %v1019
      %v1031 = vmul.f32 %v317, %v1019
      %v1032 = vmul.f32 %v318, %v1019
      %v1033 = vmul.f32 %v319, %v1019
      %v1034 = vmul.f32 %v320, %v1019
      %v1035 = vmul.f32 %v321, %v1019
      %v1036 = vmul.f32 %v322, %v1019
      %v1037 = vmul.f32 %v323, %v1019
      %v1038 = vmul.f32 %v324, %v1019
      %v1039 = vmul.f32 %v325, %v1019
      %v1040 = vmul.f32 %v326, %v1019
      %v1041 = vmul.f32 %v327, %v1019
      %v1042 = vmul.f32 %v328, %v1019
      %v1043 = vmul.f32 %v329, %v1019
      %vm1068 = vcmask 1041408
      %v1069 = vrot.slane %v1020, 6
      %v1070 = vrot.slane %v1021, 6
      %v1071 = vsel %vm1068, %v1069, %v1070
      %v1072 = vrot.slane %v1022, 6
      %v1073 = vsel %vm1068, %v1070, %v1072
      %v1074 = vrot.slane %v1023, 6
      %v1075 = vrot.slane %v1024, 6
      %v1076 = vsel %vm1068, %v1074, %v1075
      %v1077 = vrot.slane %v1025, 6
      %v1078 = vsel %vm1068, %v1075, %v1077
      %v1079 = vrot.slane %v1026, 6
      %v1080 = vrot.slane %v1027, 6
      %v1081 = vsel %vm1068, %v1079, %v1080
      %v1082 = vrot.slane %v1028, 6
      %v1083 = vsel %vm1068, %v1080, %v1082
      %v1084 = vrot.slane %v1029, 6
      %v1085 = vrot.slane %v1030, 6
      %v1086 = vsel %vm1068, %v1084, %v1085
      %v1087 = vrot.slane %v1031, 6
      %v1088 = vsel %vm1068, %v1085, %v1087
      %v1089 = vrot.slane %v1032, 6
      %v1090 = vrot.slane %v1033, 6
      %v1091 = vsel %vm1068, %v1089, %v1090
      %v1092 = vrot.slane %v1034, 6
      %v1093 = vsel %vm1068, %v1090, %v1092
      %v1094 = vrot.slane %v1035, 6
      %v1095 = vrot.slane %v1036, 6
      %v1096 = vsel %vm1068, %v1094, %v1095
      %v1097 = vrot.slane %v1037, 6
      %v1098 = vsel %vm1068, %v1095, %v1097
      %v1099 = vrot.slane %v1038, 6
      %v1100 = vrot.slane %v1039, 6
      %v1101 = vsel %vm1068, %v1099, %v1100
      %v1102 = vrot.slane %v1040, 6
      %v1103 = vsel %vm1068, %v1100, %v1102
      %v1104 = vrot.slane %v1041, 6
      %v1105 = vrot.slane %v1042, 6
      %v1106 = vsel %vm1068, %v1104, %v1105
      %v1107 = vrot.slane %v1043, 6
      %v1108 = vsel %vm1068, %v1105, %v1107
      %v1125 = vadd.f32 %v1000, %v1071
      %v1126 = vadd.f32 %v1001, %v1073
      %v1127 = vadd.f32 %v1002, %v1076
      %v1128 = vadd.f32 %v1003, %v1078
      %v1129 = vadd.f32 %v1004, %v1081
      %v1130 = vadd.f32 %v1005, %v1083
      %v1131 = vadd.f32 %v1006, %v1086
      %v1132 = vadd.f32 %v1007, %v1088
      %v1133 = vadd.f32 %v1008, %v1091
      %v1134 = vadd.f32 %v1009, %v1093
      %v1135 = vadd.f32 %v1010, %v1096
      %v1136 = vadd.f32 %v1011, %v1098
      %v1137 = vadd.f32 %v1012, %v1101
      %v1138 = vadd.f32 %v1013, %v1103
      %v1139 = vadd.f32 %v1014, %v1106
      %v1140 = vadd.f32 %v1015, %v1108
      %v1141 = vlaneseq
      %v1142 = vshrl.u32 %v1141, 7
      %v1143 = vsub.s32 0, %v1142
      %v1144 = vrot.slane %v349, %v1143
      %v1145 = vmul.f32 %v309, %v1144
      %v1146 = vmul.f32 %v310, %v1144
      %v1147 = vmul.f32 %v312, %v1144
      %v1148 = vmul.f32 %v313, %v1144
      %v1149 = vmul.f32 %v315, %v1144
      %v1150 = vmul.f32 %v316, %v1144
      %v1151 = vmul.f32 %v318, %v1144
      %v1152 = vmul.f32 %v319, %v1144
      %v1153 = vmul.f32 %v321, %v1144
      %v1154 = vmul.f32 %v322, %v1144
      %v1155 = vmul.f32 %v324, %v1144
      %v1156 = vmul.f32 %v325, %v1144
      %v1157 = vmul.f32 %v327, %v1144
      %v1158 = vmul.f32 %v328, %v1144
      %v1159 = vmul.f32 %v330, %v1144
      %v1160 = vmul.f32 %v331, %v1144
      %v1161 = vadd.f32 %v1125, %v1145
      %v1162 = vadd.f32 %v1126, %v1146
      %v1163 = vadd.f32 %v1127, %v1147
      %v1164 = vadd.f32 %v1128, %v1148
      %v1165 = vadd.f32 %v1129, %v1149
      %v1166 = vadd.f32 %v1130, %v1150
      %v1167 = vadd.f32 %v1131, %v1151
      %v1168 = vadd.f32 %v1132, %v1152
      %v1169 = vadd.f32 %v1133, %v1153
      %v1170 = vadd.f32 %v1134, %v1154
      %v1171 = vadd.f32 %v1135, %v1155
      %v1172 = vadd.f32 %v1136, %v1156
      %v1173 = vadd.f32 %v1137, %v1157
      %v1174 = vadd.f32 %v1138, %v1158
      %v1175 = vadd.f32 %v1139, %v1159
      %v1176 = vadd.f32 %v1140, %v1160
      %v1177 = vlaneseq
      %v1178 = vshrl.u32 %v1177, 7
      %v1179 = vsub.s32 1, %v1178
      %v1180 = vrot.slane %v349, %v1179
      %v1181 = vmul.f32 %v309, %v1180
      %v1182 = vmul.f32 %v310, %v1180
      %v1183 = vmul.f32 %v311, %v1180
      %v1184 = vmul.f32 %v312, %v1180
      %v1185 = vmul.f32 %v313, %v1180
      %v1186 = vmul.f32 %v314, %v1180
      %v1187 = vmul.f32 %v315, %v1180
      %v1188 = vmul.f32 %v316, %v1180
      %v1189 = vmul.f32 %v317, %v1180
      %v1190 = vmul.f32 %v318, %v1180
      %v1191 = vmul.f32 %v319, %v1180
      %v1192 = vmul.f32 %v320, %v1180
      %v1193 = vmul.f32 %v321, %v1180
      %v1194 = vmul.f32 %v322, %v1180
      %v1195 = vmul.f32 %v323, %v1180
      %v1196 = vmul.f32 %v324, %v1180
      %v1197 = vmul.f32 %v325, %v1180
      %v1198 = vmul.f32 %v326, %v1180
      %v1199 = vmul.f32 %v327, %v1180
      %v1200 = vmul.f32 %v328, %v1180
      %v1201 = vmul.f32 %v329, %v1180
      %v1202 = vmul.f32 %v330, %v1180
      %v1203 = vmul.f32 %v331, %v1180
      %v1204 = vmul.f32 %v332, %v1180
      %v1229 = vrot.slane %v1181, 1
      %v1230 = vrot.slane %v1182, 1
      %v1231 = vsel %vm443, %v1229, %v1230
      %v1232 = vrot.slane %v1183, 1
      %v1233 = vsel %vm443, %v1230, %v1232
      %v1234 = vrot.slane %v1184, 1
      %v1235 = vrot.slane %v1185, 1
      %v1236 = vsel %vm443, %v1234, %v1235
      %v1237 = vrot.slane %v1186, 1
      %v1238 = vsel %vm443, %v1235, %v1237
      %v1239 = vrot.slane %v1187, 1
      %v1240 = vrot.slane %v1188, 1
      %v1241 = vsel %vm443, %v1239, %v1240
      %v1242 = vrot.slane %v1189, 1
      %v1243 = vsel %vm443, %v1240, %v1242
      %v1244 = vrot.slane %v1190, 1
      %v1245 = vrot.slane %v1191, 1
      %v1246 = vsel %vm443, %v1244, %v1245
      %v1247 = vrot.slane %v1192, 1
      %v1248 = vsel %vm443, %v1245, %v1247
      %v1249 = vrot.slane %v1193, 1
      %v1250 = vrot.slane %v1194, 1
      %v1251 = vsel %vm443, %v1249, %v1250
      %v1252 = vrot.slane %v1195, 1
      %v1253 = vsel %vm443, %v1250, %v1252
      %v1254 = vrot.slane %v1196, 1
      %v1255 = vrot.slane %v1197, 1
      %v1256 = vsel %vm443, %v1254, %v1255
      %v1257 = vrot.slane %v1198, 1
      %v1258 = vsel %vm443, %v1255, %v1257
      %v1259 = vrot.slane %v1199, 1
      %v1260 = vrot.slane %v1200, 1
      %v1261 = vsel %vm443, %v1259, %v1260
      %v1262 = vrot.slane %v1201, 1
      %v1263 = vsel %vm443, %v1260, %v1262
      %v1264 = vrot.slane %v1202, 1
      %v1265 = vrot.slane %v1203, 1
      %v1266 = vsel %vm443, %v1264, %v1265
      %v1267 = vrot.slane %v1204, 1
      %v1268 = vsel %vm443, %v1265, %v1267
      %v1285 = vadd.f32 %v1161, %v1231
      %v1286 = vadd.f32 %v1162, %v1233
      %v1287 = vadd.f32 %v1163, %v1236
      %v1288 = vadd.f32 %v1164, %v1238
      %v1289 = vadd.f32 %v1165, %v1241
      %v1290 = vadd.f32 %v1166, %v1243
      %v1291 = vadd.f32 %v1167, %v1246
      %v1292 = vadd.f32 %v1168, %v1248
      %v1293 = vadd.f32 %v1169, %v1251
      %v1294 = vadd.f32 %v1170, %v1253
      %v1295 = vadd.f32 %v1171, %v1256
      %v1296 = vadd.f32 %v1172, %v1258
      %v1297 = vadd.f32 %v1173, %v1261
      %v1298 = vadd.f32 %v1174, %v1263
      %v1299 = vadd.f32 %v1175, %v1266
      %v1300 = vadd.f32 %v1176, %v1268
      %v1301 = vlaneseq
      %v1302 = vshrl.u32 %v1301, 7
      %v1303 = vsub.s32 2, %v1302
      %v1304 = vrot.slane %v349, %v1303
      %v1305 = vmul.f32 %v309, %v1304
      %v1306 = vmul.f32 %v310, %v1304
      %v1307 = vmul.f32 %v311, %v1304
      %v1308 = vmul.f32 %v312, %v1304
      %v1309 = vmul.f32 %v313, %v1304
      %v1310 = vmul.f32 %v314, %v1304
      %v1311 = vmul.f32 %v315, %v1304
      %v1312 = vmul.f32 %v316, %v1304
      %v1313 = vmul.f32 %v317, %v1304
      %v1314 = vmul.f32 %v318, %v1304
      %v1315 = vmul.f32 %v319, %v1304
      %v1316 = vmul.f32 %v320, %v1304
      %v1317 = vmul.f32 %v321, %v1304
      %v1318 = vmul.f32 %v322, %v1304
      %v1319 = vmul.f32 %v323, %v1304
      %v1320 = vmul.f32 %v324, %v1304
      %v1321 = vmul.f32 %v325, %v1304
      %v1322 = vmul.f32 %v326, %v1304
      %v1323 = vmul.f32 %v327, %v1304
      %v1324 = vmul.f32 %v328, %v1304
      %v1325 = vmul.f32 %v329, %v1304
      %v1326 = vmul.f32 %v330, %v1304
      %v1327 = vmul.f32 %v331, %v1304
      %v1328 = vmul.f32 %v332, %v1304
      %v1353 = vrot.slane %v1305, 2
      %v1354 = vrot.slane %v1306, 2
      %v1355 = vsel %vm568, %v1353, %v1354
      %v1356 = vrot.slane %v1307, 2
      %v1357 = vsel %vm568, %v1354, %v1356
      %v1358 = vrot.slane %v1308, 2
      %v1359 = vrot.slane %v1309, 2
      %v1360 = vsel %vm568, %v1358, %v1359
      %v1361 = vrot.slane %v1310, 2
      %v1362 = vsel %vm568, %v1359, %v1361
      %v1363 = vrot.slane %v1311, 2
      %v1364 = vrot.slane %v1312, 2
      %v1365 = vsel %vm568, %v1363, %v1364
      %v1366 = vrot.slane %v1313, 2
      %v1367 = vsel %vm568, %v1364, %v1366
      %v1368 = vrot.slane %v1314, 2
      %v1369 = vrot.slane %v1315, 2
      %v1370 = vsel %vm568, %v1368, %v1369
      %v1371 = vrot.slane %v1316, 2
      %v1372 = vsel %vm568, %v1369, %v1371
      %v1373 = vrot.slane %v1317, 2
      %v1374 = vrot.slane %v1318, 2
      %v1375 = vsel %vm568, %v1373, %v1374
      %v1376 = vrot.slane %v1319, 2
      %v1377 = vsel %vm568, %v1374, %v1376
      %v1378 = vrot.slane %v1320, 2
      %v1379 = vrot.slane %v1321, 2
      %v1380 = vsel %vm568, %v1378, %v1379
      %v1381 = vrot.slane %v1322, 2
      %v1382 = vsel %vm568, %v1379, %v1381
      %v1383 = vrot.slane %v1323, 2
      %v1384 = vrot.slane %v1324, 2
      %v1385 = vsel %vm568, %v1383, %v1384
      %v1386 = vrot.slane %v1325, 2
      %v1387 = vsel %vm568, %v1384, %v1386
      %v1388 = vrot.slane %v1326, 2
      %v1389 = vrot.slane %v1327, 2
      %v1390 = vsel %vm568, %v1388, %v1389
      %v1391 = vrot.slane %v1328, 2
      %v1392 = vsel %vm568, %v1389, %v1391
      %v1409 = vadd.f32 %v1285, %v1355
      %v1410 = vadd.f32 %v1286, %v1357
      %v1411 = vadd.f32 %v1287, %v1360
      %v1412 = vadd.f32 %v1288, %v1362
      %v1413 = vadd.f32 %v1289, %v1365
      %v1414 = vadd.f32 %v1290, %v1367
      %v1415 = vadd.f32 %v1291, %v1370
      %v1416 = vadd.f32 %v1292, %v1372
      %v1417 = vadd.f32 %v1293, %v1375
      %v1418 = vadd.f32 %v1294, %v1377
      %v1419 = vadd.f32 %v1295, %v1380
      %v1420 = vadd.f32 %v1296, %v1382
      %v1421 = vadd.f32 %v1297, %v1385
      %v1422 = vadd.f32 %v1298, %v1387
      %v1423 = vadd.f32 %v1299, %v1390
      %v1424 = vadd.f32 %v1300, %v1392
      %v1425 = vlaneseq
      %v1426 = vshrl.u32 %v1425, 7
      %v1427 = vsub.s32 3, %v1426
      %v1428 = vrot.slane %v349, %v1427
      %v1429 = vmul.f32 %v309, %v1428
      %v1430 = vmul.f32 %v310, %v1428
      %v1431 = vmul.f32 %v311, %v1428
      %v1432 = vmul.f32 %v312, %v1428
      %v1433 = vmul.f32 %v313, %v1428
      %v1434 = vmul.f32 %v314, %v1428
      %v1435 = vmul.f32 %v315, %v1428
      %v1436 = vmul.f32 %v316, %v1428
      %v1437 = vmul.f32 %v317, %v1428
      %v1438 = vmul.f32 %v318, %v1428
      %v1439 = vmul.f32 %v319, %v1428
      %v1440 = vmul.f32 %v320, %v1428
      %v1441 = vmul.f32 %v321, %v1428
      %v1442 = vmul.f32 %v322, %v1428
      %v1443 = vmul.f32 %v323, %v1428
      %v1444 = vmul.f32 %v324, %v1428
      %v1445 = vmul.f32 %v325, %v1428
      %v1446 = vmul.f32 %v326, %v1428
      %v1447 = vmul.f32 %v327, %v1428
      %v1448 = vmul.f32 %v328, %v1428
      %v1449 = vmul.f32 %v329, %v1428
      %v1450 = vmul.f32 %v330, %v1428
      %v1451 = vmul.f32 %v331, %v1428
      %v1452 = vmul.f32 %v332, %v1428
      %v1477 = vrot.slane %v1429, 3
      %v1478 = vrot.slane %v1430, 3
      %v1479 = vsel %vm693, %v1477, %v1478
      %v1480 = vrot.slane %v1431, 3
      %v1481 = vsel %vm693, %v1478, %v1480
      %v1482 = vrot.slane %v1432, 3
      %v1483 = vrot.slane %v1433, 3
      %v1484 = vsel %vm693, %v1482, %v1483
      %v1485 = vrot.slane %v1434, 3
      %v1486 = vsel %vm693, %v1483, %v1485
      %v1487 = vrot.slane %v1435, 3
      %v1488 = vrot.slane %v1436, 3
      %v1489 = vsel %vm693, %v1487, %v1488
      %v1490 = vrot.slane %v1437, 3
      %v1491 = vsel %vm693, %v1488, %v1490
      %v1492 = vrot.slane %v1438, 3
      %v1493 = vrot.slane %v1439, 3
      %v1494 = vsel %vm693, %v1492, %v1493
      %v1495 = vrot.slane %v1440, 3
      %v1496 = vsel %vm693, %v1493, %v1495
      %v1497 = vrot.slane %v1441, 3
      %v1498 = vrot.slane %v1442, 3
      %v1499 = vsel %vm693, %v1497, %v1498
      %v1500 = vrot.slane %v1443, 3
      %v1501 = vsel %vm693, %v1498, %v1500
      %v1502 = vrot.slane %v1444, 3
      %v1503 = vrot.slane %v1445, 3
      %v1504 = vsel %vm693, %v1502, %v1503
      %v1505 = vrot.slane %v1446, 3
      %v1506 = vsel %vm693, %v1503, %v1505
      %v1507 = vrot.slane %v1447, 3
      %v1508 = vrot.slane %v1448, 3
      %v1509 = vsel %vm693, %v1507, %v1508
      %v1510 = vrot.slane %v1449, 3
      %v1511 = vsel %vm693, %v1508, %v1510
      %v1512 = vrot.slane %v1450, 3
      %v1513 = vrot.slane %v1451, 3
      %v1514 = vsel %vm693, %v1512, %v1513
      %v1515 = vrot.slane %v1452, 3
      %v1516 = vsel %vm693, %v1513, %v1515
      %v1533 = vadd.f32 %v1409, %v1479
      %v1534 = vadd.f32 %v1410, %v1481
      %v1535 = vadd.f32 %v1411, %v1484
      %v1536 = vadd.f32 %v1412, %v1486
      %v1537 = vadd.f32 %v1413, %v1489
      %v1538 = vadd.f32 %v1414, %v1491
      %v1539 = vadd.f32 %v1415, %v1494
      %v1540 = vadd.f32 %v1416, %v1496
      %v1541 = vadd.f32 %v1417, %v1499
      %v1542 = vadd.f32 %v1418, %v1501
      %v1543 = vadd.f32 %v1419, %v1504
      %v1544 = vadd.f32 %v1420, %v1506
      %v1545 = vadd.f32 %v1421, %v1509
      %v1546 = vadd.f32 %v1422, %v1511
      %v1547 = vadd.f32 %v1423, %v1514
      %v1548 = vadd.f32 %v1424, %v1516
      %v1549 = vlaneseq
      %v1550 = vshrl.u32 %v1549, 7
      %v1551 = vsub.s32 4, %v1550
      %v1552 = vrot.slane %v349, %v1551
      %v1553 = vmul.f32 %v309, %v1552
      %v1554 = vmul.f32 %v310, %v1552
      %v1555 = vmul.f32 %v311, %v1552
      %v1556 = vmul.f32 %v312, %v1552
      %v1557 = vmul.f32 %v313, %v1552
      %v1558 = vmul.f32 %v314, %v1552
      %v1559 = vmul.f32 %v315, %v1552
      %v1560 = vmul.f32 %v316, %v1552
      %v1561 = vmul.f32 %v317, %v1552
      %v1562 = vmul.f32 %v318, %v1552
      %v1563 = vmul.f32 %v319, %v1552
      %v1564 = vmul.f32 %v320, %v1552
      %v1565 = vmul.f32 %v321, %v1552
      %v1566 = vmul.f32 %v322, %v1552
      %v1567 = vmul.f32 %v323, %v1552
      %v1568 = vmul.f32 %v324, %v1552
      %v1569 = vmul.f32 %v325, %v1552
      %v1570 = vmul.f32 %v326, %v1552
      %v1571 = vmul.f32 %v327, %v1552
      %v1572 = vmul.f32 %v328, %v1552
      %v1573 = vmul.f32 %v329, %v1552
      %v1574 = vmul.f32 %v330, %v1552
      %v1575 = vmul.f32 %v331, %v1552
      %v1576 = vmul.f32 %v332, %v1552
      %v1601 = vrot.slane %v1553, 4
      %v1602 = vrot.slane %v1554, 4
      %v1603 = vsel %vm818, %v1601, %v1602
      %v1604 = vrot.slane %v1555, 4
      %v1605 = vsel %vm818, %v1602, %v1604
      %v1606 = vrot.slane %v1556, 4
      %v1607 = vrot.slane %v1557, 4
      %v1608 = vsel %vm818, %v1606, %v1607
      %v1609 = vrot.slane %v1558, 4
      %v1610 = vsel %vm818, %v1607, %v1609
      %v1611 = vrot.slane %v1559, 4
      %v1612 = vrot.slane %v1560, 4
      %v1613 = vsel %vm818, %v1611, %v1612
      %v1614 = vrot.slane %v1561, 4
      %v1615 = vsel %vm818, %v1612, %v1614
      %v1616 = vrot.slane %v1562, 4
      %v1617 = vrot.slane %v1563, 4
      %v1618 = vsel %vm818, %v1616, %v1617
      %v1619 = vrot.slane %v1564, 4
      %v1620 = vsel %vm818, %v1617, %v1619
      %v1621 = vrot.slane %v1565, 4
      %v1622 = vrot.slane %v1566, 4
      %v1623 = vsel %vm818, %v1621, %v1622
      %v1624 = vrot.slane %v1567, 4
      %v1625 = vsel %vm818, %v1622, %v1624
      %v1626 = vrot.slane %v1568, 4
      %v1627 = vrot.slane %v1569, 4
      %v1628 = vsel %vm818, %v1626, %v1627
      %v1629 = vrot.slane %v1570, 4
      %v1630 = vsel %vm818, %v1627, %v1629
      %v1631 = vrot.slane %v1571, 4
      %v1632 = vrot.slane %v1572, 4
      %v1633 = vsel %vm818, %v1631, %v1632
      %v1634 = vrot.slane %v1573, 4
      %v1635 = vsel %vm818, %v1632, %v1634
      %v1636 = vrot.slane %v1574, 4
      %v1637 = vrot.slane %v1575, 4
      %v1638 = vsel %vm818, %v1636, %v1637
      %v1639 = vrot.slane %v1576, 4
      %v1640 = vsel %vm818, %v1637, %v1639
      %v1657 = vadd.f32 %v1533, %v1603
      %v1658 = vadd.f32 %v1534, %v1605
      %v1659 = vadd.f32 %v1535, %v1608
      %v1660 = vadd.f32 %v1536, %v1610
      %v1661 = vadd.f32 %v1537, %v1613
      %v1662 = vadd.f32 %v1538, %v1615
      %v1663 = vadd.f32 %v1539, %v1618
      %v1664 = vadd.f32 %v1540, %v1620
      %v1665 = vadd.f32 %v1541, %v1623
      %v1666 = vadd.f32 %v1542, %v1625
      %v1667 = vadd.f32 %v1543, %v1628
      %v1668 = vadd.f32 %v1544, %v1630
      %v1669 = vadd.f32 %v1545, %v1633
      %v1670 = vadd.f32 %v1546, %v1635
      %v1671 = vadd.f32 %v1547, %v1638
      %v1672 = vadd.f32 %v1548, %v1640
      %v1673 = vlaneseq
      %v1674 = vshrl.u32 %v1673, 7
      %v1675 = vsub.s32 5, %v1674
      %v1676 = vrot.slane %v349, %v1675
      %v1677 = vmul.f32 %v309, %v1676
      %v1678 = vmul.f32 %v310, %v1676
      %v1679 = vmul.f32 %v311, %v1676
      %v1680 = vmul.f32 %v312, %v1676
      %v1681 = vmul.f32 %v313, %v1676
      %v1682 = vmul.f32 %v314, %v1676
      %v1683 = vmul.f32 %v315, %v1676
      %v1684 = vmul.f32 %v316, %v1676
      %v1685 = vmul.f32 %v317, %v1676
      %v1686 = vmul.f32 %v318, %v1676
      %v1687 = vmul.f32 %v319, %v1676
      %v1688 = vmul.f32 %v320, %v1676
      %v1689 = vmul.f32 %v321, %v1676
      %v1690 = vmul.f32 %v322, %v1676
      %v1691 = vmul.f32 %v323, %v1676
      %v1692 = vmul.f32 %v324, %v1676
      %v1693 = vmul.f32 %v325, %v1676
      %v1694 = vmul.f32 %v326, %v1676
      %v1695 = vmul.f32 %v327, %v1676
      %v1696 = vmul.f32 %v328, %v1676
      %v1697 = vmul.f32 %v329, %v1676
      %v1698 = vmul.f32 %v330, %v1676
      %v1699 = vmul.f32 %v331, %v1676
      %v1700 = vmul.f32 %v332, %v1676
      %v1725 = vrot.slane %v1677, 5
      %v1726 = vrot.slane %v1678, 5
      %v1727 = vsel %vm943, %v1725, %v1726
      %v1728 = vrot.slane %v1679, 5
      %v1729 = vsel %vm943, %v1726, %v1728
      %v1730 = vrot.slane %v1680, 5
      %v1731 = vrot.slane %v1681, 5
      %v1732 = vsel %vm943, %v1730, %v1731
      %v1733 = vrot.slane %v1682, 5
      %v1734 = vsel %vm943, %v1731, %v1733
      %v1735 = vrot.slane %v1683, 5
      %v1736 = vrot.slane %v1684, 5
      %v1737 = vsel %vm943, %v1735, %v1736
      %v1738 = vrot.slane %v1685, 5
      %v1739 = vsel %vm943, %v1736, %v1738
      %v1740 = vrot.slane %v1686, 5
      %v1741 = vrot.slane %v1687, 5
      %v1742 = vsel %vm943, %v1740, %v1741
      %v1743 = vrot.slane %v1688, 5
      %v1744 = vsel %vm943, %v1741, %v1743
      %v1745 = vrot.slane %v1689, 5
      %v1746 = vrot.slane %v1690, 5
      %v1747 = vsel %vm943, %v1745, %v1746
      %v1748 = vrot.slane %v1691, 5
      %v1749 = vsel %vm943, %v1746, %v1748
      %v1750 = vrot.slane %v1692, 5
      %v1751 = vrot.slane %v1693, 5
      %v1752 = vsel %vm943, %v1750, %v1751
      %v1753 = vrot.slane %v1694, 5
      %v1754 = vsel %vm943, %v1751, %v1753
      %v1755 = vrot.slane %v1695, 5
      %v1756 = vrot.slane %v1696, 5
      %v1757 = vsel %vm943, %v1755, %v1756
      %v1758 = vrot.slane %v1697, 5
      %v1759 = vsel %vm943, %v1756, %v1758
      %v1760 = vrot.slane %v1698, 5
      %v1761 = vrot.slane %v1699, 5
      %v1762 = vsel %vm943, %v1760, %v1761
      %v1763 = vrot.slane %v1700, 5
      %v1764 = vsel %vm943, %v1761, %v1763
      %v1781 = vadd.f32 %v1657, %v1727
      %v1782 = vadd.f32 %v1658, %v1729
      %v1783 = vadd.f32 %v1659, %v1732
      %v1784 = vadd.f32 %v1660, %v1734
      %v1785 = vadd.f32 %v1661, %v1737
      %v1786 = vadd.f32 %v1662, %v1739
      %v1787 = vadd.f32 %v1663, %v1742
      %v1788 = vadd.f32 %v1664, %v1744
      %v1789 = vadd.f32 %v1665, %v1747
      %v1790 = vadd.f32 %v1666, %v1749
      %v1791 = vadd.f32 %v1667, %v1752
      %v1792 = vadd.f32 %v1668, %v1754
      %v1793 = vadd.f32 %v1669, %v1757
      %v1794 = vadd.f32 %v1670, %v1759
      %v1795 = vadd.f32 %v1671, %v1762
      %v1796 = vadd.f32 %v1672, %v1764
      %v1797 = vlaneseq
      %v1798 = vshrl.u32 %v1797, 7
      %v1799 = vsub.s32 6, %v1798
      %v1800 = vrot.slane %v349, %v1799
      %v1801 = vmul.f32 %v309, %v1800
      %v1802 = vmul.f32 %v310, %v1800
      %v1803 = vmul.f32 %v311, %v1800
      %v1804 = vmul.f32 %v312, %v1800
      %v1805 = vmul.f32 %v313, %v1800
      %v1806 = vmul.f32 %v314, %v1800
      %v1807 = vmul.f32 %v315, %v1800
      %v1808 = vmul.f32 %v316, %v1800
      %v1809 = vmul.f32 %v317, %v1800
      %v1810 = vmul.f32 %v318, %v1800
      %v1811 = vmul.f32 %v319, %v1800
      %v1812 = vmul.f32 %v320, %v1800
      %v1813 = vmul.f32 %v321, %v1800
      %v1814 = vmul.f32 %v322, %v1800
      %v1815 = vmul.f32 %v323, %v1800
      %v1816 = vmul.f32 %v324, %v1800
      %v1817 = vmul.f32 %v325, %v1800
      %v1818 = vmul.f32 %v326, %v1800
      %v1819 = vmul.f32 %v327, %v1800
      %v1820 = vmul.f32 %v328, %v1800
      %v1821 = vmul.f32 %v329, %v1800
      %v1822 = vmul.f32 %v330, %v1800
      %v1823 = vmul.f32 %v331, %v1800
      %v1824 = vmul.f32 %v332, %v1800
      %v1849 = vrot.slane %v1801, 6
      %v1850 = vrot.slane %v1802, 6
      %v1851 = vsel %vm1068, %v1849, %v1850
      %v1852 = vrot.slane %v1803, 6
      %v1853 = vsel %vm1068, %v1850, %v1852
      %v1854 = vrot.slane %v1804, 6
      %v1855 = vrot.slane %v1805, 6
      %v1856 = vsel %vm1068, %v1854, %v1855
      %v1857 = vrot.slane %v1806, 6
      %v1858 = vsel %vm1068, %v1855, %v1857
      %v1859 = vrot.slane %v1807, 6
      %v1860 = vrot.slane %v1808, 6
      %v1861 = vsel %vm1068, %v1859, %v1860
      %v1862 = vrot.slane %v1809, 6
      %v1863 = vsel %vm1068, %v1860, %v1862
      %v1864 = vrot.slane %v1810, 6
      %v1865 = vrot.slane %v1811, 6
      %v1866 = vsel %vm1068, %v1864, %v1865
      %v1867 = vrot.slane %v1812, 6
      %v1868 = vsel %vm1068, %v1865, %v1867
      %v1869 = vrot.slane %v1813, 6
      %v1870 = vrot.slane %v1814, 6
      %v1871 = vsel %vm1068, %v1869, %v1870
      %v1872 = vrot.slane %v1815, 6
      %v1873 = vsel %vm1068, %v1870, %v1872
      %v1874 = vrot.slane %v1816, 6
      %v1875 = vrot.slane %v1817, 6
      %v1876 = vsel %vm1068, %v1874, %v1875
      %v1877 = vrot.slane %v1818, 6
      %v1878 = vsel %vm1068, %v1875, %v1877
      %v1879 = vrot.slane %v1819, 6
      %v1880 = vrot.slane %v1820, 6
      %v1881 = vsel %vm1068, %v1879, %v1880
      %v1882 = vrot.slane %v1821, 6
      %v1883 = vsel %vm1068, %v1880, %v1882
      %v1884 = vrot.slane %v1822, 6
      %v1885 = vrot.slane %v1823, 6
      %v1886 = vsel %vm1068, %v1884, %v1885
      %v1887 = vrot.slane %v1824, 6
      %v1888 = vsel %vm1068, %v1885, %v1887
      %v1905 = vadd.f32 %v1781, %v1851
      %v1906 = vadd.f32 %v1782, %v1853
      %v1907 = vadd.f32 %v1783, %v1856
      %v1908 = vadd.f32 %v1784, %v1858
      %v1909 = vadd.f32 %v1785, %v1861
      %v1910 = vadd.f32 %v1786, %v1863
      %v1911 = vadd.f32 %v1787, %v1866
      %v1912 = vadd.f32 %v1788, %v1868
      %v1913 = vadd.f32 %v1789, %v1871
      %v1914 = vadd.f32 %v1790, %v1873
      %v1915 = vadd.f32 %v1791, %v1876
      %v1916 = vadd.f32 %v1792, %v1878
      %v1917 = vadd.f32 %v1793, %v1881
      %v1918 = vadd.f32 %v1794, %v1883
      %v1919 = vadd.f32 %v1795, %v1886
      %v1920 = vadd.f32 %v1796, %v1888
      %v1921 = vlaneseq
      %v1922 = vshrl.u32 %v1921, 7
      %v1923 = vsub.s32 0, %v1922
      %v1924 = vrot.slane %v350, %v1923
      %v1925 = vmul.f32 %v312, %v1924
      %v1926 = vmul.f32 %v313, %v1924
      %v1927 = vmul.f32 %v315, %v1924
      %v1928 = vmul.f32 %v316, %v1924
      %v1929 = vmul.f32 %v318, %v1924
      %v1930 = vmul.f32 %v319, %v1924
      %v1931 = vmul.f32 %v321, %v1924
      %v1932 = vmul.f32 %v322, %v1924
      %v1933 = vmul.f32 %v324, %v1924
      %v1934 = vmul.f32 %v325, %v1924
      %v1935 = vmul.f32 %v327, %v1924
      %v1936 = vmul.f32 %v328, %v1924
      %v1937 = vmul.f32 %v330, %v1924
      %v1938 = vmul.f32 %v331, %v1924
      %v1939 = vmul.f32 %v333, %v1924
      %v1940 = vmul.f32 %v334, %v1924
      %v1941 = vadd.f32 %v1905, %v1925
      %v1942 = vadd.f32 %v1906, %v1926
      %v1943 = vadd.f32 %v1907, %v1927
      %v1944 = vadd.f32 %v1908, %v1928
      %v1945 = vadd.f32 %v1909, %v1929
      %v1946 = vadd.f32 %v1910, %v1930
      %v1947 = vadd.f32 %v1911, %v1931
      %v1948 = vadd.f32 %v1912, %v1932
      %v1949 = vadd.f32 %v1913, %v1933
      %v1950 = vadd.f32 %v1914, %v1934
      %v1951 = vadd.f32 %v1915, %v1935
      %v1952 = vadd.f32 %v1916, %v1936
      %v1953 = vadd.f32 %v1917, %v1937
      %v1954 = vadd.f32 %v1918, %v1938
      %v1955 = vadd.f32 %v1919, %v1939
      %v1956 = vadd.f32 %v1920, %v1940
      %v1957 = vlaneseq
      %v1958 = vshrl.u32 %v1957, 7
      %v1959 = vsub.s32 1, %v1958
      %v1960 = vrot.slane %v350, %v1959
      %v1961 = vmul.f32 %v312, %v1960
      %v1962 = vmul.f32 %v313, %v1960
      %v1963 = vmul.f32 %v314, %v1960
      %v1964 = vmul.f32 %v315, %v1960
      %v1965 = vmul.f32 %v316, %v1960
      %v1966 = vmul.f32 %v317, %v1960
      %v1967 = vmul.f32 %v318, %v1960
      %v1968 = vmul.f32 %v319, %v1960
      %v1969 = vmul.f32 %v320, %v1960
      %v1970 = vmul.f32 %v321, %v1960
      %v1971 = vmul.f32 %v322, %v1960
      %v1972 = vmul.f32 %v323, %v1960
      %v1973 = vmul.f32 %v324, %v1960
      %v1974 = vmul.f32 %v325, %v1960
      %v1975 = vmul.f32 %v326, %v1960
      %v1976 = vmul.f32 %v327, %v1960
      %v1977 = vmul.f32 %v328, %v1960
      %v1978 = vmul.f32 %v329, %v1960
      %v1979 = vmul.f32 %v330, %v1960
      %v1980 = vmul.f32 %v331, %v1960
      %v1981 = vmul.f32 %v332, %v1960
      %v1982 = vmul.f32 %v333, %v1960
      %v1983 = vmul.f32 %v334, %v1960
      %v1984 = vmul.f32 %v335, %v1960
      %v2009 = vrot.slane %v1961, 1
      %v2010 = vrot.slane %v1962, 1
      %v2011 = vsel %vm443, %v2009, %v2010
      %v2012 = vrot.slane %v1963, 1
      %v2013 = vsel %vm443, %v2010, %v2012
      %v2014 = vrot.slane %v1964, 1
      %v2015 = vrot.slane %v1965, 1
      %v2016 = vsel %vm443, %v2014, %v2015
      %v2017 = vrot.slane %v1966, 1
      %v2018 = vsel %vm443, %v2015, %v2017
      %v2019 = vrot.slane %v1967, 1
      %v2020 = vrot.slane %v1968, 1
      %v2021 = vsel %vm443, %v2019, %v2020
      %v2022 = vrot.slane %v1969, 1
      %v2023 = vsel %vm443, %v2020, %v2022
      %v2024 = vrot.slane %v1970, 1
      %v2025 = vrot.slane %v1971, 1
      %v2026 = vsel %vm443, %v2024, %v2025
      %v2027 = vrot.slane %v1972, 1
      %v2028 = vsel %vm443, %v2025, %v2027
      %v2029 = vrot.slane %v1973, 1
      %v2030 = vrot.slane %v1974, 1
      %v2031 = vsel %vm443, %v2029, %v2030
      %v2032 = vrot.slane %v1975, 1
      %v2033 = vsel %vm443, %v2030, %v2032
      %v2034 = vrot.slane %v1976, 1
      %v2035 = vrot.slane %v1977, 1
      %v2036 = vsel %vm443, %v2034, %v2035
      %v2037 = vrot.slane %v1978, 1
      %v2038 = vsel %vm443, %v2035, %v2037
      %v2039 = vrot.slane %v1979, 1
      %v2040 = vrot.slane %v1980, 1
      %v2041 = vsel %vm443, %v2039, %v2040
      %v2042 = vrot.slane %v1981, 1
      %v2043 = vsel %vm443, %v2040, %v2042
      %v2044 = vrot.slane %v1982, 1
      %v2045 = vrot.slane %v1983, 1
      %v2046 = vsel %vm443, %v2044, %v2045
      %v2047 = vrot.slane %v1984, 1
      %v2048 = vsel %vm443, %v2045, %v2047
      %v2065 = vadd.f32 %v1941, %v2011
      %v2066 = vadd.f32 %v1942, %v2013
      %v2067 = vadd.f32 %v1943, %v2016
      %v2068 = vadd.f32 %v1944, %v2018
      %v2069 = vadd.f32 %v1945, %v2021
      %v2070 = vadd.f32 %v1946, %v2023
      %v2071 = vadd.f32 %v1947, %v2026
      %v2072 = vadd.f32 %v1948, %v2028
      %v2073 = vadd.f32 %v1949, %v2031
      %v2074 = vadd.f32 %v1950, %v2033
      %v2075 = vadd.f32 %v1951, %v2036
      %v2076 = vadd.f32 %v1952, %v2038
      %v2077 = vadd.f32 %v1953, %v2041
      %v2078 = vadd.f32 %v1954, %v2043
      %v2079 = vadd.f32 %v1955, %v2046
      %v2080 = vadd.f32 %v1956, %v2048
      %v2081 = vlaneseq
      %v2082 = vshrl.u32 %v2081, 7
      %v2083 = vsub.s32 2, %v2082
      %v2084 = vrot.slane %v350, %v2083
      %v2085 = vmul.f32 %v312, %v2084
      %v2086 = vmul.f32 %v313, %v2084
      %v2087 = vmul.f32 %v314, %v2084
      %v2088 = vmul.f32 %v315, %v2084
      %v2089 = vmul.f32 %v316, %v2084
      %v2090 = vmul.f32 %v317, %v2084
      %v2091 = vmul.f32 %v318, %v2084
      %v2092 = vmul.f32 %v319, %v2084
      %v2093 = vmul.f32 %v320, %v2084
      %v2094 = vmul.f32 %v321, %v2084
      %v2095 = vmul.f32 %v322, %v2084
      %v2096 = vmul.f32 %v323, %v2084
      %v2097 = vmul.f32 %v324, %v2084
      %v2098 = vmul.f32 %v325, %v2084
      %v2099 = vmul.f32 %v326, %v2084
      %v2100 = vmul.f32 %v327, %v2084
      %v2101 = vmul.f32 %v328, %v2084
      %v2102 = vmul.f32 %v329, %v2084
      %v2103 = vmul.f32 %v330, %v2084
      %v2104 = vmul.f32 %v331, %v2084
      %v2105 = vmul.f32 %v332, %v2084
      %v2106 = vmul.f32 %v333, %v2084
      %v2107 = vmul.f32 %v334, %v2084
      %v2108 = vmul.f32 %v335, %v2084
      %v2133 = vrot.slane %v2085, 2
      %v2134 = vrot.slane %v2086, 2
      %v2135 = vsel %vm568, %v2133, %v2134
      %v2136 = vrot.slane %v2087, 2
      %v2137 = vsel %vm568, %v2134, %v2136
      %v2138 = vrot.slane %v2088, 2
      %v2139 = vrot.slane %v2089, 2
      %v2140 = vsel %vm568, %v2138, %v2139
      %v2141 = vrot.slane %v2090, 2
      %v2142 = vsel %vm568, %v2139, %v2141
      %v2143 = vrot.slane %v2091, 2
      %v2144 = vrot.slane %v2092, 2
      %v2145 = vsel %vm568, %v2143, %v2144
      %v2146 = vrot.slane %v2093, 2
      %v2147 = vsel %vm568, %v2144, %v2146
      %v2148 = vrot.slane %v2094, 2
      %v2149 = vrot.slane %v2095, 2
      %v2150 = vsel %vm568, %v2148, %v2149
      %v2151 = vrot.slane %v2096, 2
      %v2152 = vsel %vm568, %v2149, %v2151
      %v2153 = vrot.slane %v2097, 2
      %v2154 = vrot.slane %v2098, 2
      %v2155 = vsel %vm568, %v2153, %v2154
      %v2156 = vrot.slane %v2099, 2
      %v2157 = vsel %vm568, %v2154, %v2156
      %v2158 = vrot.slane %v2100, 2
      %v2159 = vrot.slane %v2101, 2
      %v2160 = vsel %vm568, %v2158, %v2159
      %v2161 = vrot.slane %v2102, 2
      %v2162 = vsel %vm568, %v2159, %v2161
      %v2163 = vrot.slane %v2103, 2
      %v2164 = vrot.slane %v2104, 2
      %v2165 = vsel %vm568, %v2163, %v2164
      %v2166 = vrot.slane %v2105, 2
      %v2167 = vsel %vm568, %v2164, %v2166
      %v2168 = vrot.slane %v2106, 2
      %v2169 = vrot.slane %v2107, 2
      %v2170 = vsel %vm568, %v2168, %v2169
      %v2171 = vrot.slane %v2108, 2
      %v2172 = vsel %vm568, %v2169, %v2171
      %v2189 = vadd.f32 %v2065, %v2135
      %v2190 = vadd.f32 %v2066, %v2137
      %v2191 = vadd.f32 %v2067, %v2140
      %v2192 = vadd.f32 %v2068, %v2142
      %v2193 = vadd.f32 %v2069, %v2145
      %v2194 = vadd.f32 %v2070, %v2147
      %v2195 = vadd.f32 %v2071, %v2150
      %v2196 = vadd.f32 %v2072, %v2152
      %v2197 = vadd.f32 %v2073, %v2155
      %v2198 = vadd.f32 %v2074, %v2157
      %v2199 = vadd.f32 %v2075, %v2160
      %v2200 = vadd.f32 %v2076, %v2162
      %v2201 = vadd.f32 %v2077, %v2165
      %v2202 = vadd.f32 %v2078, %v2167
      %v2203 = vadd.f32 %v2079, %v2170
      %v2204 = vadd.f32 %v2080, %v2172
      %v2205 = vlaneseq
      %v2206 = vshrl.u32 %v2205, 7
      %v2207 = vsub.s32 3, %v2206
      %v2208 = vrot.slane %v350, %v2207
      %v2209 = vmul.f32 %v312, %v2208
      %v2210 = vmul.f32 %v313, %v2208
      %v2211 = vmul.f32 %v314, %v2208
      %v2212 = vmul.f32 %v315, %v2208
      %v2213 = vmul.f32 %v316, %v2208
      %v2214 = vmul.f32 %v317, %v2208
      %v2215 = vmul.f32 %v318, %v2208
      %v2216 = vmul.f32 %v319, %v2208
      %v2217 = vmul.f32 %v320, %v2208
      %v2218 = vmul.f32 %v321, %v2208
      %v2219 = vmul.f32 %v322, %v2208
      %v2220 = vmul.f32 %v323, %v2208
      %v2221 = vmul.f32 %v324, %v2208
      %v2222 = vmul.f32 %v325, %v2208
      %v2223 = vmul.f32 %v326, %v2208
      %v2224 = vmul.f32 %v327, %v2208
      %v2225 = vmul.f32 %v328, %v2208
      %v2226 = vmul.f32 %v329, %v2208
      %v2227 = vmul.f32 %v330, %v2208
      %v2228 = vmul.f32 %v331, %v2208
      %v2229 = vmul.f32 %v332, %v2208
      %v2230 = vmul.f32 %v333, %v2208
      %v2231 = vmul.f32 %v334, %v2208
      %v2232 = vmul.f32 %v335, %v2208
      %v2257 = vrot.slane %v2209, 3
      %v2258 = vrot.slane %v2210, 3
      %v2259 = vsel %vm693, %v2257, %v2258
      %v2260 = vrot.slane %v2211, 3
      %v2261 = vsel %vm693, %v2258, %v2260
      %v2262 = vrot.slane %v2212, 3
      %v2263 = vrot.slane %v2213, 3
      %v2264 = vsel %vm693, %v2262, %v2263
      %v2265 = vrot.slane %v2214, 3
      %v2266 = vsel %vm693, %v2263, %v2265
      %v2267 = vrot.slane %v2215, 3
      %v2268 = vrot.slane %v2216, 3
      %v2269 = vsel %vm693, %v2267, %v2268
      %v2270 = vrot.slane %v2217, 3
      %v2271 = vsel %vm693, %v2268, %v2270
      %v2272 = vrot.slane %v2218, 3
      %v2273 = vrot.slane %v2219, 3
      %v2274 = vsel %vm693, %v2272, %v2273
      %v2275 = vrot.slane %v2220, 3
      %v2276 = vsel %vm693, %v2273, %v2275
      %v2277 = vrot.slane %v2221, 3
      %v2278 = vrot.slane %v2222, 3
      %v2279 = vsel %vm693, %v2277, %v2278
      %v2280 = vrot.slane %v2223, 3
      %v2281 = vsel %vm693, %v2278, %v2280
      %v2282 = vrot.slane %v2224, 3
      %v2283 = vrot.slane %v2225, 3
      %v2284 = vsel %vm693, %v2282, %v2283
      %v2285 = vrot.slane %v2226, 3
      %v2286 = vsel %vm693, %v2283, %v2285
      %v2287 = vrot.slane %v2227, 3
      %v2288 = vrot.slane %v2228, 3
      %v2289 = vsel %vm693, %v2287, %v2288
      %v2290 = vrot.slane %v2229, 3
      %v2291 = vsel %vm693, %v2288, %v2290
      %v2292 = vrot.slane %v2230, 3
      %v2293 = vrot.slane %v2231, 3
      %v2294 = vsel %vm693, %v2292, %v2293
      %v2295 = vrot.slane %v2232, 3
      %v2296 = vsel %vm693, %v2293, %v2295
      %v2313 = vadd.f32 %v2189, %v2259
      %v2314 = vadd.f32 %v2190, %v2261
      %v2315 = vadd.f32 %v2191, %v2264
      %v2316 = vadd.f32 %v2192, %v2266
      %v2317 = vadd.f32 %v2193, %v2269
      %v2318 = vadd.f32 %v2194, %v2271
      %v2319 = vadd.f32 %v2195, %v2274
      %v2320 = vadd.f32 %v2196, %v2276
      %v2321 = vadd.f32 %v2197, %v2279
      %v2322 = vadd.f32 %v2198, %v2281
      %v2323 = vadd.f32 %v2199, %v2284
      %v2324 = vadd.f32 %v2200, %v2286
      %v2325 = vadd.f32 %v2201, %v2289
      %v2326 = vadd.f32 %v2202, %v2291
      %v2327 = vadd.f32 %v2203, %v2294
      %v2328 = vadd.f32 %v2204, %v2296
      %v2329 = vlaneseq
      %v2330 = vshrl.u32 %v2329, 7
      %v2331 = vsub.s32 4, %v2330
      %v2332 = vrot.slane %v350, %v2331
      %v2333 = vmul.f32 %v312, %v2332
      %v2334 = vmul.f32 %v313, %v2332
      %v2335 = vmul.f32 %v314, %v2332
      %v2336 = vmul.f32 %v315, %v2332
      %v2337 = vmul.f32 %v316, %v2332
      %v2338 = vmul.f32 %v317, %v2332
      %v2339 = vmul.f32 %v318, %v2332
      %v2340 = vmul.f32 %v319, %v2332
      %v2341 = vmul.f32 %v320, %v2332
      %v2342 = vmul.f32 %v321, %v2332
      %v2343 = vmul.f32 %v322, %v2332
      %v2344 = vmul.f32 %v323, %v2332
      %v2345 = vmul.f32 %v324, %v2332
      %v2346 = vmul.f32 %v325, %v2332
      %v2347 = vmul.f32 %v326, %v2332
      %v2348 = vmul.f32 %v327, %v2332
      %v2349 = vmul.f32 %v328, %v2332
      %v2350 = vmul.f32 %v329, %v2332
      %v2351 = vmul.f32 %v330, %v2332
      %v2352 = vmul.f32 %v331, %v2332
      %v2353 = vmul.f32 %v332, %v2332
      %v2354 = vmul.f32 %v333, %v2332
      %v2355 = vmul.f32 %v334, %v2332
      %v2356 = vmul.f32 %v335, %v2332
      %v2381 = vrot.slane %v2333, 4
      %v2382 = vrot.slane %v2334, 4
      %v2383 = vsel %vm818, %v2381, %v2382
      %v2384 = vrot.slane %v2335, 4
      %v2385 = vsel %vm818, %v2382, %v2384
      %v2386 = vrot.slane %v2336, 4
      %v2387 = vrot.slane %v2337, 4
      %v2388 = vsel %vm818, %v2386, %v2387
      %v2389 = vrot.slane %v2338, 4
      %v2390 = vsel %vm818, %v2387, %v2389
      %v2391 = vrot.slane %v2339, 4
      %v2392 = vrot.slane %v2340, 4
      %v2393 = vsel %vm818, %v2391, %v2392
      %v2394 = vrot.slane %v2341, 4
      %v2395 = vsel %vm818, %v2392, %v2394
      %v2396 = vrot.slane %v2342, 4
      %v2397 = vrot.slane %v2343, 4
      %v2398 = vsel %vm818, %v2396, %v2397
      %v2399 = vrot.slane %v2344, 4
      %v2400 = vsel %vm818, %v2397, %v2399
      %v2401 = vrot.slane %v2345, 4
      %v2402 = vrot.slane %v2346, 4
      %v2403 = vsel %vm818, %v2401, %v2402
      %v2404 = vrot.slane %v2347, 4
      %v2405 = vsel %vm818, %v2402, %v2404
      %v2406 = vrot.slane %v2348, 4
      %v2407 = vrot.slane %v2349, 4
      %v2408 = vsel %vm818, %v2406, %v2407
      %v2409 = vrot.slane %v2350, 4
      %v2410 = vsel %vm818, %v2407, %v2409
      %v2411 = vrot.slane %v2351, 4
      %v2412 = vrot.slane %v2352, 4
      %v2413 = vsel %vm818, %v2411, %v2412
      %v2414 = vrot.slane %v2353, 4
      %v2415 = vsel %vm818, %v2412, %v2414
      %v2416 = vrot.slane %v2354, 4
      %v2417 = vrot.slane %v2355, 4
      %v2418 = vsel %vm818, %v2416, %v2417
      %v2419 = vrot.slane %v2356, 4
      %v2420 = vsel %vm818, %v2417, %v2419
      %v2437 = vadd.f32 %v2313, %v2383
      %v2438 = vadd.f32 %v2314, %v2385
      %v2439 = vadd.f32 %v2315, %v2388
      %v2440 = vadd.f32 %v2316, %v2390
      %v2441 = vadd.f32 %v2317, %v2393
      %v2442 = vadd.f32 %v2318, %v2395
      %v2443 = vadd.f32 %v2319, %v2398
      %v2444 = vadd.f32 %v2320, %v2400
      %v2445 = vadd.f32 %v2321, %v2403
      %v2446 = vadd.f32 %v2322, %v2405
      %v2447 = vadd.f32 %v2323, %v2408
      %v2448 = vadd.f32 %v2324, %v2410
      %v2449 = vadd.f32 %v2325, %v2413
      %v2450 = vadd.f32 %v2326, %v2415
      %v2451 = vadd.f32 %v2327, %v2418
      %v2452 = vadd.f32 %v2328, %v2420
      %v2453 = vlaneseq
      %v2454 = vshrl.u32 %v2453, 7
      %v2455 = vsub.s32 5, %v2454
      %v2456 = vrot.slane %v350, %v2455
      %v2457 = vmul.f32 %v312, %v2456
      %v2458 = vmul.f32 %v313, %v2456
      %v2459 = vmul.f32 %v314, %v2456
      %v2460 = vmul.f32 %v315, %v2456
      %v2461 = vmul.f32 %v316, %v2456
      %v2462 = vmul.f32 %v317, %v2456
      %v2463 = vmul.f32 %v318, %v2456
      %v2464 = vmul.f32 %v319, %v2456
      %v2465 = vmul.f32 %v320, %v2456
      %v2466 = vmul.f32 %v321, %v2456
      %v2467 = vmul.f32 %v322, %v2456
      %v2468 = vmul.f32 %v323, %v2456
      %v2469 = vmul.f32 %v324, %v2456
      %v2470 = vmul.f32 %v325, %v2456
      %v2471 = vmul.f32 %v326, %v2456
      %v2472 = vmul.f32 %v327, %v2456
      %v2473 = vmul.f32 %v328, %v2456
      %v2474 = vmul.f32 %v329, %v2456
      %v2475 = vmul.f32 %v330, %v2456
      %v2476 = vmul.f32 %v331, %v2456
      %v2477 = vmul.f32 %v332, %v2456
      %v2478 = vmul.f32 %v333, %v2456
      %v2479 = vmul.f32 %v334, %v2456
      %v2480 = vmul.f32 %v335, %v2456
      %v2505 = vrot.slane %v2457, 5
      %v2506 = vrot.slane %v2458, 5
      %v2507 = vsel %vm943, %v2505, %v2506
      %v2508 = vrot.slane %v2459, 5
      %v2509 = vsel %vm943, %v2506, %v2508
      %v2510 = vrot.slane %v2460, 5
      %v2511 = vrot.slane %v2461, 5
      %v2512 = vsel %vm943, %v2510, %v2511
      %v2513 = vrot.slane %v2462, 5
      %v2514 = vsel %vm943, %v2511, %v2513
      %v2515 = vrot.slane %v2463, 5
      %v2516 = vrot.slane %v2464, 5
      %v2517 = vsel %vm943, %v2515, %v2516
      %v2518 = vrot.slane %v2465, 5
      %v2519 = vsel %vm943, %v2516, %v2518
      %v2520 = vrot.slane %v2466, 5
      %v2521 = vrot.slane %v2467, 5
      %v2522 = vsel %vm943, %v2520, %v2521
      %v2523 = vrot.slane %v2468, 5
      %v2524 = vsel %vm943, %v2521, %v2523
      %v2525 = vrot.slane %v2469, 5
      %v2526 = vrot.slane %v2470, 5
      %v2527 = vsel %vm943, %v2525, %v2526
      %v2528 = vrot.slane %v2471, 5
      %v2529 = vsel %vm943, %v2526, %v2528
      %v2530 = vrot.slane %v2472, 5
      %v2531 = vrot.slane %v2473, 5
      %v2532 = vsel %vm943, %v2530, %v2531
      %v2533 = vrot.slane %v2474, 5
      %v2534 = vsel %vm943, %v2531, %v2533
      %v2535 = vrot.slane %v2475, 5
      %v2536 = vrot.slane %v2476, 5
      %v2537 = vsel %vm943, %v2535, %v2536
      %v2538 = vrot.slane %v2477, 5
      %v2539 = vsel %vm943, %v2536, %v2538
      %v2540 = vrot.slane %v2478, 5
      %v2541 = vrot.slane %v2479, 5
      %v2542 = vsel %vm943, %v2540, %v2541
      %v2543 = vrot.slane %v2480, 5
      %v2544 = vsel %vm943, %v2541, %v2543
      %v2561 = vadd.f32 %v2437, %v2507
      %v2562 = vadd.f32 %v2438, %v2509
      %v2563 = vadd.f32 %v2439, %v2512
      %v2564 = vadd.f32 %v2440, %v2514
      %v2565 = vadd.f32 %v2441, %v2517
      %v2566 = vadd.f32 %v2442, %v2519
      %v2567 = vadd.f32 %v2443, %v2522
      %v2568 = vadd.f32 %v2444, %v2524
      %v2569 = vadd.f32 %v2445, %v2527
      %v2570 = vadd.f32 %v2446, %v2529
      %v2571 = vadd.f32 %v2447, %v2532
      %v2572 = vadd.f32 %v2448, %v2534
      %v2573 = vadd.f32 %v2449, %v2537
      %v2574 = vadd.f32 %v2450, %v2539
      %v2575 = vadd.f32 %v2451, %v2542
      %v2576 = vadd.f32 %v2452, %v2544
      %v2577 = vlaneseq
      %v2578 = vshrl.u32 %v2577, 7
      %v2579 = vsub.s32 6, %v2578
      %v2580 = vrot.slane %v350, %v2579
      %v2581 = vmul.f32 %v312, %v2580
      %v2582 = vmul.f32 %v313, %v2580
      %v2583 = vmul.f32 %v314, %v2580
      %v2584 = vmul.f32 %v315, %v2580
      %v2585 = vmul.f32 %v316, %v2580
      %v2586 = vmul.f32 %v317, %v2580
      %v2587 = vmul.f32 %v318, %v2580
      %v2588 = vmul.f32 %v319, %v2580
      %v2589 = vmul.f32 %v320, %v2580
      %v2590 = vmul.f32 %v321, %v2580
      %v2591 = vmul.f32 %v322, %v2580
      %v2592 = vmul.f32 %v323, %v2580
      %v2593 = vmul.f32 %v324, %v2580
      %v2594 = vmul.f32 %v325, %v2580
      %v2595 = vmul.f32 %v326, %v2580
      %v2596 = vmul.f32 %v327, %v2580
      %v2597 = vmul.f32 %v328, %v2580
      %v2598 = vmul.f32 %v329, %v2580
      %v2599 = vmul.f32 %v330, %v2580
      %v2600 = vmul.f32 %v331, %v2580
      %v2601 = vmul.f32 %v332, %v2580
      %v2602 = vmul.f32 %v333, %v2580
      %v2603 = vmul.f32 %v334, %v2580
      %v2604 = vmul.f32 %v335, %v2580
      %v2629 = vrot.slane %v2581, 6
      %v2630 = vrot.slane %v2582, 6
      %v2631 = vsel %vm1068, %v2629, %v2630
      %v2632 = vrot.slane %v2583, 6
      %v2633 = vsel %vm1068, %v2630, %v2632
      %v2634 = vrot.slane %v2584, 6
      %v2635 = vrot.slane %v2585, 6
      %v2636 = vsel %vm1068, %v2634, %v2635
      %v2637 = vrot.slane %v2586, 6
      %v2638 = vsel %vm1068, %v2635, %v2637
      %v2639 = vrot.slane %v2587, 6
      %v2640 = vrot.slane %v2588, 6
      %v2641 = vsel %vm1068, %v2639, %v2640
      %v2642 = vrot.slane %v2589, 6
      %v2643 = vsel %vm1068, %v2640, %v2642
      %v2644 = vrot.slane %v2590, 6
      %v2645 = vrot.slane %v2591, 6
      %v2646 = vsel %vm1068, %v2644, %v2645
      %v2647 = vrot.slane %v2592, 6
      %v2648 = vsel %vm1068, %v2645, %v2647
      %v2649 = vrot.slane %v2593, 6
      %v2650 = vrot.slane %v2594, 6
      %v2651 = vsel %vm1068, %v2649, %v2650
      %v2652 = vrot.slane %v2595, 6
      %v2653 = vsel %vm1068, %v2650, %v2652
      %v2654 = vrot.slane %v2596, 6
      %v2655 = vrot.slane %v2597, 6
      %v2656 = vsel %vm1068, %v2654, %v2655
      %v2657 = vrot.slane %v2598, 6
      %v2658 = vsel %vm1068, %v2655, %v2657
      %v2659 = vrot.slane %v2599, 6
      %v2660 = vrot.slane %v2600, 6
      %v2661 = vsel %vm1068, %v2659, %v2660
      %v2662 = vrot.slane %v2601, 6
      %v2663 = vsel %vm1068, %v2660, %v2662
      %v2664 = vrot.slane %v2602, 6
      %v2665 = vrot.slane %v2603, 6
      %v2666 = vsel %vm1068, %v2664, %v2665
      %v2667 = vrot.slane %v2604, 6
      %v2668 = vsel %vm1068, %v2665, %v2667
      %v2685 = vadd.f32 %v2561, %v2631
      %v2686 = vadd.f32 %v2562, %v2633
      %v2687 = vadd.f32 %v2563, %v2636
      %v2688 = vadd.f32 %v2564, %v2638
      %v2689 = vadd.f32 %v2565, %v2641
      %v2690 = vadd.f32 %v2566, %v2643
      %v2691 = vadd.f32 %v2567, %v2646
      %v2692 = vadd.f32 %v2568, %v2648
      %v2693 = vadd.f32 %v2569, %v2651
      %v2694 = vadd.f32 %v2570, %v2653
      %v2695 = vadd.f32 %v2571, %v2656
      %v2696 = vadd.f32 %v2572, %v2658
      %v2697 = vadd.f32 %v2573, %v2661
      %v2698 = vadd.f32 %v2574, %v2663
      %v2699 = vadd.f32 %v2575, %v2666
      %v2700 = vadd.f32 %v2576, %v2668
      %v2701 = vlaneseq
      %v2702 = vshrl.u32 %v2701, 7
      %v2703 = vsub.s32 0, %v2702
      %v2704 = vrot.slane %v351, %v2703
      %v2705 = vmul.f32 %v315, %v2704
      %v2706 = vmul.f32 %v316, %v2704
      %v2707 = vmul.f32 %v318, %v2704
      %v2708 = vmul.f32 %v319, %v2704
      %v2709 = vmul.f32 %v321, %v2704
      %v2710 = vmul.f32 %v322, %v2704
      %v2711 = vmul.f32 %v324, %v2704
      %v2712 = vmul.f32 %v325, %v2704
      %v2713 = vmul.f32 %v327, %v2704
      %v2714 = vmul.f32 %v328, %v2704
      %v2715 = vmul.f32 %v330, %v2704
      %v2716 = vmul.f32 %v331, %v2704
      %v2717 = vmul.f32 %v333, %v2704
      %v2718 = vmul.f32 %v334, %v2704
      %v2719 = vmul.f32 %v336, %v2704
      %v2720 = vmul.f32 %v337, %v2704
      %v2721 = vadd.f32 %v2685, %v2705
      %v2722 = vadd.f32 %v2686, %v2706
      %v2723 = vadd.f32 %v2687, %v2707
      %v2724 = vadd.f32 %v2688, %v2708
      %v2725 = vadd.f32 %v2689, %v2709
      %v2726 = vadd.f32 %v2690, %v2710
      %v2727 = vadd.f32 %v2691, %v2711
      %v2728 = vadd.f32 %v2692, %v2712
      %v2729 = vadd.f32 %v2693, %v2713
      %v2730 = vadd.f32 %v2694, %v2714
      %v2731 = vadd.f32 %v2695, %v2715
      %v2732 = vadd.f32 %v2696, %v2716
      %v2733 = vadd.f32 %v2697, %v2717
      %v2734 = vadd.f32 %v2698, %v2718
      %v2735 = vadd.f32 %v2699, %v2719
      %v2736 = vadd.f32 %v2700, %v2720
      %v2737 = vlaneseq
      %v2738 = vshrl.u32 %v2737, 7
      %v2739 = vsub.s32 1, %v2738
      %v2740 = vrot.slane %v351, %v2739
      %v2741 = vmul.f32 %v315, %v2740
      %v2742 = vmul.f32 %v316, %v2740
      %v2743 = vmul.f32 %v317, %v2740
      %v2744 = vmul.f32 %v318, %v2740
      %v2745 = vmul.f32 %v319, %v2740
      %v2746 = vmul.f32 %v320, %v2740
      %v2747 = vmul.f32 %v321, %v2740
      %v2748 = vmul.f32 %v322, %v2740
      %v2749 = vmul.f32 %v323, %v2740
      %v2750 = vmul.f32 %v324, %v2740
      %v2751 = vmul.f32 %v325, %v2740
      %v2752 = vmul.f32 %v326, %v2740
      %v2753 = vmul.f32 %v327, %v2740
      %v2754 = vmul.f32 %v328, %v2740
      %v2755 = vmul.f32 %v329, %v2740
      %v2756 = vmul.f32 %v330, %v2740
      %v2757 = vmul.f32 %v331, %v2740
      %v2758 = vmul.f32 %v332, %v2740
      %v2759 = vmul.f32 %v333, %v2740
      %v2760 = vmul.f32 %v334, %v2740
      %v2761 = vmul.f32 %v335, %v2740
      %v2762 = vmul.f32 %v336, %v2740
      %v2763 = vmul.f32 %v337, %v2740
      %v2764 = vmul.f32 %v338, %v2740
      %v2789 = vrot.slane %v2741, 1
      %v2790 = vrot.slane %v2742, 1
      %v2791 = vsel %vm443, %v2789, %v2790
      %v2792 = vrot.slane %v2743, 1
      %v2793 = vsel %vm443, %v2790, %v2792
      %v2794 = vrot.slane %v2744, 1
      %v2795 = vrot.slane %v2745, 1
      %v2796 = vsel %vm443, %v2794, %v2795
      %v2797 = vrot.slane %v2746, 1
      %v2798 = vsel %vm443, %v2795, %v2797
      %v2799 = vrot.slane %v2747, 1
      %v2800 = vrot.slane %v2748, 1
      %v2801 = vsel %vm443, %v2799, %v2800
      %v2802 = vrot.slane %v2749, 1
      %v2803 = vsel %vm443, %v2800, %v2802
      %v2804 = vrot.slane %v2750, 1
      %v2805 = vrot.slane %v2751, 1
      %v2806 = vsel %vm443, %v2804, %v2805
      %v2807 = vrot.slane %v2752, 1
      %v2808 = vsel %vm443, %v2805, %v2807
      %v2809 = vrot.slane %v2753, 1
      %v2810 = vrot.slane %v2754, 1
      %v2811 = vsel %vm443, %v2809, %v2810
      %v2812 = vrot.slane %v2755, 1
      %v2813 = vsel %vm443, %v2810, %v2812
      %v2814 = vrot.slane %v2756, 1
      %v2815 = vrot.slane %v2757, 1
      %v2816 = vsel %vm443, %v2814, %v2815
      %v2817 = vrot.slane %v2758, 1
      %v2818 = vsel %vm443, %v2815, %v2817
      %v2819 = vrot.slane %v2759, 1
      %v2820 = vrot.slane %v2760, 1
      %v2821 = vsel %vm443, %v2819, %v2820
      %v2822 = vrot.slane %v2761, 1
      %v2823 = vsel %vm443, %v2820, %v2822
      %v2824 = vrot.slane %v2762, 1
      %v2825 = vrot.slane %v2763, 1
      %v2826 = vsel %vm443, %v2824, %v2825
      %v2827 = vrot.slane %v2764, 1
      %v2828 = vsel %vm443, %v2825, %v2827
      %v2845 = vadd.f32 %v2721, %v2791
      %v2846 = vadd.f32 %v2722, %v2793
      %v2847 = vadd.f32 %v2723, %v2796
      %v2848 = vadd.f32 %v2724, %v2798
      %v2849 = vadd.f32 %v2725, %v2801
      %v2850 = vadd.f32 %v2726, %v2803
      %v2851 = vadd.f32 %v2727, %v2806
      %v2852 = vadd.f32 %v2728, %v2808
      %v2853 = vadd.f32 %v2729, %v2811
      %v2854 = vadd.f32 %v2730, %v2813
      %v2855 = vadd.f32 %v2731, %v2816
      %v2856 = vadd.f32 %v2732, %v2818
      %v2857 = vadd.f32 %v2733, %v2821
      %v2858 = vadd.f32 %v2734, %v2823
      %v2859 = vadd.f32 %v2735, %v2826
      %v2860 = vadd.f32 %v2736, %v2828
      %v2861 = vlaneseq
      %v2862 = vshrl.u32 %v2861, 7
      %v2863 = vsub.s32 2, %v2862
      %v2864 = vrot.slane %v351, %v2863
      %v2865 = vmul.f32 %v315, %v2864
      %v2866 = vmul.f32 %v316, %v2864
      %v2867 = vmul.f32 %v317, %v2864
      %v2868 = vmul.f32 %v318, %v2864
      %v2869 = vmul.f32 %v319, %v2864
      %v2870 = vmul.f32 %v320, %v2864
      %v2871 = vmul.f32 %v321, %v2864
      %v2872 = vmul.f32 %v322, %v2864
      %v2873 = vmul.f32 %v323, %v2864
      %v2874 = vmul.f32 %v324, %v2864
      %v2875 = vmul.f32 %v325, %v2864
      %v2876 = vmul.f32 %v326, %v2864
      %v2877 = vmul.f32 %v327, %v2864
      %v2878 = vmul.f32 %v328, %v2864
      %v2879 = vmul.f32 %v329, %v2864
      %v2880 = vmul.f32 %v330, %v2864
      %v2881 = vmul.f32 %v331, %v2864
      %v2882 = vmul.f32 %v332, %v2864
      %v2883 = vmul.f32 %v333, %v2864
      %v2884 = vmul.f32 %v334, %v2864
      %v2885 = vmul.f32 %v335, %v2864
      %v2886 = vmul.f32 %v336, %v2864
      %v2887 = vmul.f32 %v337, %v2864
      %v2888 = vmul.f32 %v338, %v2864
      %v2913 = vrot.slane %v2865, 2
      %v2914 = vrot.slane %v2866, 2
      %v2915 = vsel %vm568, %v2913, %v2914
      %v2916 = vrot.slane %v2867, 2
      %v2917 = vsel %vm568, %v2914, %v2916
      %v2918 = vrot.slane %v2868, 2
      %v2919 = vrot.slane %v2869, 2
      %v2920 = vsel %vm568, %v2918, %v2919
      %v2921 = vrot.slane %v2870, 2
      %v2922 = vsel %vm568, %v2919, %v2921
      %v2923 = vrot.slane %v2871, 2
      %v2924 = vrot.slane %v2872, 2
      %v2925 = vsel %vm568, %v2923, %v2924
      %v2926 = vrot.slane %v2873, 2
      %v2927 = vsel %vm568, %v2924, %v2926
      %v2928 = vrot.slane %v2874, 2
      %v2929 = vrot.slane %v2875, 2
      %v2930 = vsel %vm568, %v2928, %v2929
      %v2931 = vrot.slane %v2876, 2
      %v2932 = vsel %vm568, %v2929, %v2931
      %v2933 = vrot.slane %v2877, 2
      %v2934 = vrot.slane %v2878, 2
      %v2935 = vsel %vm568, %v2933, %v2934
      %v2936 = vrot.slane %v2879, 2
      %v2937 = vsel %vm568, %v2934, %v2936
      %v2938 = vrot.slane %v2880, 2
      %v2939 = vrot.slane %v2881, 2
      %v2940 = vsel %vm568, %v2938, %v2939
      %v2941 = vrot.slane %v2882, 2
      %v2942 = vsel %vm568, %v2939, %v2941
      %v2943 = vrot.slane %v2883, 2
      %v2944 = vrot.slane %v2884, 2
      %v2945 = vsel %vm568, %v2943, %v2944
      %v2946 = vrot.slane %v2885, 2
      %v2947 = vsel %vm568, %v2944, %v2946
      %v2948 = vrot.slane %v2886, 2
      %v2949 = vrot.slane %v2887, 2
      %v2950 = vsel %vm568, %v2948, %v2949
      %v2951 = vrot.slane %v2888, 2
      %v2952 = vsel %vm568, %v2949, %v2951
      %v2969 = vadd.f32 %v2845, %v2915
      %v2970 = vadd.f32 %v2846, %v2917
      %v2971 = vadd.f32 %v2847, %v2920
      %v2972 = vadd.f32 %v2848, %v2922
      %v2973 = vadd.f32 %v2849, %v2925
      %v2974 = vadd.f32 %v2850, %v2927
      %v2975 = vadd.f32 %v2851, %v2930
      %v2976 = vadd.f32 %v2852, %v2932
      %v2977 = vadd.f32 %v2853, %v2935
      %v2978 = vadd.f32 %v2854, %v2937
      %v2979 = vadd.f32 %v2855, %v2940
      %v2980 = vadd.f32 %v2856, %v2942
      %v2981 = vadd.f32 %v2857, %v2945
      %v2982 = vadd.f32 %v2858, %v2947
      %v2983 = vadd.f32 %v2859, %v2950
      %v2984 = vadd.f32 %v2860, %v2952
      %v2985 = vlaneseq
      %v2986 = vshrl.u32 %v2985, 7
      %v2987 = vsub.s32 3, %v2986
      %v2988 = vrot.slane %v351, %v2987
      %v2989 = vmul.f32 %v315, %v2988
      %v2990 = vmul.f32 %v316, %v2988
      %v2991 = vmul.f32 %v317, %v2988
      %v2992 = vmul.f32 %v318, %v2988
      %v2993 = vmul.f32 %v319, %v2988
      %v2994 = vmul.f32 %v320, %v2988
      %v2995 = vmul.f32 %v321, %v2988
      %v2996 = vmul.f32 %v322, %v2988
      %v2997 = vmul.f32 %v323, %v2988
      %v2998 = vmul.f32 %v324, %v2988
      %v2999 = vmul.f32 %v325, %v2988
      %v3000 = vmul.f32 %v326, %v2988
      %v3001 = vmul.f32 %v327, %v2988
      %v3002 = vmul.f32 %v328, %v2988
      %v3003 = vmul.f32 %v329, %v2988
      %v3004 = vmul.f32 %v330, %v2988
      %v3005 = vmul.f32 %v331, %v2988
      %v3006 = vmul.f32 %v332, %v2988
      %v3007 = vmul.f32 %v333, %v2988
      %v3008 = vmul.f32 %v334, %v2988
      %v3009 = vmul.f32 %v335, %v2988
      %v3010 = vmul.f32 %v336, %v2988
      %v3011 = vmul.f32 %v337, %v2988
      %v3012 = vmul.f32 %v338, %v2988
      %v3037 = vrot.slane %v2989, 3
      %v3038 = vrot.slane %v2990, 3
      %v3039 = vsel %vm693, %v3037, %v3038
      %v3040 = vrot.slane %v2991, 3
      %v3041 = vsel %vm693, %v3038, %v3040
      %v3042 = vrot.slane %v2992, 3
      %v3043 = vrot.slane %v2993, 3
      %v3044 = vsel %vm693, %v3042, %v3043
      %v3045 = vrot.slane %v2994, 3
      %v3046 = vsel %vm693, %v3043, %v3045
      %v3047 = vrot.slane %v2995, 3
      %v3048 = vrot.slane %v2996, 3
      %v3049 = vsel %vm693, %v3047, %v3048
      %v3050 = vrot.slane %v2997, 3
      %v3051 = vsel %vm693, %v3048, %v3050
      %v3052 = vrot.slane %v2998, 3
      %v3053 = vrot.slane %v2999, 3
      %v3054 = vsel %vm693, %v3052, %v3053
      %v3055 = vrot.slane %v3000, 3
      %v3056 = vsel %vm693, %v3053, %v3055
      %v3057 = vrot.slane %v3001, 3
      %v3058 = vrot.slane %v3002, 3
      %v3059 = vsel %vm693, %v3057, %v3058
      %v3060 = vrot.slane %v3003, 3
      %v3061 = vsel %vm693, %v3058, %v3060
      %v3062 = vrot.slane %v3004, 3
      %v3063 = vrot.slane %v3005, 3
      %v3064 = vsel %vm693, %v3062, %v3063
      %v3065 = vrot.slane %v3006, 3
      %v3066 = vsel %vm693, %v3063, %v3065
      %v3067 = vrot.slane %v3007, 3
      %v3068 = vrot.slane %v3008, 3
      %v3069 = vsel %vm693, %v3067, %v3068
      %v3070 = vrot.slane %v3009, 3
      %v3071 = vsel %vm693, %v3068, %v3070
      %v3072 = vrot.slane %v3010, 3
      %v3073 = vrot.slane %v3011, 3
      %v3074 = vsel %vm693, %v3072, %v3073
      %v3075 = vrot.slane %v3012, 3
      %v3076 = vsel %vm693, %v3073, %v3075
      %v3093 = vadd.f32 %v2969, %v3039
      %v3094 = vadd.f32 %v2970, %v3041
      %v3095 = vadd.f32 %v2971, %v3044
      %v3096 = vadd.f32 %v2972, %v3046
      %v3097 = vadd.f32 %v2973, %v3049
      %v3098 = vadd.f32 %v2974, %v3051
      %v3099 = vadd.f32 %v2975, %v3054
      %v3100 = vadd.f32 %v2976, %v3056
      %v3101 = vadd.f32 %v2977, %v3059
      %v3102 = vadd.f32 %v2978, %v3061
      %v3103 = vadd.f32 %v2979, %v3064
      %v3104 = vadd.f32 %v2980, %v3066
      %v3105 = vadd.f32 %v2981, %v3069
      %v3106 = vadd.f32 %v2982, %v3071
      %v3107 = vadd.f32 %v2983, %v3074
      %v3108 = vadd.f32 %v2984, %v3076
      %v3109 = vlaneseq
      %v3110 = vshrl.u32 %v3109, 7
      %v3111 = vsub.s32 4, %v3110
      %v3112 = vrot.slane %v351, %v3111
      %v3113 = vmul.f32 %v315, %v3112
      %v3114 = vmul.f32 %v316, %v3112
      %v3115 = vmul.f32 %v317, %v3112
      %v3116 = vmul.f32 %v318, %v3112
      %v3117 = vmul.f32 %v319, %v3112
      %v3118 = vmul.f32 %v320, %v3112
      %v3119 = vmul.f32 %v321, %v3112
      %v3120 = vmul.f32 %v322, %v3112
      %v3121 = vmul.f32 %v323, %v3112
      %v3122 = vmul.f32 %v324, %v3112
      %v3123 = vmul.f32 %v325, %v3112
      %v3124 = vmul.f32 %v326, %v3112
      %v3125 = vmul.f32 %v327, %v3112
      %v3126 = vmul.f32 %v328, %v3112
      %v3127 = vmul.f32 %v329, %v3112
      %v3128 = vmul.f32 %v330, %v3112
      %v3129 = vmul.f32 %v331, %v3112
      %v3130 = vmul.f32 %v332, %v3112
      %v3131 = vmul.f32 %v333, %v3112
      %v3132 = vmul.f32 %v334, %v3112
      %v3133 = vmul.f32 %v335, %v3112
      %v3134 = vmul.f32 %v336, %v3112
      %v3135 = vmul.f32 %v337, %v3112
      %v3136 = vmul.f32 %v338, %v3112
      %v3161 = vrot.slane %v3113, 4
      %v3162 = vrot.slane %v3114, 4
      %v3163 = vsel %vm818, %v3161, %v3162
      %v3164 = vrot.slane %v3115, 4
      %v3165 = vsel %vm818, %v3162, %v3164
      %v3166 = vrot.slane %v3116, 4
      %v3167 = vrot.slane %v3117, 4
      %v3168 = vsel %vm818, %v3166, %v3167
      %v3169 = vrot.slane %v3118, 4
      %v3170 = vsel %vm818, %v3167, %v3169
      %v3171 = vrot.slane %v3119, 4
      %v3172 = vrot.slane %v3120, 4
      %v3173 = vsel %vm818, %v3171, %v3172
      %v3174 = vrot.slane %v3121, 4
      %v3175 = vsel %vm818, %v3172, %v3174
      %v3176 = vrot.slane %v3122, 4
      %v3177 = vrot.slane %v3123, 4
      %v3178 = vsel %vm818, %v3176, %v3177
      %v3179 = vrot.slane %v3124, 4
      %v3180 = vsel %vm818, %v3177, %v3179
      %v3181 = vrot.slane %v3125, 4
      %v3182 = vrot.slane %v3126, 4
      %v3183 = vsel %vm818, %v3181, %v3182
      %v3184 = vrot.slane %v3127, 4
      %v3185 = vsel %vm818, %v3182, %v3184
      %v3186 = vrot.slane %v3128, 4
      %v3187 = vrot.slane %v3129, 4
      %v3188 = vsel %vm818, %v3186, %v3187
      %v3189 = vrot.slane %v3130, 4
      %v3190 = vsel %vm818, %v3187, %v3189
      %v3191 = vrot.slane %v3131, 4
      %v3192 = vrot.slane %v3132, 4
      %v3193 = vsel %vm818, %v3191, %v3192
      %v3194 = vrot.slane %v3133, 4
      %v3195 = vsel %vm818, %v3192, %v3194
      %v3196 = vrot.slane %v3134, 4
      %v3197 = vrot.slane %v3135, 4
      %v3198 = vsel %vm818, %v3196, %v3197
      %v3199 = vrot.slane %v3136, 4
      %v3200 = vsel %vm818, %v3197, %v3199
      %v3217 = vadd.f32 %v3093, %v3163
      %v3218 = vadd.f32 %v3094, %v3165
      %v3219 = vadd.f32 %v3095, %v3168
      %v3220 = vadd.f32 %v3096, %v3170
      %v3221 = vadd.f32 %v3097, %v3173
      %v3222 = vadd.f32 %v3098, %v3175
      %v3223 = vadd.f32 %v3099, %v3178
      %v3224 = vadd.f32 %v3100, %v3180
      %v3225 = vadd.f32 %v3101, %v3183
      %v3226 = vadd.f32 %v3102, %v3185
      %v3227 = vadd.f32 %v3103, %v3188
      %v3228 = vadd.f32 %v3104, %v3190
      %v3229 = vadd.f32 %v3105, %v3193
      %v3230 = vadd.f32 %v3106, %v3195
      %v3231 = vadd.f32 %v3107, %v3198
      %v3232 = vadd.f32 %v3108, %v3200
      %v3233 = vlaneseq
      %v3234 = vshrl.u32 %v3233, 7
      %v3235 = vsub.s32 5, %v3234
      %v3236 = vrot.slane %v351, %v3235
      %v3237 = vmul.f32 %v315, %v3236
      %v3238 = vmul.f32 %v316, %v3236
      %v3239 = vmul.f32 %v317, %v3236
      %v3240 = vmul.f32 %v318, %v3236
      %v3241 = vmul.f32 %v319, %v3236
      %v3242 = vmul.f32 %v320, %v3236
      %v3243 = vmul.f32 %v321, %v3236
      %v3244 = vmul.f32 %v322, %v3236
      %v3245 = vmul.f32 %v323, %v3236
      %v3246 = vmul.f32 %v324, %v3236
      %v3247 = vmul.f32 %v325, %v3236
      %v3248 = vmul.f32 %v326, %v3236
      %v3249 = vmul.f32 %v327, %v3236
      %v3250 = vmul.f32 %v328, %v3236
      %v3251 = vmul.f32 %v329, %v3236
      %v3252 = vmul.f32 %v330, %v3236
      %v3253 = vmul.f32 %v331, %v3236
      %v3254 = vmul.f32 %v332, %v3236
      %v3255 = vmul.f32 %v333, %v3236
      %v3256 = vmul.f32 %v334, %v3236
      %v3257 = vmul.f32 %v335, %v3236
      %v3258 = vmul.f32 %v336, %v3236
      %v3259 = vmul.f32 %v337, %v3236
      %v3260 = vmul.f32 %v338, %v3236
      %v3285 = vrot.slane %v3237, 5
      %v3286 = vrot.slane %v3238, 5
      %v3287 = vsel %vm943, %v3285, %v3286
      %v3288 = vrot.slane %v3239, 5
      %v3289 = vsel %vm943, %v3286, %v3288
      %v3290 = vrot.slane %v3240, 5
      %v3291 = vrot.slane %v3241, 5
      %v3292 = vsel %vm943, %v3290, %v3291
      %v3293 = vrot.slane %v3242, 5
      %v3294 = vsel %vm943, %v3291, %v3293
      %v3295 = vrot.slane %v3243, 5
      %v3296 = vrot.slane %v3244, 5
      %v3297 = vsel %vm943, %v3295, %v3296
      %v3298 = vrot.slane %v3245, 5
      %v3299 = vsel %vm943, %v3296, %v3298
      %v3300 = vrot.slane %v3246, 5
      %v3301 = vrot.slane %v3247, 5
      %v3302 = vsel %vm943, %v3300, %v3301
      %v3303 = vrot.slane %v3248, 5
      %v3304 = vsel %vm943, %v3301, %v3303
      %v3305 = vrot.slane %v3249, 5
      %v3306 = vrot.slane %v3250, 5
      %v3307 = vsel %vm943, %v3305, %v3306
      %v3308 = vrot.slane %v3251, 5
      %v3309 = vsel %vm943, %v3306, %v3308
      %v3310 = vrot.slane %v3252, 5
      %v3311 = vrot.slane %v3253, 5
      %v3312 = vsel %vm943, %v3310, %v3311
      %v3313 = vrot.slane %v3254, 5
      %v3314 = vsel %vm943, %v3311, %v3313
      %v3315 = vrot.slane %v3255, 5
      %v3316 = vrot.slane %v3256, 5
      %v3317 = vsel %vm943, %v3315, %v3316
      %v3318 = vrot.slane %v3257, 5
      %v3319 = vsel %vm943, %v3316, %v3318
      %v3320 = vrot.slane %v3258, 5
      %v3321 = vrot.slane %v3259, 5
      %v3322 = vsel %vm943, %v3320, %v3321
      %v3323 = vrot.slane %v3260, 5
      %v3324 = vsel %vm943, %v3321, %v3323
      %v3341 = vadd.f32 %v3217, %v3287
      %v3342 = vadd.f32 %v3218, %v3289
      %v3343 = vadd.f32 %v3219, %v3292
      %v3344 = vadd.f32 %v3220, %v3294
      %v3345 = vadd.f32 %v3221, %v3297
      %v3346 = vadd.f32 %v3222, %v3299
      %v3347 = vadd.f32 %v3223, %v3302
      %v3348 = vadd.f32 %v3224, %v3304
      %v3349 = vadd.f32 %v3225, %v3307
      %v3350 = vadd.f32 %v3226, %v3309
      %v3351 = vadd.f32 %v3227, %v3312
      %v3352 = vadd.f32 %v3228, %v3314
      %v3353 = vadd.f32 %v3229, %v3317
      %v3354 = vadd.f32 %v3230, %v3319
      %v3355 = vadd.f32 %v3231, %v3322
      %v3356 = vadd.f32 %v3232, %v3324
      %v3357 = vlaneseq
      %v3358 = vshrl.u32 %v3357, 7
      %v3359 = vsub.s32 6, %v3358
      %v3360 = vrot.slane %v351, %v3359
      %v3361 = vmul.f32 %v315, %v3360
      %v3362 = vmul.f32 %v316, %v3360
      %v3363 = vmul.f32 %v317, %v3360
      %v3364 = vmul.f32 %v318, %v3360
      %v3365 = vmul.f32 %v319, %v3360
      %v3366 = vmul.f32 %v320, %v3360
      %v3367 = vmul.f32 %v321, %v3360
      %v3368 = vmul.f32 %v322, %v3360
      %v3369 = vmul.f32 %v323, %v3360
      %v3370 = vmul.f32 %v324, %v3360
      %v3371 = vmul.f32 %v325, %v3360
      %v3372 = vmul.f32 %v326, %v3360
      %v3373 = vmul.f32 %v327, %v3360
      %v3374 = vmul.f32 %v328, %v3360
      %v3375 = vmul.f32 %v329, %v3360
      %v3376 = vmul.f32 %v330, %v3360
      %v3377 = vmul.f32 %v331, %v3360
      %v3378 = vmul.f32 %v332, %v3360
      %v3379 = vmul.f32 %v333, %v3360
      %v3380 = vmul.f32 %v334, %v3360
      %v3381 = vmul.f32 %v335, %v3360
      %v3382 = vmul.f32 %v336, %v3360
      %v3383 = vmul.f32 %v337, %v3360
      %v3384 = vmul.f32 %v338, %v3360
      %v3409 = vrot.slane %v3361, 6
      %v3410 = vrot.slane %v3362, 6
      %v3411 = vsel %vm1068, %v3409, %v3410
      %v3412 = vrot.slane %v3363, 6
      %v3413 = vsel %vm1068, %v3410, %v3412
      %v3414 = vrot.slane %v3364, 6
      %v3415 = vrot.slane %v3365, 6
      %v3416 = vsel %vm1068, %v3414, %v3415
      %v3417 = vrot.slane %v3366, 6
      %v3418 = vsel %vm1068, %v3415, %v3417
      %v3419 = vrot.slane %v3367, 6
      %v3420 = vrot.slane %v3368, 6
      %v3421 = vsel %vm1068, %v3419, %v3420
      %v3422 = vrot.slane %v3369, 6
      %v3423 = vsel %vm1068, %v3420, %v3422
      %v3424 = vrot.slane %v3370, 6
      %v3425 = vrot.slane %v3371, 6
      %v3426 = vsel %vm1068, %v3424, %v3425
      %v3427 = vrot.slane %v3372, 6
      %v3428 = vsel %vm1068, %v3425, %v3427
      %v3429 = vrot.slane %v3373, 6
      %v3430 = vrot.slane %v3374, 6
      %v3431 = vsel %vm1068, %v3429, %v3430
      %v3432 = vrot.slane %v3375, 6
      %v3433 = vsel %vm1068, %v3430, %v3432
      %v3434 = vrot.slane %v3376, 6
      %v3435 = vrot.slane %v3377, 6
      %v3436 = vsel %vm1068, %v3434, %v3435
      %v3437 = vrot.slane %v3378, 6
      %v3438 = vsel %vm1068, %v3435, %v3437
      %v3439 = vrot.slane %v3379, 6
      %v3440 = vrot.slane %v3380, 6
      %v3441 = vsel %vm1068, %v3439, %v3440
      %v3442 = vrot.slane %v3381, 6
      %v3443 = vsel %vm1068, %v3440, %v3442
      %v3444 = vrot.slane %v3382, 6
      %v3445 = vrot.slane %v3383, 6
      %v3446 = vsel %vm1068, %v3444, %v3445
      %v3447 = vrot.slane %v3384, 6
      %v3448 = vsel %vm1068, %v3445, %v3447
      %v3465 = vadd.f32 %v3341, %v3411
      %v3466 = vadd.f32 %v3342, %v3413
      %v3467 = vadd.f32 %v3343, %v3416
      %v3468 = vadd.f32 %v3344, %v3418
      %v3469 = vadd.f32 %v3345, %v3421
      %v3470 = vadd.f32 %v3346, %v3423
      %v3471 = vadd.f32 %v3347, %v3426
      %v3472 = vadd.f32 %v3348, %v3428
      %v3473 = vadd.f32 %v3349, %v3431
      %v3474 = vadd.f32 %v3350, %v3433
      %v3475 = vadd.f32 %v3351, %v3436
      %v3476 = vadd.f32 %v3352, %v3438
      %v3477 = vadd.f32 %v3353, %v3441
      %v3478 = vadd.f32 %v3354, %v3443
      %v3479 = vadd.f32 %v3355, %v3446
      %v3480 = vadd.f32 %v3356, %v3448
      %v3481 = vlaneseq
      %v3482 = vshrl.u32 %v3481, 7
      %v3483 = vsub.s32 0, %v3482
      %v3484 = vrot.slane %v352, %v3483
      %v3485 = vmul.f32 %v318, %v3484
      %v3486 = vmul.f32 %v319, %v3484
      %v3487 = vmul.f32 %v321, %v3484
      %v3488 = vmul.f32 %v322, %v3484
      %v3489 = vmul.f32 %v324, %v3484
      %v3490 = vmul.f32 %v325, %v3484
      %v3491 = vmul.f32 %v327, %v3484
      %v3492 = vmul.f32 %v328, %v3484
      %v3493 = vmul.f32 %v330, %v3484
      %v3494 = vmul.f32 %v331, %v3484
      %v3495 = vmul.f32 %v333, %v3484
      %v3496 = vmul.f32 %v334, %v3484
      %v3497 = vmul.f32 %v336, %v3484
      %v3498 = vmul.f32 %v337, %v3484
      %v3499 = vmul.f32 %v339, %v3484
      %v3500 = vmul.f32 %v340, %v3484
      %v3501 = vadd.f32 %v3465, %v3485
      %v3502 = vadd.f32 %v3466, %v3486
      %v3503 = vadd.f32 %v3467, %v3487
      %v3504 = vadd.f32 %v3468, %v3488
      %v3505 = vadd.f32 %v3469, %v3489
      %v3506 = vadd.f32 %v3470, %v3490
      %v3507 = vadd.f32 %v3471, %v3491
      %v3508 = vadd.f32 %v3472, %v3492
      %v3509 = vadd.f32 %v3473, %v3493
      %v3510 = vadd.f32 %v3474, %v3494
      %v3511 = vadd.f32 %v3475, %v3495
      %v3512 = vadd.f32 %v3476, %v3496
      %v3513 = vadd.f32 %v3477, %v3497
      %v3514 = vadd.f32 %v3478, %v3498
      %v3515 = vadd.f32 %v3479, %v3499
      %v3516 = vadd.f32 %v3480, %v3500
      %v3517 = vlaneseq
      %v3518 = vshrl.u32 %v3517, 7
      %v3519 = vsub.s32 1, %v3518
      %v3520 = vrot.slane %v352, %v3519
      %v3521 = vmul.f32 %v318, %v3520
      %v3522 = vmul.f32 %v319, %v3520
      %v3523 = vmul.f32 %v320, %v3520
      %v3524 = vmul.f32 %v321, %v3520
      %v3525 = vmul.f32 %v322, %v3520
      %v3526 = vmul.f32 %v323, %v3520
      %v3527 = vmul.f32 %v324, %v3520
      %v3528 = vmul.f32 %v325, %v3520
      %v3529 = vmul.f32 %v326, %v3520
      %v3530 = vmul.f32 %v327, %v3520
      %v3531 = vmul.f32 %v328, %v3520
      %v3532 = vmul.f32 %v329, %v3520
      %v3533 = vmul.f32 %v330, %v3520
      %v3534 = vmul.f32 %v331, %v3520
      %v3535 = vmul.f32 %v332, %v3520
      %v3536 = vmul.f32 %v333, %v3520
      %v3537 = vmul.f32 %v334, %v3520
      %v3538 = vmul.f32 %v335, %v3520
      %v3539 = vmul.f32 %v336, %v3520
      %v3540 = vmul.f32 %v337, %v3520
      %v3541 = vmul.f32 %v338, %v3520
      %v3542 = vmul.f32 %v339, %v3520
      %v3543 = vmul.f32 %v340, %v3520
      %v3544 = vmul.f32 %v341, %v3520
      %v3569 = vrot.slane %v3521, 1
      %v3570 = vrot.slane %v3522, 1
      %v3571 = vsel %vm443, %v3569, %v3570
      %v3572 = vrot.slane %v3523, 1
      %v3573 = vsel %vm443, %v3570, %v3572
      %v3574 = vrot.slane %v3524, 1
      %v3575 = vrot.slane %v3525, 1
      %v3576 = vsel %vm443, %v3574, %v3575
      %v3577 = vrot.slane %v3526, 1
      %v3578 = vsel %vm443, %v3575, %v3577
      %v3579 = vrot.slane %v3527, 1
      %v3580 = vrot.slane %v3528, 1
      %v3581 = vsel %vm443, %v3579, %v3580
      %v3582 = vrot.slane %v3529, 1
      %v3583 = vsel %vm443, %v3580, %v3582
      %v3584 = vrot.slane %v3530, 1
      %v3585 = vrot.slane %v3531, 1
      %v3586 = vsel %vm443, %v3584, %v3585
      %v3587 = vrot.slane %v3532, 1
      %v3588 = vsel %vm443, %v3585, %v3587
      %v3589 = vrot.slane %v3533, 1
      %v3590 = vrot.slane %v3534, 1
      %v3591 = vsel %vm443, %v3589, %v3590
      %v3592 = vrot.slane %v3535, 1
      %v3593 = vsel %vm443, %v3590, %v3592
      %v3594 = vrot.slane %v3536, 1
      %v3595 = vrot.slane %v3537, 1
      %v3596 = vsel %vm443, %v3594, %v3595
      %v3597 = vrot.slane %v3538, 1
      %v3598 = vsel %vm443, %v3595, %v3597
      %v3599 = vrot.slane %v3539, 1
      %v3600 = vrot.slane %v3540, 1
      %v3601 = vsel %vm443, %v3599, %v3600
      %v3602 = vrot.slane %v3541, 1
      %v3603 = vsel %vm443, %v3600, %v3602
      %v3604 = vrot.slane %v3542, 1
      %v3605 = vrot.slane %v3543, 1
      %v3606 = vsel %vm443, %v3604, %v3605
      %v3607 = vrot.slane %v3544, 1
      %v3608 = vsel %vm443, %v3605, %v3607
      %v3625 = vadd.f32 %v3501, %v3571
      %v3626 = vadd.f32 %v3502, %v3573
      %v3627 = vadd.f32 %v3503, %v3576
      %v3628 = vadd.f32 %v3504, %v3578
      %v3629 = vadd.f32 %v3505, %v3581
      %v3630 = vadd.f32 %v3506, %v3583
      %v3631 = vadd.f32 %v3507, %v3586
      %v3632 = vadd.f32 %v3508, %v3588
      %v3633 = vadd.f32 %v3509, %v3591
      %v3634 = vadd.f32 %v3510, %v3593
      %v3635 = vadd.f32 %v3511, %v3596
      %v3636 = vadd.f32 %v3512, %v3598
      %v3637 = vadd.f32 %v3513, %v3601
      %v3638 = vadd.f32 %v3514, %v3603
      %v3639 = vadd.f32 %v3515, %v3606
      %v3640 = vadd.f32 %v3516, %v3608
      %v3641 = vlaneseq
      %v3642 = vshrl.u32 %v3641, 7
      %v3643 = vsub.s32 2, %v3642
      %v3644 = vrot.slane %v352, %v3643
      %v3645 = vmul.f32 %v318, %v3644
      %v3646 = vmul.f32 %v319, %v3644
      %v3647 = vmul.f32 %v320, %v3644
      %v3648 = vmul.f32 %v321, %v3644
      %v3649 = vmul.f32 %v322, %v3644
      %v3650 = vmul.f32 %v323, %v3644
      %v3651 = vmul.f32 %v324, %v3644
      %v3652 = vmul.f32 %v325, %v3644
      %v3653 = vmul.f32 %v326, %v3644
      %v3654 = vmul.f32 %v327, %v3644
      %v3655 = vmul.f32 %v328, %v3644
      %v3656 = vmul.f32 %v329, %v3644
      %v3657 = vmul.f32 %v330, %v3644
      %v3658 = vmul.f32 %v331, %v3644
      %v3659 = vmul.f32 %v332, %v3644
      %v3660 = vmul.f32 %v333, %v3644
      %v3661 = vmul.f32 %v334, %v3644
      %v3662 = vmul.f32 %v335, %v3644
      %v3663 = vmul.f32 %v336, %v3644
      %v3664 = vmul.f32 %v337, %v3644
      %v3665 = vmul.f32 %v338, %v3644
      %v3666 = vmul.f32 %v339, %v3644
      %v3667 = vmul.f32 %v340, %v3644
      %v3668 = vmul.f32 %v341, %v3644
      %v3693 = vrot.slane %v3645, 2
      %v3694 = vrot.slane %v3646, 2
      %v3695 = vsel %vm568, %v3693, %v3694
      %v3696 = vrot.slane %v3647, 2
      %v3697 = vsel %vm568, %v3694, %v3696
      %v3698 = vrot.slane %v3648, 2
      %v3699 = vrot.slane %v3649, 2
      %v3700 = vsel %vm568, %v3698, %v3699
      %v3701 = vrot.slane %v3650, 2
      %v3702 = vsel %vm568, %v3699, %v3701
      %v3703 = vrot.slane %v3651, 2
      %v3704 = vrot.slane %v3652, 2
      %v3705 = vsel %vm568, %v3703, %v3704
      %v3706 = vrot.slane %v3653, 2
      %v3707 = vsel %vm568, %v3704, %v3706
      %v3708 = vrot.slane %v3654, 2
      %v3709 = vrot.slane %v3655, 2
      %v3710 = vsel %vm568, %v3708, %v3709
      %v3711 = vrot.slane %v3656, 2
      %v3712 = vsel %vm568, %v3709, %v3711
      %v3713 = vrot.slane %v3657, 2
      %v3714 = vrot.slane %v3658, 2
      %v3715 = vsel %vm568, %v3713, %v3714
      %v3716 = vrot.slane %v3659, 2
      %v3717 = vsel %vm568, %v3714, %v3716
      %v3718 = vrot.slane %v3660, 2
      %v3719 = vrot.slane %v3661, 2
      %v3720 = vsel %vm568, %v3718, %v3719
      %v3721 = vrot.slane %v3662, 2
      %v3722 = vsel %vm568, %v3719, %v3721
      %v3723 = vrot.slane %v3663, 2
      %v3724 = vrot.slane %v3664, 2
      %v3725 = vsel %vm568, %v3723, %v3724
      %v3726 = vrot.slane %v3665, 2
      %v3727 = vsel %vm568, %v3724, %v3726
      %v3728 = vrot.slane %v3666, 2
      %v3729 = vrot.slane %v3667, 2
      %v3730 = vsel %vm568, %v3728, %v3729
      %v3731 = vrot.slane %v3668, 2
      %v3732 = vsel %vm568, %v3729, %v3731
      %v3749 = vadd.f32 %v3625, %v3695
      %v3750 = vadd.f32 %v3626, %v3697
      %v3751 = vadd.f32 %v3627, %v3700
      %v3752 = vadd.f32 %v3628, %v3702
      %v3753 = vadd.f32 %v3629, %v3705
      %v3754 = vadd.f32 %v3630, %v3707
      %v3755 = vadd.f32 %v3631, %v3710
      %v3756 = vadd.f32 %v3632, %v3712
      %v3757 = vadd.f32 %v3633, %v3715
      %v3758 = vadd.f32 %v3634, %v3717
      %v3759 = vadd.f32 %v3635, %v3720
      %v3760 = vadd.f32 %v3636, %v3722
      %v3761 = vadd.f32 %v3637, %v3725
      %v3762 = vadd.f32 %v3638, %v3727
      %v3763 = vadd.f32 %v3639, %v3730
      %v3764 = vadd.f32 %v3640, %v3732
      %v3765 = vlaneseq
      %v3766 = vshrl.u32 %v3765, 7
      %v3767 = vsub.s32 3, %v3766
      %v3768 = vrot.slane %v352, %v3767
      %v3769 = vmul.f32 %v318, %v3768
      %v3770 = vmul.f32 %v319, %v3768
      %v3771 = vmul.f32 %v320, %v3768
      %v3772 = vmul.f32 %v321, %v3768
      %v3773 = vmul.f32 %v322, %v3768
      %v3774 = vmul.f32 %v323, %v3768
      %v3775 = vmul.f32 %v324, %v3768
      %v3776 = vmul.f32 %v325, %v3768
      %v3777 = vmul.f32 %v326, %v3768
      %v3778 = vmul.f32 %v327, %v3768
      %v3779 = vmul.f32 %v328, %v3768
      %v3780 = vmul.f32 %v329, %v3768
      %v3781 = vmul.f32 %v330, %v3768
      %v3782 = vmul.f32 %v331, %v3768
      %v3783 = vmul.f32 %v332, %v3768
      %v3784 = vmul.f32 %v333, %v3768
      %v3785 = vmul.f32 %v334, %v3768
      %v3786 = vmul.f32 %v335, %v3768
      %v3787 = vmul.f32 %v336, %v3768
      %v3788 = vmul.f32 %v337, %v3768
      %v3789 = vmul.f32 %v338, %v3768
      %v3790 = vmul.f32 %v339, %v3768
      %v3791 = vmul.f32 %v340, %v3768
      %v3792 = vmul.f32 %v341, %v3768
      %v3817 = vrot.slane %v3769, 3
      %v3818 = vrot.slane %v3770, 3
      %v3819 = vsel %vm693, %v3817, %v3818
      %v3820 = vrot.slane %v3771, 3
      %v3821 = vsel %vm693, %v3818, %v3820
      %v3822 = vrot.slane %v3772, 3
      %v3823 = vrot.slane %v3773, 3
      %v3824 = vsel %vm693, %v3822, %v3823
      %v3825 = vrot.slane %v3774, 3
      %v3826 = vsel %vm693, %v3823, %v3825
      %v3827 = vrot.slane %v3775, 3
      %v3828 = vrot.slane %v3776, 3
      %v3829 = vsel %vm693, %v3827, %v3828
      %v3830 = vrot.slane %v3777, 3
      %v3831 = vsel %vm693, %v3828, %v3830
      %v3832 = vrot.slane %v3778, 3
      %v3833 = vrot.slane %v3779, 3
      %v3834 = vsel %vm693, %v3832, %v3833
      %v3835 = vrot.slane %v3780, 3
      %v3836 = vsel %vm693, %v3833, %v3835
      %v3837 = vrot.slane %v3781, 3
      %v3838 = vrot.slane %v3782, 3
      %v3839 = vsel %vm693, %v3837, %v3838
      %v3840 = vrot.slane %v3783, 3
      %v3841 = vsel %vm693, %v3838, %v3840
      %v3842 = vrot.slane %v3784, 3
      %v3843 = vrot.slane %v3785, 3
      %v3844 = vsel %vm693, %v3842, %v3843
      %v3845 = vrot.slane %v3786, 3
      %v3846 = vsel %vm693, %v3843, %v3845
      %v3847 = vrot.slane %v3787, 3
      %v3848 = vrot.slane %v3788, 3
      %v3849 = vsel %vm693, %v3847, %v3848
      %v3850 = vrot.slane %v3789, 3
      %v3851 = vsel %vm693, %v3848, %v3850
      %v3852 = vrot.slane %v3790, 3
      %v3853 = vrot.slane %v3791, 3
      %v3854 = vsel %vm693, %v3852, %v3853
      %v3855 = vrot.slane %v3792, 3
      %v3856 = vsel %vm693, %v3853, %v3855
      %v3873 = vadd.f32 %v3749, %v3819
      %v3874 = vadd.f32 %v3750, %v3821
      %v3875 = vadd.f32 %v3751, %v3824
      %v3876 = vadd.f32 %v3752, %v3826
      %v3877 = vadd.f32 %v3753, %v3829
      %v3878 = vadd.f32 %v3754, %v3831
      %v3879 = vadd.f32 %v3755, %v3834
      %v3880 = vadd.f32 %v3756, %v3836
      %v3881 = vadd.f32 %v3757, %v3839
      %v3882 = vadd.f32 %v3758, %v3841
      %v3883 = vadd.f32 %v3759, %v3844
      %v3884 = vadd.f32 %v3760, %v3846
      %v3885 = vadd.f32 %v3761, %v3849
      %v3886 = vadd.f32 %v3762, %v3851
      %v3887 = vadd.f32 %v3763, %v3854
      %v3888 = vadd.f32 %v3764, %v3856
      %v3889 = vlaneseq
      %v3890 = vshrl.u32 %v3889, 7
      %v3891 = vsub.s32 4, %v3890
      %v3892 = vrot.slane %v352, %v3891
      %v3893 = vmul.f32 %v318, %v3892
      %v3894 = vmul.f32 %v319, %v3892
      %v3895 = vmul.f32 %v320, %v3892
      %v3896 = vmul.f32 %v321, %v3892
      %v3897 = vmul.f32 %v322, %v3892
      %v3898 = vmul.f32 %v323, %v3892
      %v3899 = vmul.f32 %v324, %v3892
      %v3900 = vmul.f32 %v325, %v3892
      %v3901 = vmul.f32 %v326, %v3892
      %v3902 = vmul.f32 %v327, %v3892
      %v3903 = vmul.f32 %v328, %v3892
      %v3904 = vmul.f32 %v329, %v3892
      %v3905 = vmul.f32 %v330, %v3892
      %v3906 = vmul.f32 %v331, %v3892
      %v3907 = vmul.f32 %v332, %v3892
      %v3908 = vmul.f32 %v333, %v3892
      %v3909 = vmul.f32 %v334, %v3892
      %v3910 = vmul.f32 %v335, %v3892
      %v3911 = vmul.f32 %v336, %v3892
      %v3912 = vmul.f32 %v337, %v3892
      %v3913 = vmul.f32 %v338, %v3892
      %v3914 = vmul.f32 %v339, %v3892
      %v3915 = vmul.f32 %v340, %v3892
      %v3916 = vmul.f32 %v341, %v3892
      %v3941 = vrot.slane %v3893, 4
      %v3942 = vrot.slane %v3894, 4
      %v3943 = vsel %vm818, %v3941, %v3942
      %v3944 = vrot.slane %v3895, 4
      %v3945 = vsel %vm818, %v3942, %v3944
      %v3946 = vrot.slane %v3896, 4
      %v3947 = vrot.slane %v3897, 4
      %v3948 = vsel %vm818, %v3946, %v3947
      %v3949 = vrot.slane %v3898, 4
      %v3950 = vsel %vm818, %v3947, %v3949
      %v3951 = vrot.slane %v3899, 4
      %v3952 = vrot.slane %v3900, 4
      %v3953 = vsel %vm818, %v3951, %v3952
      %v3954 = vrot.slane %v3901, 4
      %v3955 = vsel %vm818, %v3952, %v3954
      %v3956 = vrot.slane %v3902, 4
      %v3957 = vrot.slane %v3903, 4
      %v3958 = vsel %vm818, %v3956, %v3957
      %v3959 = vrot.slane %v3904, 4
      %v3960 = vsel %vm818, %v3957, %v3959
      %v3961 = vrot.slane %v3905, 4
      %v3962 = vrot.slane %v3906, 4
      %v3963 = vsel %vm818, %v3961, %v3962
      %v3964 = vrot.slane %v3907, 4
      %v3965 = vsel %vm818, %v3962, %v3964
      %v3966 = vrot.slane %v3908, 4
      %v3967 = vrot.slane %v3909, 4
      %v3968 = vsel %vm818, %v3966, %v3967
      %v3969 = vrot.slane %v3910, 4
      %v3970 = vsel %vm818, %v3967, %v3969
      %v3971 = vrot.slane %v3911, 4
      %v3972 = vrot.slane %v3912, 4
      %v3973 = vsel %vm818, %v3971, %v3972
      %v3974 = vrot.slane %v3913, 4
      %v3975 = vsel %vm818, %v3972, %v3974
      %v3976 = vrot.slane %v3914, 4
      %v3977 = vrot.slane %v3915, 4
      %v3978 = vsel %vm818, %v3976, %v3977
      %v3979 = vrot.slane %v3916, 4
      %v3980 = vsel %vm818, %v3977, %v3979
      %v3997 = vadd.f32 %v3873, %v3943
      %v3998 = vadd.f32 %v3874, %v3945
      %v3999 = vadd.f32 %v3875, %v3948
      %v4000 = vadd.f32 %v3876, %v3950
      %v4001 = vadd.f32 %v3877, %v3953
      %v4002 = vadd.f32 %v3878, %v3955
      %v4003 = vadd.f32 %v3879, %v3958
      %v4004 = vadd.f32 %v3880, %v3960
      %v4005 = vadd.f32 %v3881, %v3963
      %v4006 = vadd.f32 %v3882, %v3965
      %v4007 = vadd.f32 %v3883, %v3968
      %v4008 = vadd.f32 %v3884, %v3970
      %v4009 = vadd.f32 %v3885, %v3973
      %v4010 = vadd.f32 %v3886, %v3975
      %v4011 = vadd.f32 %v3887, %v3978
      %v4012 = vadd.f32 %v3888, %v3980
      %v4013 = vlaneseq
      %v4014 = vshrl.u32 %v4013, 7
      %v4015 = vsub.s32 5, %v4014
      %v4016 = vrot.slane %v352, %v4015
      %v4017 = vmul.f32 %v318, %v4016
      %v4018 = vmul.f32 %v319, %v4016
      %v4019 = vmul.f32 %v320, %v4016
      %v4020 = vmul.f32 %v321, %v4016
      %v4021 = vmul.f32 %v322, %v4016
      %v4022 = vmul.f32 %v323, %v4016
      %v4023 = vmul.f32 %v324, %v4016
      %v4024 = vmul.f32 %v325, %v4016
      %v4025 = vmul.f32 %v326, %v4016
      %v4026 = vmul.f32 %v327, %v4016
      %v4027 = vmul.f32 %v328, %v4016
      %v4028 = vmul.f32 %v329, %v4016
      %v4029 = vmul.f32 %v330, %v4016
      %v4030 = vmul.f32 %v331, %v4016
      %v4031 = vmul.f32 %v332, %v4016
      %v4032 = vmul.f32 %v333, %v4016
      %v4033 = vmul.f32 %v334, %v4016
      %v4034 = vmul.f32 %v335, %v4016
      %v4035 = vmul.f32 %v336, %v4016
      %v4036 = vmul.f32 %v337, %v4016
      %v4037 = vmul.f32 %v338, %v4016
      %v4038 = vmul.f32 %v339, %v4016
      %v4039 = vmul.f32 %v340, %v4016
      %v4040 = vmul.f32 %v341, %v4016
      %v4065 = vrot.slane %v4017, 5
      %v4066 = vrot.slane %v4018, 5
      %v4067 = vsel %vm943, %v4065, %v4066
      %v4068 = vrot.slane %v4019, 5
      %v4069 = vsel %vm943, %v4066, %v4068
      %v4070 = vrot.slane %v4020, 5
      %v4071 = vrot.slane %v4021, 5
      %v4072 = vsel %vm943, %v4070, %v4071
      %v4073 = vrot.slane %v4022, 5
      %v4074 = vsel %vm943, %v4071, %v4073
      %v4075 = vrot.slane %v4023, 5
      %v4076 = vrot.slane %v4024, 5
      %v4077 = vsel %vm943, %v4075, %v4076
      %v4078 = vrot.slane %v4025, 5
      %v4079 = vsel %vm943, %v4076, %v4078
      %v4080 = vrot.slane %v4026, 5
      %v4081 = vrot.slane %v4027, 5
      %v4082 = vsel %vm943, %v4080, %v4081
      %v4083 = vrot.slane %v4028, 5
      %v4084 = vsel %vm943, %v4081, %v4083
      %v4085 = vrot.slane %v4029, 5
      %v4086 = vrot.slane %v4030, 5
      %v4087 = vsel %vm943, %v4085, %v4086
      %v4088 = vrot.slane %v4031, 5
      %v4089 = vsel %vm943, %v4086, %v4088
      %v4090 = vrot.slane %v4032, 5
      %v4091 = vrot.slane %v4033, 5
      %v4092 = vsel %vm943, %v4090, %v4091
      %v4093 = vrot.slane %v4034, 5
      %v4094 = vsel %vm943, %v4091, %v4093
      %v4095 = vrot.slane %v4035, 5
      %v4096 = vrot.slane %v4036, 5
      %v4097 = vsel %vm943, %v4095, %v4096
      %v4098 = vrot.slane %v4037, 5
      %v4099 = vsel %vm943, %v4096, %v4098
      %v4100 = vrot.slane %v4038, 5
      %v4101 = vrot.slane %v4039, 5
      %v4102 = vsel %vm943, %v4100, %v4101
      %v4103 = vrot.slane %v4040, 5
      %v4104 = vsel %vm943, %v4101, %v4103
      %v4121 = vadd.f32 %v3997, %v4067
      %v4122 = vadd.f32 %v3998, %v4069
      %v4123 = vadd.f32 %v3999, %v4072
      %v4124 = vadd.f32 %v4000, %v4074
      %v4125 = vadd.f32 %v4001, %v4077
      %v4126 = vadd.f32 %v4002, %v4079
      %v4127 = vadd.f32 %v4003, %v4082
      %v4128 = vadd.f32 %v4004, %v4084
      %v4129 = vadd.f32 %v4005, %v4087
      %v4130 = vadd.f32 %v4006, %v4089
      %v4131 = vadd.f32 %v4007, %v4092
      %v4132 = vadd.f32 %v4008, %v4094
      %v4133 = vadd.f32 %v4009, %v4097
      %v4134 = vadd.f32 %v4010, %v4099
      %v4135 = vadd.f32 %v4011, %v4102
      %v4136 = vadd.f32 %v4012, %v4104
      %v4137 = vlaneseq
      %v4138 = vshrl.u32 %v4137, 7
      %v4139 = vsub.s32 6, %v4138
      %v4140 = vrot.slane %v352, %v4139
      %v4141 = vmul.f32 %v318, %v4140
      %v4142 = vmul.f32 %v319, %v4140
      %v4143 = vmul.f32 %v320, %v4140
      %v4144 = vmul.f32 %v321, %v4140
      %v4145 = vmul.f32 %v322, %v4140
      %v4146 = vmul.f32 %v323, %v4140
      %v4147 = vmul.f32 %v324, %v4140
      %v4148 = vmul.f32 %v325, %v4140
      %v4149 = vmul.f32 %v326, %v4140
      %v4150 = vmul.f32 %v327, %v4140
      %v4151 = vmul.f32 %v328, %v4140
      %v4152 = vmul.f32 %v329, %v4140
      %v4153 = vmul.f32 %v330, %v4140
      %v4154 = vmul.f32 %v331, %v4140
      %v4155 = vmul.f32 %v332, %v4140
      %v4156 = vmul.f32 %v333, %v4140
      %v4157 = vmul.f32 %v334, %v4140
      %v4158 = vmul.f32 %v335, %v4140
      %v4159 = vmul.f32 %v336, %v4140
      %v4160 = vmul.f32 %v337, %v4140
      %v4161 = vmul.f32 %v338, %v4140
      %v4162 = vmul.f32 %v339, %v4140
      %v4163 = vmul.f32 %v340, %v4140
      %v4164 = vmul.f32 %v341, %v4140
      %v4189 = vrot.slane %v4141, 6
      %v4190 = vrot.slane %v4142, 6
      %v4191 = vsel %vm1068, %v4189, %v4190
      %v4192 = vrot.slane %v4143, 6
      %v4193 = vsel %vm1068, %v4190, %v4192
      %v4194 = vrot.slane %v4144, 6
      %v4195 = vrot.slane %v4145, 6
      %v4196 = vsel %vm1068, %v4194, %v4195
      %v4197 = vrot.slane %v4146, 6
      %v4198 = vsel %vm1068, %v4195, %v4197
      %v4199 = vrot.slane %v4147, 6
      %v4200 = vrot.slane %v4148, 6
      %v4201 = vsel %vm1068, %v4199, %v4200
      %v4202 = vrot.slane %v4149, 6
      %v4203 = vsel %vm1068, %v4200, %v4202
      %v4204 = vrot.slane %v4150, 6
      %v4205 = vrot.slane %v4151, 6
      %v4206 = vsel %vm1068, %v4204, %v4205
      %v4207 = vrot.slane %v4152, 6
      %v4208 = vsel %vm1068, %v4205, %v4207
      %v4209 = vrot.slane %v4153, 6
      %v4210 = vrot.slane %v4154, 6
      %v4211 = vsel %vm1068, %v4209, %v4210
      %v4212 = vrot.slane %v4155, 6
      %v4213 = vsel %vm1068, %v4210, %v4212
      %v4214 = vrot.slane %v4156, 6
      %v4215 = vrot.slane %v4157, 6
      %v4216 = vsel %vm1068, %v4214, %v4215
      %v4217 = vrot.slane %v4158, 6
      %v4218 = vsel %vm1068, %v4215, %v4217
      %v4219 = vrot.slane %v4159, 6
      %v4220 = vrot.slane %v4160, 6
      %v4221 = vsel %vm1068, %v4219, %v4220
      %v4222 = vrot.slane %v4161, 6
      %v4223 = vsel %vm1068, %v4220, %v4222
      %v4224 = vrot.slane %v4162, 6
      %v4225 = vrot.slane %v4163, 6
      %v4226 = vsel %vm1068, %v4224, %v4225
      %v4227 = vrot.slane %v4164, 6
      %v4228 = vsel %vm1068, %v4225, %v4227
      %v4245 = vadd.f32 %v4121, %v4191
      %v4246 = vadd.f32 %v4122, %v4193
      %v4247 = vadd.f32 %v4123, %v4196
      %v4248 = vadd.f32 %v4124, %v4198
      %v4249 = vadd.f32 %v4125, %v4201
      %v4250 = vadd.f32 %v4126, %v4203
      %v4251 = vadd.f32 %v4127, %v4206
      %v4252 = vadd.f32 %v4128, %v4208
      %v4253 = vadd.f32 %v4129, %v4211
      %v4254 = vadd.f32 %v4130, %v4213
      %v4255 = vadd.f32 %v4131, %v4216
      %v4256 = vadd.f32 %v4132, %v4218
      %v4257 = vadd.f32 %v4133, %v4221
      %v4258 = vadd.f32 %v4134, %v4223
      %v4259 = vadd.f32 %v4135, %v4226
      %v4260 = vadd.f32 %v4136, %v4228
      %v4261 = vlaneseq
      %v4262 = vshrl.u32 %v4261, 7
      %v4263 = vsub.s32 0, %v4262
      %v4264 = vrot.slane %v353, %v4263
      %v4265 = vmul.f32 %v321, %v4264
      %v4266 = vmul.f32 %v322, %v4264
      %v4267 = vmul.f32 %v324, %v4264
      %v4268 = vmul.f32 %v325, %v4264
      %v4269 = vmul.f32 %v327, %v4264
      %v4270 = vmul.f32 %v328, %v4264
      %v4271 = vmul.f32 %v330, %v4264
      %v4272 = vmul.f32 %v331, %v4264
      %v4273 = vmul.f32 %v333, %v4264
      %v4274 = vmul.f32 %v334, %v4264
      %v4275 = vmul.f32 %v336, %v4264
      %v4276 = vmul.f32 %v337, %v4264
      %v4277 = vmul.f32 %v339, %v4264
      %v4278 = vmul.f32 %v340, %v4264
      %v4279 = vmul.f32 %v342, %v4264
      %v4280 = vmul.f32 %v343, %v4264
      %v4281 = vadd.f32 %v4245, %v4265
      %v4282 = vadd.f32 %v4246, %v4266
      %v4283 = vadd.f32 %v4247, %v4267
      %v4284 = vadd.f32 %v4248, %v4268
      %v4285 = vadd.f32 %v4249, %v4269
      %v4286 = vadd.f32 %v4250, %v4270
      %v4287 = vadd.f32 %v4251, %v4271
      %v4288 = vadd.f32 %v4252, %v4272
      %v4289 = vadd.f32 %v4253, %v4273
      %v4290 = vadd.f32 %v4254, %v4274
      %v4291 = vadd.f32 %v4255, %v4275
      %v4292 = vadd.f32 %v4256, %v4276
      %v4293 = vadd.f32 %v4257, %v4277
      %v4294 = vadd.f32 %v4258, %v4278
      %v4295 = vadd.f32 %v4259, %v4279
      %v4296 = vadd.f32 %v4260, %v4280
      %v4297 = vlaneseq
      %v4298 = vshrl.u32 %v4297, 7
      %v4299 = vsub.s32 1, %v4298
      %v4300 = vrot.slane %v353, %v4299
      %v4301 = vmul.f32 %v321, %v4300
      %v4302 = vmul.f32 %v322, %v4300
      %v4303 = vmul.f32 %v323, %v4300
      %v4304 = vmul.f32 %v324, %v4300
      %v4305 = vmul.f32 %v325, %v4300
      %v4306 = vmul.f32 %v326, %v4300
      %v4307 = vmul.f32 %v327, %v4300
      %v4308 = vmul.f32 %v328, %v4300
      %v4309 = vmul.f32 %v329, %v4300
      %v4310 = vmul.f32 %v330, %v4300
      %v4311 = vmul.f32 %v331, %v4300
      %v4312 = vmul.f32 %v332, %v4300
      %v4313 = vmul.f32 %v333, %v4300
      %v4314 = vmul.f32 %v334, %v4300
      %v4315 = vmul.f32 %v335, %v4300
      %v4316 = vmul.f32 %v336, %v4300
      %v4317 = vmul.f32 %v337, %v4300
      %v4318 = vmul.f32 %v338, %v4300
      %v4319 = vmul.f32 %v339, %v4300
      %v4320 = vmul.f32 %v340, %v4300
      %v4321 = vmul.f32 %v341, %v4300
      %v4322 = vmul.f32 %v342, %v4300
      %v4323 = vmul.f32 %v343, %v4300
      %v4324 = vmul.f32 %v344, %v4300
      %v4349 = vrot.slane %v4301, 1
      %v4350 = vrot.slane %v4302, 1
      %v4351 = vsel %vm443, %v4349, %v4350
      %v4352 = vrot.slane %v4303, 1
      %v4353 = vsel %vm443, %v4350, %v4352
      %v4354 = vrot.slane %v4304, 1
      %v4355 = vrot.slane %v4305, 1
      %v4356 = vsel %vm443, %v4354, %v4355
      %v4357 = vrot.slane %v4306, 1
      %v4358 = vsel %vm443, %v4355, %v4357
      %v4359 = vrot.slane %v4307, 1
      %v4360 = vrot.slane %v4308, 1
      %v4361 = vsel %vm443, %v4359, %v4360
      %v4362 = vrot.slane %v4309, 1
      %v4363 = vsel %vm443, %v4360, %v4362
      %v4364 = vrot.slane %v4310, 1
      %v4365 = vrot.slane %v4311, 1
      %v4366 = vsel %vm443, %v4364, %v4365
      %v4367 = vrot.slane %v4312, 1
      %v4368 = vsel %vm443, %v4365, %v4367
      %v4369 = vrot.slane %v4313, 1
      %v4370 = vrot.slane %v4314, 1
      %v4371 = vsel %vm443, %v4369, %v4370
      %v4372 = vrot.slane %v4315, 1
      %v4373 = vsel %vm443, %v4370, %v4372
      %v4374 = vrot.slane %v4316, 1
      %v4375 = vrot.slane %v4317, 1
      %v4376 = vsel %vm443, %v4374, %v4375
      %v4377 = vrot.slane %v4318, 1
      %v4378 = vsel %vm443, %v4375, %v4377
      %v4379 = vrot.slane %v4319, 1
      %v4380 = vrot.slane %v4320, 1
      %v4381 = vsel %vm443, %v4379, %v4380
      %v4382 = vrot.slane %v4321, 1
      %v4383 = vsel %vm443, %v4380, %v4382
      %v4384 = vrot.slane %v4322, 1
      %v4385 = vrot.slane %v4323, 1
      %v4386 = vsel %vm443, %v4384, %v4385
      %v4387 = vrot.slane %v4324, 1
      %v4388 = vsel %vm443, %v4385, %v4387
      %v4405 = vadd.f32 %v4281, %v4351
      %v4406 = vadd.f32 %v4282, %v4353
      %v4407 = vadd.f32 %v4283, %v4356
      %v4408 = vadd.f32 %v4284, %v4358
      %v4409 = vadd.f32 %v4285, %v4361
      %v4410 = vadd.f32 %v4286, %v4363
      %v4411 = vadd.f32 %v4287, %v4366
      %v4412 = vadd.f32 %v4288, %v4368
      %v4413 = vadd.f32 %v4289, %v4371
      %v4414 = vadd.f32 %v4290, %v4373
      %v4415 = vadd.f32 %v4291, %v4376
      %v4416 = vadd.f32 %v4292, %v4378
      %v4417 = vadd.f32 %v4293, %v4381
      %v4418 = vadd.f32 %v4294, %v4383
      %v4419 = vadd.f32 %v4295, %v4386
      %v4420 = vadd.f32 %v4296, %v4388
      %v4421 = vlaneseq
      %v4422 = vshrl.u32 %v4421, 7
      %v4423 = vsub.s32 2, %v4422
      %v4424 = vrot.slane %v353, %v4423
      %v4425 = vmul.f32 %v321, %v4424
      %v4426 = vmul.f32 %v322, %v4424
      %v4427 = vmul.f32 %v323, %v4424
      %v4428 = vmul.f32 %v324, %v4424
      %v4429 = vmul.f32 %v325, %v4424
      %v4430 = vmul.f32 %v326, %v4424
      %v4431 = vmul.f32 %v327, %v4424
      %v4432 = vmul.f32 %v328, %v4424
      %v4433 = vmul.f32 %v329, %v4424
      %v4434 = vmul.f32 %v330, %v4424
      %v4435 = vmul.f32 %v331, %v4424
      %v4436 = vmul.f32 %v332, %v4424
      %v4437 = vmul.f32 %v333, %v4424
      %v4438 = vmul.f32 %v334, %v4424
      %v4439 = vmul.f32 %v335, %v4424
      %v4440 = vmul.f32 %v336, %v4424
      %v4441 = vmul.f32 %v337, %v4424
      %v4442 = vmul.f32 %v338, %v4424
      %v4443 = vmul.f32 %v339, %v4424
      %v4444 = vmul.f32 %v340, %v4424
      %v4445 = vmul.f32 %v341, %v4424
      %v4446 = vmul.f32 %v342, %v4424
      %v4447 = vmul.f32 %v343, %v4424
      %v4448 = vmul.f32 %v344, %v4424
      %v4473 = vrot.slane %v4425, 2
      %v4474 = vrot.slane %v4426, 2
      %v4475 = vsel %vm568, %v4473, %v4474
      %v4476 = vrot.slane %v4427, 2
      %v4477 = vsel %vm568, %v4474, %v4476
      %v4478 = vrot.slane %v4428, 2
      %v4479 = vrot.slane %v4429, 2
      %v4480 = vsel %vm568, %v4478, %v4479
      %v4481 = vrot.slane %v4430, 2
      %v4482 = vsel %vm568, %v4479, %v4481
      %v4483 = vrot.slane %v4431, 2
      %v4484 = vrot.slane %v4432, 2
      %v4485 = vsel %vm568, %v4483, %v4484
      %v4486 = vrot.slane %v4433, 2
      %v4487 = vsel %vm568, %v4484, %v4486
      %v4488 = vrot.slane %v4434, 2
      %v4489 = vrot.slane %v4435, 2
      %v4490 = vsel %vm568, %v4488, %v4489
      %v4491 = vrot.slane %v4436, 2
      %v4492 = vsel %vm568, %v4489, %v4491
      %v4493 = vrot.slane %v4437, 2
      %v4494 = vrot.slane %v4438, 2
      %v4495 = vsel %vm568, %v4493, %v4494
      %v4496 = vrot.slane %v4439, 2
      %v4497 = vsel %vm568, %v4494, %v4496
      %v4498 = vrot.slane %v4440, 2
      %v4499 = vrot.slane %v4441, 2
      %v4500 = vsel %vm568, %v4498, %v4499
      %v4501 = vrot.slane %v4442, 2
      %v4502 = vsel %vm568, %v4499, %v4501
      %v4503 = vrot.slane %v4443, 2
      %v4504 = vrot.slane %v4444, 2
      %v4505 = vsel %vm568, %v4503, %v4504
      %v4506 = vrot.slane %v4445, 2
      %v4507 = vsel %vm568, %v4504, %v4506
      %v4508 = vrot.slane %v4446, 2
      %v4509 = vrot.slane %v4447, 2
      %v4510 = vsel %vm568, %v4508, %v4509
      %v4511 = vrot.slane %v4448, 2
      %v4512 = vsel %vm568, %v4509, %v4511
      %v4529 = vadd.f32 %v4405, %v4475
      %v4530 = vadd.f32 %v4406, %v4477
      %v4531 = vadd.f32 %v4407, %v4480
      %v4532 = vadd.f32 %v4408, %v4482
      %v4533 = vadd.f32 %v4409, %v4485
      %v4534 = vadd.f32 %v4410, %v4487
      %v4535 = vadd.f32 %v4411, %v4490
      %v4536 = vadd.f32 %v4412, %v4492
      %v4537 = vadd.f32 %v4413, %v4495
      %v4538 = vadd.f32 %v4414, %v4497
      %v4539 = vadd.f32 %v4415, %v4500
      %v4540 = vadd.f32 %v4416, %v4502
      %v4541 = vadd.f32 %v4417, %v4505
      %v4542 = vadd.f32 %v4418, %v4507
      %v4543 = vadd.f32 %v4419, %v4510
      %v4544 = vadd.f32 %v4420, %v4512
      %v4545 = vlaneseq
      %v4546 = vshrl.u32 %v4545, 7
      %v4547 = vsub.s32 3, %v4546
      %v4548 = vrot.slane %v353, %v4547
      %v4549 = vmul.f32 %v321, %v4548
      %v4550 = vmul.f32 %v322, %v4548
      %v4551 = vmul.f32 %v323, %v4548
      %v4552 = vmul.f32 %v324, %v4548
      %v4553 = vmul.f32 %v325, %v4548
      %v4554 = vmul.f32 %v326, %v4548
      %v4555 = vmul.f32 %v327, %v4548
      %v4556 = vmul.f32 %v328, %v4548
      %v4557 = vmul.f32 %v329, %v4548
      %v4558 = vmul.f32 %v330, %v4548
      %v4559 = vmul.f32 %v331, %v4548
      %v4560 = vmul.f32 %v332, %v4548
      %v4561 = vmul.f32 %v333, %v4548
      %v4562 = vmul.f32 %v334, %v4548
      %v4563 = vmul.f32 %v335, %v4548
      %v4564 = vmul.f32 %v336, %v4548
      %v4565 = vmul.f32 %v337, %v4548
      %v4566 = vmul.f32 %v338, %v4548
      %v4567 = vmul.f32 %v339, %v4548
      %v4568 = vmul.f32 %v340, %v4548
      %v4569 = vmul.f32 %v341, %v4548
      %v4570 = vmul.f32 %v342, %v4548
      %v4571 = vmul.f32 %v343, %v4548
      %v4572 = vmul.f32 %v344, %v4548
      %v4597 = vrot.slane %v4549, 3
      %v4598 = vrot.slane %v4550, 3
      %v4599 = vsel %vm693, %v4597, %v4598
      %v4600 = vrot.slane %v4551, 3
      %v4601 = vsel %vm693, %v4598, %v4600
      %v4602 = vrot.slane %v4552, 3
      %v4603 = vrot.slane %v4553, 3
      %v4604 = vsel %vm693, %v4602, %v4603
      %v4605 = vrot.slane %v4554, 3
      %v4606 = vsel %vm693, %v4603, %v4605
      %v4607 = vrot.slane %v4555, 3
      %v4608 = vrot.slane %v4556, 3
      %v4609 = vsel %vm693, %v4607, %v4608
      %v4610 = vrot.slane %v4557, 3
      %v4611 = vsel %vm693, %v4608, %v4610
      %v4612 = vrot.slane %v4558, 3
      %v4613 = vrot.slane %v4559, 3
      %v4614 = vsel %vm693, %v4612, %v4613
      %v4615 = vrot.slane %v4560, 3
      %v4616 = vsel %vm693, %v4613, %v4615
      %v4617 = vrot.slane %v4561, 3
      %v4618 = vrot.slane %v4562, 3
      %v4619 = vsel %vm693, %v4617, %v4618
      %v4620 = vrot.slane %v4563, 3
      %v4621 = vsel %vm693, %v4618, %v4620
      %v4622 = vrot.slane %v4564, 3
      %v4623 = vrot.slane %v4565, 3
      %v4624 = vsel %vm693, %v4622, %v4623
      %v4625 = vrot.slane %v4566, 3
      %v4626 = vsel %vm693, %v4623, %v4625
      %v4627 = vrot.slane %v4567, 3
      %v4628 = vrot.slane %v4568, 3
      %v4629 = vsel %vm693, %v4627, %v4628
      %v4630 = vrot.slane %v4569, 3
      %v4631 = vsel %vm693, %v4628, %v4630
      %v4632 = vrot.slane %v4570, 3
      %v4633 = vrot.slane %v4571, 3
      %v4634 = vsel %vm693, %v4632, %v4633
      %v4635 = vrot.slane %v4572, 3
      %v4636 = vsel %vm693, %v4633, %v4635
      %v4653 = vadd.f32 %v4529, %v4599
      %v4654 = vadd.f32 %v4530, %v4601
      %v4655 = vadd.f32 %v4531, %v4604
      %v4656 = vadd.f32 %v4532, %v4606
      %v4657 = vadd.f32 %v4533, %v4609
      %v4658 = vadd.f32 %v4534, %v4611
      %v4659 = vadd.f32 %v4535, %v4614
      %v4660 = vadd.f32 %v4536, %v4616
      %v4661 = vadd.f32 %v4537, %v4619
      %v4662 = vadd.f32 %v4538, %v4621
      %v4663 = vadd.f32 %v4539, %v4624
      %v4664 = vadd.f32 %v4540, %v4626
      %v4665 = vadd.f32 %v4541, %v4629
      %v4666 = vadd.f32 %v4542, %v4631
      %v4667 = vadd.f32 %v4543, %v4634
      %v4668 = vadd.f32 %v4544, %v4636
      %v4669 = vlaneseq
      %v4670 = vshrl.u32 %v4669, 7
      %v4671 = vsub.s32 4, %v4670
      %v4672 = vrot.slane %v353, %v4671
      %v4673 = vmul.f32 %v321, %v4672
      %v4674 = vmul.f32 %v322, %v4672
      %v4675 = vmul.f32 %v323, %v4672
      %v4676 = vmul.f32 %v324, %v4672
      %v4677 = vmul.f32 %v325, %v4672
      %v4678 = vmul.f32 %v326, %v4672
      %v4679 = vmul.f32 %v327, %v4672
      %v4680 = vmul.f32 %v328, %v4672
      %v4681 = vmul.f32 %v329, %v4672
      %v4682 = vmul.f32 %v330, %v4672
      %v4683 = vmul.f32 %v331, %v4672
      %v4684 = vmul.f32 %v332, %v4672
      %v4685 = vmul.f32 %v333, %v4672
      %v4686 = vmul.f32 %v334, %v4672
      %v4687 = vmul.f32 %v335, %v4672
      %v4688 = vmul.f32 %v336, %v4672
      %v4689 = vmul.f32 %v337, %v4672
      %v4690 = vmul.f32 %v338, %v4672
      %v4691 = vmul.f32 %v339, %v4672
      %v4692 = vmul.f32 %v340, %v4672
      %v4693 = vmul.f32 %v341, %v4672
      %v4694 = vmul.f32 %v342, %v4672
      %v4695 = vmul.f32 %v343, %v4672
      %v4696 = vmul.f32 %v344, %v4672
      %v4721 = vrot.slane %v4673, 4
      %v4722 = vrot.slane %v4674, 4
      %v4723 = vsel %vm818, %v4721, %v4722
      %v4724 = vrot.slane %v4675, 4
      %v4725 = vsel %vm818, %v4722, %v4724
      %v4726 = vrot.slane %v4676, 4
      %v4727 = vrot.slane %v4677, 4
      %v4728 = vsel %vm818, %v4726, %v4727
      %v4729 = vrot.slane %v4678, 4
      %v4730 = vsel %vm818, %v4727, %v4729
      %v4731 = vrot.slane %v4679, 4
      %v4732 = vrot.slane %v4680, 4
      %v4733 = vsel %vm818, %v4731, %v4732
      %v4734 = vrot.slane %v4681, 4
      %v4735 = vsel %vm818, %v4732, %v4734
      %v4736 = vrot.slane %v4682, 4
      %v4737 = vrot.slane %v4683, 4
      %v4738 = vsel %vm818, %v4736, %v4737
      %v4739 = vrot.slane %v4684, 4
      %v4740 = vsel %vm818, %v4737, %v4739
      %v4741 = vrot.slane %v4685, 4
      %v4742 = vrot.slane %v4686, 4
      %v4743 = vsel %vm818, %v4741, %v4742
      %v4744 = vrot.slane %v4687, 4
      %v4745 = vsel %vm818, %v4742, %v4744
      %v4746 = vrot.slane %v4688, 4
      %v4747 = vrot.slane %v4689, 4
      %v4748 = vsel %vm818, %v4746, %v4747
      %v4749 = vrot.slane %v4690, 4
      %v4750 = vsel %vm818, %v4747, %v4749
      %v4751 = vrot.slane %v4691, 4
      %v4752 = vrot.slane %v4692, 4
      %v4753 = vsel %vm818, %v4751, %v4752
      %v4754 = vrot.slane %v4693, 4
      %v4755 = vsel %vm818, %v4752, %v4754
      %v4756 = vrot.slane %v4694, 4
      %v4757 = vrot.slane %v4695, 4
      %v4758 = vsel %vm818, %v4756, %v4757
      %v4759 = vrot.slane %v4696, 4
      %v4760 = vsel %vm818, %v4757, %v4759
      %v4777 = vadd.f32 %v4653, %v4723
      %v4778 = vadd.f32 %v4654, %v4725
      %v4779 = vadd.f32 %v4655, %v4728
      %v4780 = vadd.f32 %v4656, %v4730
      %v4781 = vadd.f32 %v4657, %v4733
      %v4782 = vadd.f32 %v4658, %v4735
      %v4783 = vadd.f32 %v4659, %v4738
      %v4784 = vadd.f32 %v4660, %v4740
      %v4785 = vadd.f32 %v4661, %v4743
      %v4786 = vadd.f32 %v4662, %v4745
      %v4787 = vadd.f32 %v4663, %v4748
      %v4788 = vadd.f32 %v4664, %v4750
      %v4789 = vadd.f32 %v4665, %v4753
      %v4790 = vadd.f32 %v4666, %v4755
      %v4791 = vadd.f32 %v4667, %v4758
      %v4792 = vadd.f32 %v4668, %v4760
      %v4793 = vlaneseq
      %v4794 = vshrl.u32 %v4793, 7
      %v4795 = vsub.s32 5, %v4794
      %v4796 = vrot.slane %v353, %v4795
      %v4797 = vmul.f32 %v321, %v4796
      %v4798 = vmul.f32 %v322, %v4796
      %v4799 = vmul.f32 %v323, %v4796
      %v4800 = vmul.f32 %v324, %v4796
      %v4801 = vmul.f32 %v325, %v4796
      %v4802 = vmul.f32 %v326, %v4796
      %v4803 = vmul.f32 %v327, %v4796
      %v4804 = vmul.f32 %v328, %v4796
      %v4805 = vmul.f32 %v329, %v4796
      %v4806 = vmul.f32 %v330, %v4796
      %v4807 = vmul.f32 %v331, %v4796
      %v4808 = vmul.f32 %v332, %v4796
      %v4809 = vmul.f32 %v333, %v4796
      %v4810 = vmul.f32 %v334, %v4796
      %v4811 = vmul.f32 %v335, %v4796
      %v4812 = vmul.f32 %v336, %v4796
      %v4813 = vmul.f32 %v337, %v4796
      %v4814 = vmul.f32 %v338, %v4796
      %v4815 = vmul.f32 %v339, %v4796
      %v4816 = vmul.f32 %v340, %v4796
      %v4817 = vmul.f32 %v341, %v4796
      %v4818 = vmul.f32 %v342, %v4796
      %v4819 = vmul.f32 %v343, %v4796
      %v4820 = vmul.f32 %v344, %v4796
      %v4845 = vrot.slane %v4797, 5
      %v4846 = vrot.slane %v4798, 5
      %v4847 = vsel %vm943, %v4845, %v4846
      %v4848 = vrot.slane %v4799, 5
      %v4849 = vsel %vm943, %v4846, %v4848
      %v4850 = vrot.slane %v4800, 5
      %v4851 = vrot.slane %v4801, 5
      %v4852 = vsel %vm943, %v4850, %v4851
      %v4853 = vrot.slane %v4802, 5
      %v4854 = vsel %vm943, %v4851, %v4853
      %v4855 = vrot.slane %v4803, 5
      %v4856 = vrot.slane %v4804, 5
      %v4857 = vsel %vm943, %v4855, %v4856
      %v4858 = vrot.slane %v4805, 5
      %v4859 = vsel %vm943, %v4856, %v4858
      %v4860 = vrot.slane %v4806, 5
      %v4861 = vrot.slane %v4807, 5
      %v4862 = vsel %vm943, %v4860, %v4861
      %v4863 = vrot.slane %v4808, 5
      %v4864 = vsel %vm943, %v4861, %v4863
      %v4865 = vrot.slane %v4809, 5
      %v4866 = vrot.slane %v4810, 5
      %v4867 = vsel %vm943, %v4865, %v4866
      %v4868 = vrot.slane %v4811, 5
      %v4869 = vsel %vm943, %v4866, %v4868
      %v4870 = vrot.slane %v4812, 5
      %v4871 = vrot.slane %v4813, 5
      %v4872 = vsel %vm943, %v4870, %v4871
      %v4873 = vrot.slane %v4814, 5
      %v4874 = vsel %vm943, %v4871, %v4873
      %v4875 = vrot.slane %v4815, 5
      %v4876 = vrot.slane %v4816, 5
      %v4877 = vsel %vm943, %v4875, %v4876
      %v4878 = vrot.slane %v4817, 5
      %v4879 = vsel %vm943, %v4876, %v4878
      %v4880 = vrot.slane %v4818, 5
      %v4881 = vrot.slane %v4819, 5
      %v4882 = vsel %vm943, %v4880, %v4881
      %v4883 = vrot.slane %v4820, 5
      %v4884 = vsel %vm943, %v4881, %v4883
      %v4901 = vadd.f32 %v4777, %v4847
      %v4902 = vadd.f32 %v4778, %v4849
      %v4903 = vadd.f32 %v4779, %v4852
      %v4904 = vadd.f32 %v4780, %v4854
      %v4905 = vadd.f32 %v4781, %v4857
      %v4906 = vadd.f32 %v4782, %v4859
      %v4907 = vadd.f32 %v4783, %v4862
      %v4908 = vadd.f32 %v4784, %v4864
      %v4909 = vadd.f32 %v4785, %v4867
      %v4910 = vadd.f32 %v4786, %v4869
      %v4911 = vadd.f32 %v4787, %v4872
      %v4912 = vadd.f32 %v4788, %v4874
      %v4913 = vadd.f32 %v4789, %v4877
      %v4914 = vadd.f32 %v4790, %v4879
      %v4915 = vadd.f32 %v4791, %v4882
      %v4916 = vadd.f32 %v4792, %v4884
      %v4917 = vlaneseq
      %v4918 = vshrl.u32 %v4917, 7
      %v4919 = vsub.s32 6, %v4918
      %v4920 = vrot.slane %v353, %v4919
      %v4921 = vmul.f32 %v321, %v4920
      %v4922 = vmul.f32 %v322, %v4920
      %v4923 = vmul.f32 %v323, %v4920
      %v4924 = vmul.f32 %v324, %v4920
      %v4925 = vmul.f32 %v325, %v4920
      %v4926 = vmul.f32 %v326, %v4920
      %v4927 = vmul.f32 %v327, %v4920
      %v4928 = vmul.f32 %v328, %v4920
      %v4929 = vmul.f32 %v329, %v4920
      %v4930 = vmul.f32 %v330, %v4920
      %v4931 = vmul.f32 %v331, %v4920
      %v4932 = vmul.f32 %v332, %v4920
      %v4933 = vmul.f32 %v333, %v4920
      %v4934 = vmul.f32 %v334, %v4920
      %v4935 = vmul.f32 %v335, %v4920
      %v4936 = vmul.f32 %v336, %v4920
      %v4937 = vmul.f32 %v337, %v4920
      %v4938 = vmul.f32 %v338, %v4920
      %v4939 = vmul.f32 %v339, %v4920
      %v4940 = vmul.f32 %v340, %v4920
      %v4941 = vmul.f32 %v341, %v4920
      %v4942 = vmul.f32 %v342, %v4920
      %v4943 = vmul.f32 %v343, %v4920
      %v4944 = vmul.f32 %v344, %v4920
      %v4969 = vrot.slane %v4921, 6
      %v4970 = vrot.slane %v4922, 6
      %v4971 = vsel %vm1068, %v4969, %v4970
      %v4972 = vrot.slane %v4923, 6
      %v4973 = vsel %vm1068, %v4970, %v4972
      %v4974 = vrot.slane %v4924, 6
      %v4975 = vrot.slane %v4925, 6
      %v4976 = vsel %vm1068, %v4974, %v4975
      %v4977 = vrot.slane %v4926, 6
      %v4978 = vsel %vm1068, %v4975, %v4977
      %v4979 = vrot.slane %v4927, 6
      %v4980 = vrot.slane %v4928, 6
      %v4981 = vsel %vm1068, %v4979, %v4980
      %v4982 = vrot.slane %v4929, 6
      %v4983 = vsel %vm1068, %v4980, %v4982
      %v4984 = vrot.slane %v4930, 6
      %v4985 = vrot.slane %v4931, 6
      %v4986 = vsel %vm1068, %v4984, %v4985
      %v4987 = vrot.slane %v4932, 6
      %v4988 = vsel %vm1068, %v4985, %v4987
      %v4989 = vrot.slane %v4933, 6
      %v4990 = vrot.slane %v4934, 6
      %v4991 = vsel %vm1068, %v4989, %v4990
      %v4992 = vrot.slane %v4935, 6
      %v4993 = vsel %vm1068, %v4990, %v4992
      %v4994 = vrot.slane %v4936, 6
      %v4995 = vrot.slane %v4937, 6
      %v4996 = vsel %vm1068, %v4994, %v4995
      %v4997 = vrot.slane %v4938, 6
      %v4998 = vsel %vm1068, %v4995, %v4997
      %v4999 = vrot.slane %v4939, 6
      %v5000 = vrot.slane %v4940, 6
      %v5001 = vsel %vm1068, %v4999, %v5000
      %v5002 = vrot.slane %v4941, 6
      %v5003 = vsel %vm1068, %v5000, %v5002
      %v5004 = vrot.slane %v4942, 6
      %v5005 = vrot.slane %v4943, 6
      %v5006 = vsel %vm1068, %v5004, %v5005
      %v5007 = vrot.slane %v4944, 6
      %v5008 = vsel %vm1068, %v5005, %v5007
      %v5025 = vadd.f32 %v4901, %v4971
      %v5026 = vadd.f32 %v4902, %v4973
      %v5027 = vadd.f32 %v4903, %v4976
      %v5028 = vadd.f32 %v4904, %v4978
      %v5029 = vadd.f32 %v4905, %v4981
      %v5030 = vadd.f32 %v4906, %v4983
      %v5031 = vadd.f32 %v4907, %v4986
      %v5032 = vadd.f32 %v4908, %v4988
      %v5033 = vadd.f32 %v4909, %v4991
      %v5034 = vadd.f32 %v4910, %v4993
      %v5035 = vadd.f32 %v4911, %v4996
      %v5036 = vadd.f32 %v4912, %v4998
      %v5037 = vadd.f32 %v4913, %v5001
      %v5038 = vadd.f32 %v4914, %v5003
      %v5039 = vadd.f32 %v4915, %v5006
      %v5040 = vadd.f32 %v4916, %v5008
      %v5041 = vlaneseq
      %v5042 = vshrl.u32 %v5041, 7
      %v5043 = vsub.s32 0, %v5042
      %v5044 = vrot.slane %v354, %v5043
      %v5045 = vmul.f32 %v324, %v5044
      %v5046 = vmul.f32 %v325, %v5044
      %v5047 = vmul.f32 %v327, %v5044
      %v5048 = vmul.f32 %v328, %v5044
      %v5049 = vmul.f32 %v330, %v5044
      %v5050 = vmul.f32 %v331, %v5044
      %v5051 = vmul.f32 %v333, %v5044
      %v5052 = vmul.f32 %v334, %v5044
      %v5053 = vmul.f32 %v336, %v5044
      %v5054 = vmul.f32 %v337, %v5044
      %v5055 = vmul.f32 %v339, %v5044
      %v5056 = vmul.f32 %v340, %v5044
      %v5057 = vmul.f32 %v342, %v5044
      %v5058 = vmul.f32 %v343, %v5044
      %v5059 = vmul.f32 %v345, %v5044
      %v5060 = vmul.f32 %v346, %v5044
      %v5061 = vadd.f32 %v5025, %v5045
      %v5062 = vadd.f32 %v5026, %v5046
      %v5063 = vadd.f32 %v5027, %v5047
      %v5064 = vadd.f32 %v5028, %v5048
      %v5065 = vadd.f32 %v5029, %v5049
      %v5066 = vadd.f32 %v5030, %v5050
      %v5067 = vadd.f32 %v5031, %v5051
      %v5068 = vadd.f32 %v5032, %v5052
      %v5069 = vadd.f32 %v5033, %v5053
      %v5070 = vadd.f32 %v5034, %v5054
      %v5071 = vadd.f32 %v5035, %v5055
      %v5072 = vadd.f32 %v5036, %v5056
      %v5073 = vadd.f32 %v5037, %v5057
      %v5074 = vadd.f32 %v5038, %v5058
      %v5075 = vadd.f32 %v5039, %v5059
      %v5076 = vadd.f32 %v5040, %v5060
      %v5077 = vlaneseq
      %v5078 = vshrl.u32 %v5077, 7
      %v5079 = vsub.s32 1, %v5078
      %v5080 = vrot.slane %v354, %v5079
      %v5081 = vmul.f32 %v324, %v5080
      %v5082 = vmul.f32 %v325, %v5080
      %v5083 = vmul.f32 %v326, %v5080
      %v5084 = vmul.f32 %v327, %v5080
      %v5085 = vmul.f32 %v328, %v5080
      %v5086 = vmul.f32 %v329, %v5080
      %v5087 = vmul.f32 %v330, %v5080
      %v5088 = vmul.f32 %v331, %v5080
      %v5089 = vmul.f32 %v332, %v5080
      %v5090 = vmul.f32 %v333, %v5080
      %v5091 = vmul.f32 %v334, %v5080
      %v5092 = vmul.f32 %v335, %v5080
      %v5093 = vmul.f32 %v336, %v5080
      %v5094 = vmul.f32 %v337, %v5080
      %v5095 = vmul.f32 %v338, %v5080
      %v5096 = vmul.f32 %v339, %v5080
      %v5097 = vmul.f32 %v340, %v5080
      %v5098 = vmul.f32 %v341, %v5080
      %v5099 = vmul.f32 %v342, %v5080
      %v5100 = vmul.f32 %v343, %v5080
      %v5101 = vmul.f32 %v344, %v5080
      %v5102 = vmul.f32 %v345, %v5080
      %v5103 = vmul.f32 %v346, %v5080
      %v5104 = vmul.f32 %v347, %v5080
      %v5129 = vrot.slane %v5081, 1
      %v5130 = vrot.slane %v5082, 1
      %v5131 = vsel %vm443, %v5129, %v5130
      %v5132 = vrot.slane %v5083, 1
      %v5133 = vsel %vm443, %v5130, %v5132
      %v5134 = vrot.slane %v5084, 1
      %v5135 = vrot.slane %v5085, 1
      %v5136 = vsel %vm443, %v5134, %v5135
      %v5137 = vrot.slane %v5086, 1
      %v5138 = vsel %vm443, %v5135, %v5137
      %v5139 = vrot.slane %v5087, 1
      %v5140 = vrot.slane %v5088, 1
      %v5141 = vsel %vm443, %v5139, %v5140
      %v5142 = vrot.slane %v5089, 1
      %v5143 = vsel %vm443, %v5140, %v5142
      %v5144 = vrot.slane %v5090, 1
      %v5145 = vrot.slane %v5091, 1
      %v5146 = vsel %vm443, %v5144, %v5145
      %v5147 = vrot.slane %v5092, 1
      %v5148 = vsel %vm443, %v5145, %v5147
      %v5149 = vrot.slane %v5093, 1
      %v5150 = vrot.slane %v5094, 1
      %v5151 = vsel %vm443, %v5149, %v5150
      %v5152 = vrot.slane %v5095, 1
      %v5153 = vsel %vm443, %v5150, %v5152
      %v5154 = vrot.slane %v5096, 1
      %v5155 = vrot.slane %v5097, 1
      %v5156 = vsel %vm443, %v5154, %v5155
      %v5157 = vrot.slane %v5098, 1
      %v5158 = vsel %vm443, %v5155, %v5157
      %v5159 = vrot.slane %v5099, 1
      %v5160 = vrot.slane %v5100, 1
      %v5161 = vsel %vm443, %v5159, %v5160
      %v5162 = vrot.slane %v5101, 1
      %v5163 = vsel %vm443, %v5160, %v5162
      %v5164 = vrot.slane %v5102, 1
      %v5165 = vrot.slane %v5103, 1
      %v5166 = vsel %vm443, %v5164, %v5165
      %v5167 = vrot.slane %v5104, 1
      %v5168 = vsel %vm443, %v5165, %v5167
      %v5185 = vadd.f32 %v5061, %v5131
      %v5186 = vadd.f32 %v5062, %v5133
      %v5187 = vadd.f32 %v5063, %v5136
      %v5188 = vadd.f32 %v5064, %v5138
      %v5189 = vadd.f32 %v5065, %v5141
      %v5190 = vadd.f32 %v5066, %v5143
      %v5191 = vadd.f32 %v5067, %v5146
      %v5192 = vadd.f32 %v5068, %v5148
      %v5193 = vadd.f32 %v5069, %v5151
      %v5194 = vadd.f32 %v5070, %v5153
      %v5195 = vadd.f32 %v5071, %v5156
      %v5196 = vadd.f32 %v5072, %v5158
      %v5197 = vadd.f32 %v5073, %v5161
      %v5198 = vadd.f32 %v5074, %v5163
      %v5199 = vadd.f32 %v5075, %v5166
      %v5200 = vadd.f32 %v5076, %v5168
      %v5201 = vlaneseq
      %v5202 = vshrl.u32 %v5201, 7
      %v5203 = vsub.s32 2, %v5202
      %v5204 = vrot.slane %v354, %v5203
      %v5205 = vmul.f32 %v324, %v5204
      %v5206 = vmul.f32 %v325, %v5204
      %v5207 = vmul.f32 %v326, %v5204
      %v5208 = vmul.f32 %v327, %v5204
      %v5209 = vmul.f32 %v328, %v5204
      %v5210 = vmul.f32 %v329, %v5204
      %v5211 = vmul.f32 %v330, %v5204
      %v5212 = vmul.f32 %v331, %v5204
      %v5213 = vmul.f32 %v332, %v5204
      %v5214 = vmul.f32 %v333, %v5204
      %v5215 = vmul.f32 %v334, %v5204
      %v5216 = vmul.f32 %v335, %v5204
      %v5217 = vmul.f32 %v336, %v5204
      %v5218 = vmul.f32 %v337, %v5204
      %v5219 = vmul.f32 %v338, %v5204
      %v5220 = vmul.f32 %v339, %v5204
      %v5221 = vmul.f32 %v340, %v5204
      %v5222 = vmul.f32 %v341, %v5204
      %v5223 = vmul.f32 %v342, %v5204
      %v5224 = vmul.f32 %v343, %v5204
      %v5225 = vmul.f32 %v344, %v5204
      %v5226 = vmul.f32 %v345, %v5204
      %v5227 = vmul.f32 %v346, %v5204
      %v5228 = vmul.f32 %v347, %v5204
      %v5253 = vrot.slane %v5205, 2
      %v5254 = vrot.slane %v5206, 2
      %v5255 = vsel %vm568, %v5253, %v5254
      %v5256 = vrot.slane %v5207, 2
      %v5257 = vsel %vm568, %v5254, %v5256
      %v5258 = vrot.slane %v5208, 2
      %v5259 = vrot.slane %v5209, 2
      %v5260 = vsel %vm568, %v5258, %v5259
      %v5261 = vrot.slane %v5210, 2
      %v5262 = vsel %vm568, %v5259, %v5261
      %v5263 = vrot.slane %v5211, 2
      %v5264 = vrot.slane %v5212, 2
      %v5265 = vsel %vm568, %v5263, %v5264
      %v5266 = vrot.slane %v5213, 2
      %v5267 = vsel %vm568, %v5264, %v5266
      %v5268 = vrot.slane %v5214, 2
      %v5269 = vrot.slane %v5215, 2
      %v5270 = vsel %vm568, %v5268, %v5269
      %v5271 = vrot.slane %v5216, 2
      %v5272 = vsel %vm568, %v5269, %v5271
      %v5273 = vrot.slane %v5217, 2
      %v5274 = vrot.slane %v5218, 2
      %v5275 = vsel %vm568, %v5273, %v5274
      %v5276 = vrot.slane %v5219, 2
      %v5277 = vsel %vm568, %v5274, %v5276
      %v5278 = vrot.slane %v5220, 2
      %v5279 = vrot.slane %v5221, 2
      %v5280 = vsel %vm568, %v5278, %v5279
      %v5281 = vrot.slane %v5222, 2
      %v5282 = vsel %vm568, %v5279, %v5281
      %v5283 = vrot.slane %v5223, 2
      %v5284 = vrot.slane %v5224, 2
      %v5285 = vsel %vm568, %v5283, %v5284
      %v5286 = vrot.slane %v5225, 2
      %v5287 = vsel %vm568, %v5284, %v5286
      %v5288 = vrot.slane %v5226, 2
      %v5289 = vrot.slane %v5227, 2
      %v5290 = vsel %vm568, %v5288, %v5289
      %v5291 = vrot.slane %v5228, 2
      %v5292 = vsel %vm568, %v5289, %v5291
      %v5309 = vadd.f32 %v5185, %v5255
      %v5310 = vadd.f32 %v5186, %v5257
      %v5311 = vadd.f32 %v5187, %v5260
      %v5312 = vadd.f32 %v5188, %v5262
      %v5313 = vadd.f32 %v5189, %v5265
      %v5314 = vadd.f32 %v5190, %v5267
      %v5315 = vadd.f32 %v5191, %v5270
      %v5316 = vadd.f32 %v5192, %v5272
      %v5317 = vadd.f32 %v5193, %v5275
      %v5318 = vadd.f32 %v5194, %v5277
      %v5319 = vadd.f32 %v5195, %v5280
      %v5320 = vadd.f32 %v5196, %v5282
      %v5321 = vadd.f32 %v5197, %v5285
      %v5322 = vadd.f32 %v5198, %v5287
      %v5323 = vadd.f32 %v5199, %v5290
      %v5324 = vadd.f32 %v5200, %v5292
      %v5325 = vlaneseq
      %v5326 = vshrl.u32 %v5325, 7
      %v5327 = vsub.s32 3, %v5326
      %v5328 = vrot.slane %v354, %v5327
      %v5329 = vmul.f32 %v324, %v5328
      %v5330 = vmul.f32 %v325, %v5328
      %v5331 = vmul.f32 %v326, %v5328
      %v5332 = vmul.f32 %v327, %v5328
      %v5333 = vmul.f32 %v328, %v5328
      %v5334 = vmul.f32 %v329, %v5328
      %v5335 = vmul.f32 %v330, %v5328
      %v5336 = vmul.f32 %v331, %v5328
      %v5337 = vmul.f32 %v332, %v5328
      %v5338 = vmul.f32 %v333, %v5328
      %v5339 = vmul.f32 %v334, %v5328
      %v5340 = vmul.f32 %v335, %v5328
      %v5341 = vmul.f32 %v336, %v5328
      %v5342 = vmul.f32 %v337, %v5328
      %v5343 = vmul.f32 %v338, %v5328
      %v5344 = vmul.f32 %v339, %v5328
      %v5345 = vmul.f32 %v340, %v5328
      %v5346 = vmul.f32 %v341, %v5328
      %v5347 = vmul.f32 %v342, %v5328
      %v5348 = vmul.f32 %v343, %v5328
      %v5349 = vmul.f32 %v344, %v5328
      %v5350 = vmul.f32 %v345, %v5328
      %v5351 = vmul.f32 %v346, %v5328
      %v5352 = vmul.f32 %v347, %v5328
      %v5377 = vrot.slane %v5329, 3
      %v5378 = vrot.slane %v5330, 3
      %v5379 = vsel %vm693, %v5377, %v5378
      %v5380 = vrot.slane %v5331, 3
      %v5381 = vsel %vm693, %v5378, %v5380
      %v5382 = vrot.slane %v5332, 3
      %v5383 = vrot.slane %v5333, 3
      %v5384 = vsel %vm693, %v5382, %v5383
      %v5385 = vrot.slane %v5334, 3
      %v5386 = vsel %vm693, %v5383, %v5385
      %v5387 = vrot.slane %v5335, 3
      %v5388 = vrot.slane %v5336, 3
      %v5389 = vsel %vm693, %v5387, %v5388
      %v5390 = vrot.slane %v5337, 3
      %v5391 = vsel %vm693, %v5388, %v5390
      %v5392 = vrot.slane %v5338, 3
      %v5393 = vrot.slane %v5339, 3
      %v5394 = vsel %vm693, %v5392, %v5393
      %v5395 = vrot.slane %v5340, 3
      %v5396 = vsel %vm693, %v5393, %v5395
      %v5397 = vrot.slane %v5341, 3
      %v5398 = vrot.slane %v5342, 3
      %v5399 = vsel %vm693, %v5397, %v5398
      %v5400 = vrot.slane %v5343, 3
      %v5401 = vsel %vm693, %v5398, %v5400
      %v5402 = vrot.slane %v5344, 3
      %v5403 = vrot.slane %v5345, 3
      %v5404 = vsel %vm693, %v5402, %v5403
      %v5405 = vrot.slane %v5346, 3
      %v5406 = vsel %vm693, %v5403, %v5405
      %v5407 = vrot.slane %v5347, 3
      %v5408 = vrot.slane %v5348, 3
      %v5409 = vsel %vm693, %v5407, %v5408
      %v5410 = vrot.slane %v5349, 3
      %v5411 = vsel %vm693, %v5408, %v5410
      %v5412 = vrot.slane %v5350, 3
      %v5413 = vrot.slane %v5351, 3
      %v5414 = vsel %vm693, %v5412, %v5413
      %v5415 = vrot.slane %v5352, 3
      %v5416 = vsel %vm693, %v5413, %v5415
      %v5433 = vadd.f32 %v5309, %v5379
      %v5434 = vadd.f32 %v5310, %v5381
      %v5435 = vadd.f32 %v5311, %v5384
      %v5436 = vadd.f32 %v5312, %v5386
      %v5437 = vadd.f32 %v5313, %v5389
      %v5438 = vadd.f32 %v5314, %v5391
      %v5439 = vadd.f32 %v5315, %v5394
      %v5440 = vadd.f32 %v5316, %v5396
      %v5441 = vadd.f32 %v5317, %v5399
      %v5442 = vadd.f32 %v5318, %v5401
      %v5443 = vadd.f32 %v5319, %v5404
      %v5444 = vadd.f32 %v5320, %v5406
      %v5445 = vadd.f32 %v5321, %v5409
      %v5446 = vadd.f32 %v5322, %v5411
      %v5447 = vadd.f32 %v5323, %v5414
      %v5448 = vadd.f32 %v5324, %v5416
      %v5449 = vlaneseq
      %v5450 = vshrl.u32 %v5449, 7
      %v5451 = vsub.s32 4, %v5450
      %v5452 = vrot.slane %v354, %v5451
      %v5453 = vmul.f32 %v324, %v5452
      %v5454 = vmul.f32 %v325, %v5452
      %v5455 = vmul.f32 %v326, %v5452
      %v5456 = vmul.f32 %v327, %v5452
      %v5457 = vmul.f32 %v328, %v5452
      %v5458 = vmul.f32 %v329, %v5452
      %v5459 = vmul.f32 %v330, %v5452
      %v5460 = vmul.f32 %v331, %v5452
      %v5461 = vmul.f32 %v332, %v5452
      %v5462 = vmul.f32 %v333, %v5452
      %v5463 = vmul.f32 %v334, %v5452
      %v5464 = vmul.f32 %v335, %v5452
      %v5465 = vmul.f32 %v336, %v5452
      %v5466 = vmul.f32 %v337, %v5452
      %v5467 = vmul.f32 %v338, %v5452
      %v5468 = vmul.f32 %v339, %v5452
      %v5469 = vmul.f32 %v340, %v5452
      %v5470 = vmul.f32 %v341, %v5452
      %v5471 = vmul.f32 %v342, %v5452
      %v5472 = vmul.f32 %v343, %v5452
      %v5473 = vmul.f32 %v344, %v5452
      %v5474 = vmul.f32 %v345, %v5452
      %v5475 = vmul.f32 %v346, %v5452
      %v5476 = vmul.f32 %v347, %v5452
      %v5501 = vrot.slane %v5453, 4
      %v5502 = vrot.slane %v5454, 4
      %v5503 = vsel %vm818, %v5501, %v5502
      %v5504 = vrot.slane %v5455, 4
      %v5505 = vsel %vm818, %v5502, %v5504
      %v5506 = vrot.slane %v5456, 4
      %v5507 = vrot.slane %v5457, 4
      %v5508 = vsel %vm818, %v5506, %v5507
      %v5509 = vrot.slane %v5458, 4
      %v5510 = vsel %vm818, %v5507, %v5509
      %v5511 = vrot.slane %v5459, 4
      %v5512 = vrot.slane %v5460, 4
      %v5513 = vsel %vm818, %v5511, %v5512
      %v5514 = vrot.slane %v5461, 4
      %v5515 = vsel %vm818, %v5512, %v5514
      %v5516 = vrot.slane %v5462, 4
      %v5517 = vrot.slane %v5463, 4
      %v5518 = vsel %vm818, %v5516, %v5517
      %v5519 = vrot.slane %v5464, 4
      %v5520 = vsel %vm818, %v5517, %v5519
      %v5521 = vrot.slane %v5465, 4
      %v5522 = vrot.slane %v5466, 4
      %v5523 = vsel %vm818, %v5521, %v5522
      %v5524 = vrot.slane %v5467, 4
      %v5525 = vsel %vm818, %v5522, %v5524
      %v5526 = vrot.slane %v5468, 4
      %v5527 = vrot.slane %v5469, 4
      %v5528 = vsel %vm818, %v5526, %v5527
      %v5529 = vrot.slane %v5470, 4
      %v5530 = vsel %vm818, %v5527, %v5529
      %v5531 = vrot.slane %v5471, 4
      %v5532 = vrot.slane %v5472, 4
      %v5533 = vsel %vm818, %v5531, %v5532
      %v5534 = vrot.slane %v5473, 4
      %v5535 = vsel %vm818, %v5532, %v5534
      %v5536 = vrot.slane %v5474, 4
      %v5537 = vrot.slane %v5475, 4
      %v5538 = vsel %vm818, %v5536, %v5537
      %v5539 = vrot.slane %v5476, 4
      %v5540 = vsel %vm818, %v5537, %v5539
      %v5557 = vadd.f32 %v5433, %v5503
      %v5558 = vadd.f32 %v5434, %v5505
      %v5559 = vadd.f32 %v5435, %v5508
      %v5560 = vadd.f32 %v5436, %v5510
      %v5561 = vadd.f32 %v5437, %v5513
      %v5562 = vadd.f32 %v5438, %v5515
      %v5563 = vadd.f32 %v5439, %v5518
      %v5564 = vadd.f32 %v5440, %v5520
      %v5565 = vadd.f32 %v5441, %v5523
      %v5566 = vadd.f32 %v5442, %v5525
      %v5567 = vadd.f32 %v5443, %v5528
      %v5568 = vadd.f32 %v5444, %v5530
      %v5569 = vadd.f32 %v5445, %v5533
      %v5570 = vadd.f32 %v5446, %v5535
      %v5571 = vadd.f32 %v5447, %v5538
      %v5572 = vadd.f32 %v5448, %v5540
      %v5573 = vlaneseq
      %v5574 = vshrl.u32 %v5573, 7
      %v5575 = vsub.s32 5, %v5574
      %v5576 = vrot.slane %v354, %v5575
      %v5577 = vmul.f32 %v324, %v5576
      %v5578 = vmul.f32 %v325, %v5576
      %v5579 = vmul.f32 %v326, %v5576
      %v5580 = vmul.f32 %v327, %v5576
      %v5581 = vmul.f32 %v328, %v5576
      %v5582 = vmul.f32 %v329, %v5576
      %v5583 = vmul.f32 %v330, %v5576
      %v5584 = vmul.f32 %v331, %v5576
      %v5585 = vmul.f32 %v332, %v5576
      %v5586 = vmul.f32 %v333, %v5576
      %v5587 = vmul.f32 %v334, %v5576
      %v5588 = vmul.f32 %v335, %v5576
      %v5589 = vmul.f32 %v336, %v5576
      %v5590 = vmul.f32 %v337, %v5576
      %v5591 = vmul.f32 %v338, %v5576
      %v5592 = vmul.f32 %v339, %v5576
      %v5593 = vmul.f32 %v340, %v5576
      %v5594 = vmul.f32 %v341, %v5576
      %v5595 = vmul.f32 %v342, %v5576
      %v5596 = vmul.f32 %v343, %v5576
      %v5597 = vmul.f32 %v344, %v5576
      %v5598 = vmul.f32 %v345, %v5576
      %v5599 = vmul.f32 %v346, %v5576
      %v5600 = vmul.f32 %v347, %v5576
      %v5625 = vrot.slane %v5577, 5
      %v5626 = vrot.slane %v5578, 5
      %v5627 = vsel %vm943, %v5625, %v5626
      %v5628 = vrot.slane %v5579, 5
      %v5629 = vsel %vm943, %v5626, %v5628
      %v5630 = vrot.slane %v5580, 5
      %v5631 = vrot.slane %v5581, 5
      %v5632 = vsel %vm943, %v5630, %v5631
      %v5633 = vrot.slane %v5582, 5
      %v5634 = vsel %vm943, %v5631, %v5633
      %v5635 = vrot.slane %v5583, 5
      %v5636 = vrot.slane %v5584, 5
      %v5637 = vsel %vm943, %v5635, %v5636
      %v5638 = vrot.slane %v5585, 5
      %v5639 = vsel %vm943, %v5636, %v5638
      %v5640 = vrot.slane %v5586, 5
      %v5641 = vrot.slane %v5587, 5
      %v5642 = vsel %vm943, %v5640, %v5641
      %v5643 = vrot.slane %v5588, 5
      %v5644 = vsel %vm943, %v5641, %v5643
      %v5645 = vrot.slane %v5589, 5
      %v5646 = vrot.slane %v5590, 5
      %v5647 = vsel %vm943, %v5645, %v5646
      %v5648 = vrot.slane %v5591, 5
      %v5649 = vsel %vm943, %v5646, %v5648
      %v5650 = vrot.slane %v5592, 5
      %v5651 = vrot.slane %v5593, 5
      %v5652 = vsel %vm943, %v5650, %v5651
      %v5653 = vrot.slane %v5594, 5
      %v5654 = vsel %vm943, %v5651, %v5653
      %v5655 = vrot.slane %v5595, 5
      %v5656 = vrot.slane %v5596, 5
      %v5657 = vsel %vm943, %v5655, %v5656
      %v5658 = vrot.slane %v5597, 5
      %v5659 = vsel %vm943, %v5656, %v5658
      %v5660 = vrot.slane %v5598, 5
      %v5661 = vrot.slane %v5599, 5
      %v5662 = vsel %vm943, %v5660, %v5661
      %v5663 = vrot.slane %v5600, 5
      %v5664 = vsel %vm943, %v5661, %v5663
      %v5681 = vadd.f32 %v5557, %v5627
      %v5682 = vadd.f32 %v5558, %v5629
      %v5683 = vadd.f32 %v5559, %v5632
      %v5684 = vadd.f32 %v5560, %v5634
      %v5685 = vadd.f32 %v5561, %v5637
      %v5686 = vadd.f32 %v5562, %v5639
      %v5687 = vadd.f32 %v5563, %v5642
      %v5688 = vadd.f32 %v5564, %v5644
      %v5689 = vadd.f32 %v5565, %v5647
      %v5690 = vadd.f32 %v5566, %v5649
      %v5691 = vadd.f32 %v5567, %v5652
      %v5692 = vadd.f32 %v5568, %v5654
      %v5693 = vadd.f32 %v5569, %v5657
      %v5694 = vadd.f32 %v5570, %v5659
      %v5695 = vadd.f32 %v5571, %v5662
      %v5696 = vadd.f32 %v5572, %v5664
      %v5697 = vlaneseq
      %v5698 = vshrl.u32 %v5697, 7
      %v5699 = vsub.s32 6, %v5698
      %v5700 = vrot.slane %v354, %v5699
      %v5701 = vmul.f32 %v324, %v5700
      %v5702 = vmul.f32 %v325, %v5700
      %v5703 = vmul.f32 %v326, %v5700
      %v5704 = vmul.f32 %v327, %v5700
      %v5705 = vmul.f32 %v328, %v5700
      %v5706 = vmul.f32 %v329, %v5700
      %v5707 = vmul.f32 %v330, %v5700
      %v5708 = vmul.f32 %v331, %v5700
      %v5709 = vmul.f32 %v332, %v5700
      %v5710 = vmul.f32 %v333, %v5700
      %v5711 = vmul.f32 %v334, %v5700
      %v5712 = vmul.f32 %v335, %v5700
      %v5713 = vmul.f32 %v336, %v5700
      %v5714 = vmul.f32 %v337, %v5700
      %v5715 = vmul.f32 %v338, %v5700
      %v5716 = vmul.f32 %v339, %v5700
      %v5717 = vmul.f32 %v340, %v5700
      %v5718 = vmul.f32 %v341, %v5700
      %v5719 = vmul.f32 %v342, %v5700
      %v5720 = vmul.f32 %v343, %v5700
      %v5721 = vmul.f32 %v344, %v5700
      %v5722 = vmul.f32 %v345, %v5700
      %v5723 = vmul.f32 %v346, %v5700
      %v5724 = vmul.f32 %v347, %v5700
      %v5749 = vrot.slane %v5701, 6
      %v5750 = vrot.slane %v5702, 6
      %v5751 = vsel %vm1068, %v5749, %v5750
      %v5752 = vrot.slane %v5703, 6
      %v5753 = vsel %vm1068, %v5750, %v5752
      %v5754 = vrot.slane %v5704, 6
      %v5755 = vrot.slane %v5705, 6
      %v5756 = vsel %vm1068, %v5754, %v5755
      %v5757 = vrot.slane %v5706, 6
      %v5758 = vsel %vm1068, %v5755, %v5757
      %v5759 = vrot.slane %v5707, 6
      %v5760 = vrot.slane %v5708, 6
      %v5761 = vsel %vm1068, %v5759, %v5760
      %v5762 = vrot.slane %v5709, 6
      %v5763 = vsel %vm1068, %v5760, %v5762
      %v5764 = vrot.slane %v5710, 6
      %v5765 = vrot.slane %v5711, 6
      %v5766 = vsel %vm1068, %v5764, %v5765
      %v5767 = vrot.slane %v5712, 6
      %v5768 = vsel %vm1068, %v5765, %v5767
      %v5769 = vrot.slane %v5713, 6
      %v5770 = vrot.slane %v5714, 6
      %v5771 = vsel %vm1068, %v5769, %v5770
      %v5772 = vrot.slane %v5715, 6
      %v5773 = vsel %vm1068, %v5770, %v5772
      %v5774 = vrot.slane %v5716, 6
      %v5775 = vrot.slane %v5717, 6
      %v5776 = vsel %vm1068, %v5774, %v5775
      %v5777 = vrot.slane %v5718, 6
      %v5778 = vsel %vm1068, %v5775, %v5777
      %v5779 = vrot.slane %v5719, 6
      %v5780 = vrot.slane %v5720, 6
      %v5781 = vsel %vm1068, %v5779, %v5780
      %v5782 = vrot.slane %v5721, 6
      %v5783 = vsel %vm1068, %v5780, %v5782
      %v5784 = vrot.slane %v5722, 6
      %v5785 = vrot.slane %v5723, 6
      %v5786 = vsel %vm1068, %v5784, %v5785
      %v5787 = vrot.slane %v5724, 6
      %v5788 = vsel %vm1068, %v5785, %v5787
      %v5805 = vadd.f32 %v5681, %v5751
      %v5806 = vadd.f32 %v5682, %v5753
      %v5807 = vadd.f32 %v5683, %v5756
      %v5808 = vadd.f32 %v5684, %v5758
      %v5809 = vadd.f32 %v5685, %v5761
      %v5810 = vadd.f32 %v5686, %v5763
      %v5811 = vadd.f32 %v5687, %v5766
      %v5812 = vadd.f32 %v5688, %v5768
      %v5813 = vadd.f32 %v5689, %v5771
      %v5814 = vadd.f32 %v5690, %v5773
      %v5815 = vadd.f32 %v5691, %v5776
      %v5816 = vadd.f32 %v5692, %v5778
      %v5817 = vadd.f32 %v5693, %v5781
      %v5818 = vadd.f32 %v5694, %v5783
      %v5819 = vadd.f32 %v5695, %v5786
      %v5820 = vadd.f32 %v5696, %v5788
      %v5821 = vld [vmem:[%s2] sm:$0x1]
      %v5823 = vlaneseq
      %v5824 = vshrl.u32 %v5823, 7
      %v5825 = vsub.s32 0, %v5824
      %v5826 = vrot.slane %v5821, %v5825
      %v5828 = vadd.f32 %v5805, %v5826
      %v5829 = vadd.f32 %v5806, %v5826
      %v5830 = vadd.f32 %v5807, %v5826
      %v5831 = vadd.f32 %v5808, %v5826
      %v5832 = vadd.f32 %v5809, %v5826
      %v5833 = vadd.f32 %v5810, %v5826
      %v5834 = vadd.f32 %v5811, %v5826
      %v5835 = vadd.f32 %v5812, %v5826
      %v5836 = vadd.f32 %v5813, %v5826
      %v5837 = vadd.f32 %v5814, %v5826
      %v5838 = vadd.f32 %v5815, %v5826
      %v5839 = vadd.f32 %v5816, %v5826
      %v5840 = vadd.f32 %v5817, %v5826
      %v5841 = vadd.f32 %v5818, %v5826
      %v5842 = vadd.f32 %v5819, %v5826
      %v5843 = vadd.f32 %v5820, %v5826
      %v5844 = vpack.c.bf16 %v5829, %v5828
      %v5845 = vpack.c.bf16 %v5831, %v5830
      %v5846 = vpack.c.bf16 %v5833, %v5832
      %v5847 = vpack.c.bf16 %v5835, %v5834
      %v5848 = vpack.c.bf16 %v5837, %v5836
      %v5849 = vpack.c.bf16 %v5839, %v5838
      %v5850 = vpack.c.bf16 %v5841, %v5840
      %v5851 = vpack.c.bf16 %v5843, %v5842
      %v5852 = vld [vmem:[%s3] sm:$0xf]
      %v5853 = vld [vmem:[%s3 + $0x4] sm:$0xf]
      %v5854 = vld [vmem:[%s3 + $0x8] sm:$0xf]
      %v5855 = vld [vmem:[%s3 + $0xc] sm:$0xf]
      %v5856 = vld [vmem:[%s4] sm:$0x1]
      %v5858 = vlaneseq
      %v5859 = vshrl.u32 %v5858, 7
      %v5860 = vsub.s32 0, %v5859
      %v5861 = vrot.slane %v5856, %v5860
      %v5867 = vunpack.c.l.b16 %v5852
      %v5868 = vunpack.c.l.b16 %v5853
      %v5869 = vunpack.c.l.b16 %v5854
      %v5870 = vunpack.c.l.b16 %v5855
      %v5871 = vpack.c.b16 %v5868, %v5867
      %v5872 = vpack.c.b16 %v5870, %v5869
      %vm5875 = vcmask 261120
      %v5877 = vsel %vm5875, %v5844, 0
      %v5880 = vsel %vm5875, %v5845, 0
      %v5883 = vsel %vm5875, %v5846, 0
      %v5886 = vsel %vm5875, %v5847, 0
      %v5889 = vsel %vm5875, %v5848, 0
      %v5892 = vsel %vm5875, %v5849, 0
      %v5895 = vsel %vm5875, %v5850, 0
      %v5898 = vsel %vm5875, %v5851, 0
      %5900 = vmatprep.subr.bf16.mxu0 0
      %5901 = vmatpush1.bf16.msra.mxu0 %v5871
      %5902 = vmatprep.subr.bf16.mxu0 0
      %5903 = vmatpush1.bf16.msra.mxu0 %v5872
      %5904 = vmatprep.subr.bf16.mxu0 0
      %5905 = vmatpush1.bf16.msra.mxu0 0
      %5906 = vmatprep.subr.bf16.mxu0 0
      %5907 = vmatpush1.bf16.msra.mxu0 0
      %5908 = vmatprep.subr.bf16.mxu0 0
      %5909 = vmatpush1.bf16.msra.mxu0 0
      %5910 = vmatprep.subr.bf16.mxu0 0
      %5911 = vmatpush1.bf16.msra.mxu0 0
      %5912 = vmatprep.subr.bf16.mxu0 0
      %5913 = vmatpush1.bf16.msra.mxu0 0
      %5914 = vmatprep.subr.bf16.mxu0 0
      %5915 = vmatpush1.bf16.msra.mxu0 0
      %5916 = vmatprep.subr.bf16.mxu0 0
      %5917 = vmatpush1.bf16.msra.mxu0 0
      %5918 = vmatprep.subr.bf16.mxu0 0
      %5919 = vmatpush1.bf16.msra.mxu0 0
      %5920 = vmatprep.subr.bf16.mxu0 0
      %5921 = vmatpush1.bf16.msra.mxu0 0
      %5922 = vmatprep.subr.bf16.mxu0 0
      %5923 = vmatpush1.bf16.msra.mxu0 0
      %5924 = vmatprep.subr.bf16.mxu0 0
      %5925 = vmatpush1.bf16.msra.mxu0 0
      %5926 = vmatprep.subr.bf16.mxu0 0
      %5927 = vmatpush1.bf16.msra.mxu0 0
      %5928 = vmatprep.subr.bf16.mxu0 0
      %5929 = vmatpush1.bf16.msra.mxu0 0
      %5930 = vmatprep.subr.bf16.mxu0 0
      %5931 = vmatpush1.bf16.msra.mxu0 0
      %5932 = vmatprep.mubr.bf16.mxu0 0
      %5933 = vmatmul.mubr.bf16.gmra.mrb[0].mxu0 %v5877
      %v5934 = vpop.f32.mrb[0].mxu0
      %v5935 = vadd.f32 %v5861, %v5934
      %v5936 = vpop.f32.mrb[0].mxu0
      %v5937 = vpop.f32.mrb[0].mxu0
      %v5938 = vadd.f32 %v5861, %v5937
      %v5939 = vpop.f32.mrb[0].mxu0
      %5940 = vmatprep.mubr.bf16.mxu0 0
      %5941 = vmatmul.mubr.bf16.gmra.mrb[0].mxu0 %v5880
      %v5942 = vpop.f32.mrb[0].mxu0
      %v5943 = vadd.f32 %v5861, %v5942
      %v5944 = vpop.f32.mrb[0].mxu0
      %v5945 = vpop.f32.mrb[0].mxu0
      %v5946 = vadd.f32 %v5861, %v5945
      %v5947 = vpop.f32.mrb[0].mxu0
      %5948 = vmatprep.mubr.bf16.mxu0 0
      %5949 = vmatmul.mubr.bf16.gmra.mrb[0].mxu0 %v5883
      %v5950 = vpop.f32.mrb[0].mxu0
      %v5951 = vadd.f32 %v5861, %v5950
      %v5952 = vpop.f32.mrb[0].mxu0
      %v5953 = vpop.f32.mrb[0].mxu0
      %v5954 = vadd.f32 %v5861, %v5953
      %v5955 = vpop.f32.mrb[0].mxu0
      %5956 = vmatprep.mubr.bf16.mxu0 0
      %5957 = vmatmul.mubr.bf16.gmra.mrb[0].mxu0 %v5886
      %v5958 = vpop.f32.mrb[0].mxu0
      %v5959 = vadd.f32 %v5861, %v5958
      %v5960 = vpop.f32.mrb[0].mxu0
      %v5961 = vpop.f32.mrb[0].mxu0
      %v5962 = vadd.f32 %v5861, %v5961
      %v5963 = vpop.f32.mrb[0].mxu0
      %5964 = vmatprep.mubr.bf16.mxu0 0
      %5965 = vmatmul.mubr.bf16.gmra.mrb[0].mxu0 %v5889
      %v5966 = vpop.f32.mrb[0].mxu0
      %v5967 = vadd.f32 %v5861, %v5966
      %v5968 = vpop.f32.mrb[0].mxu0
      %v5969 = vpop.f32.mrb[0].mxu0
      %v5970 = vadd.f32 %v5861, %v5969
      %v5971 = vpop.f32.mrb[0].mxu0
      %5972 = vmatprep.mubr.bf16.mxu0 0
      %5973 = vmatmul.mubr.bf16.gmra.mrb[0].mxu0 %v5892
      %v5974 = vpop.f32.mrb[0].mxu0
      %v5975 = vadd.f32 %v5861, %v5974
      %v5976 = vpop.f32.mrb[0].mxu0
      %v5977 = vpop.f32.mrb[0].mxu0
      %v5978 = vadd.f32 %v5861, %v5977
      %v5979 = vpop.f32.mrb[0].mxu0
      %5980 = vmatprep.mubr.bf16.mxu0 0
      %5981 = vmatmul.mubr.bf16.gmra.mrb[0].mxu0 %v5895
      %v5982 = vpop.f32.mrb[0].mxu0
      %v5983 = vadd.f32 %v5861, %v5982
      %v5984 = vpop.f32.mrb[0].mxu0
      %v5985 = vpop.f32.mrb[0].mxu0
      %v5986 = vadd.f32 %v5861, %v5985
      %v5987 = vpop.f32.mrb[0].mxu0
      %5988 = vmatprep.mubr.bf16.mxu0 0
      %5989 = vmatmul.mubr.bf16.gmra.mrb[0].mxu0 %v5898
      %v5990 = vpop.f32.mrb[0].mxu0
      %v5991 = vadd.f32 %v5861, %v5990
      %v5992 = vpop.f32.mrb[0].mxu0
      %v5993 = vpop.f32.mrb[0].mxu0
      %v5994 = vadd.f32 %v5861, %v5993
      %v5995 = vpop.f32.mrb[0].mxu0
      %5996 = vdwg.mxu0
      %v5997 = vmul.f32 %v5935, 0.5
      %v5998 = vmul.f32 %v5938, 0.5
      %v5999 = vmul.f32 %v5943, 0.5
      %v6000 = vmul.f32 %v5946, 0.5
      %v6001 = vmul.f32 %v5951, 0.5
      %v6002 = vmul.f32 %v5954, 0.5
      %v6003 = vmul.f32 %v5959, 0.5
      %v6004 = vmul.f32 %v5962, 0.5
      %v6005 = vmul.f32 %v5967, 0.5
      %v6006 = vmul.f32 %v5970, 0.5
      %v6007 = vmul.f32 %v5975, 0.5
      %v6008 = vmul.f32 %v5978, 0.5
      %v6009 = vmul.f32 %v5983, 0.5
      %v6010 = vmul.f32 %v5986, 0.5
      %v6011 = vmul.f32 %v5991, 0.5
      %v6012 = vmul.f32 %v5994, 0.5
      %v6013 = vmul.f32 %v5935, 0.70710677
      %v6014 = vmul.f32 %v5938, 0.70710677
      %v6015 = vmul.f32 %v5943, 0.70710677
      %v6016 = vmul.f32 %v5946, 0.70710677
      %v6017 = vmul.f32 %v5951, 0.70710677
      %v6018 = vmul.f32 %v5954, 0.70710677
      %v6019 = vmul.f32 %v5959, 0.70710677
      %v6020 = vmul.f32 %v5962, 0.70710677
      %v6021 = vmul.f32 %v5967, 0.70710677
      %v6022 = vmul.f32 %v5970, 0.70710677
      %v6023 = vmul.f32 %v5975, 0.70710677
      %v6024 = vmul.f32 %v5978, 0.70710677
      %v6025 = vmul.f32 %v5983, 0.70710677
      %v6026 = vmul.f32 %v5986, 0.70710677
      %v6027 = vmul.f32 %v5991, 0.70710677
      %v6028 = vmul.f32 %v5994, 0.70710677
      %v6029 = verf.f32.pop %v6013
      %v6030 = verf.f32.pop %v6014
      %v6031 = verf.f32.pop %v6015
      %v6032 = verf.f32.pop %v6016
      %v6033 = verf.f32.pop %v6017
      %v6034 = verf.f32.pop %v6018
      %v6035 = verf.f32.pop %v6019
      %v6036 = verf.f32.pop %v6020
      %v6037 = verf.f32.pop %v6021
      %v6038 = verf.f32.pop %v6022
      %v6039 = verf.f32.pop %v6023
      %v6040 = verf.f32.pop %v6024
      %v6041 = verf.f32.pop %v6025
      %v6042 = verf.f32.pop %v6026
      %v6043 = verf.f32.pop %v6027
      %v6044 = verf.f32.pop %v6028
      %v6045 = vadd.f32 %v6029, 1.0
      %v6046 = vadd.f32 %v6030, 1.0
      %v6047 = vadd.f32 %v6031, 1.0
      %v6048 = vadd.f32 %v6032, 1.0
      %v6049 = vadd.f32 %v6033, 1.0
      %v6050 = vadd.f32 %v6034, 1.0
      %v6051 = vadd.f32 %v6035, 1.0
      %v6052 = vadd.f32 %v6036, 1.0
      %v6053 = vadd.f32 %v6037, 1.0
      %v6054 = vadd.f32 %v6038, 1.0
      %v6055 = vadd.f32 %v6039, 1.0
      %v6056 = vadd.f32 %v6040, 1.0
      %v6057 = vadd.f32 %v6041, 1.0
      %v6058 = vadd.f32 %v6042, 1.0
      %v6059 = vadd.f32 %v6043, 1.0
      %v6060 = vadd.f32 %v6044, 1.0
      %v6061 = vmul.f32 %v5997, %v6045
      %v6062 = vmul.f32 %v5998, %v6046
      %v6063 = vmul.f32 %v5999, %v6047
      %v6064 = vmul.f32 %v6000, %v6048
      %v6065 = vmul.f32 %v6001, %v6049
      %v6066 = vmul.f32 %v6002, %v6050
      %v6067 = vmul.f32 %v6003, %v6051
      %v6068 = vmul.f32 %v6004, %v6052
      %v6069 = vmul.f32 %v6005, %v6053
      %v6070 = vmul.f32 %v6006, %v6054
      %v6071 = vmul.f32 %v6007, %v6055
      %v6072 = vmul.f32 %v6008, %v6056
      %v6073 = vmul.f32 %v6009, %v6057
      %v6074 = vmul.f32 %v6010, %v6058
      %v6075 = vmul.f32 %v6011, %v6059
      %v6076 = vmul.f32 %v6012, %v6060
      %v6077 = vpack.c.bf16 %v6062, %v6061
      %v6078 = vpack.c.bf16 %v6064, %v6063
      %v6079 = vpack.c.bf16 %v6066, %v6065
      %v6080 = vpack.c.bf16 %v6068, %v6067
      %v6081 = vpack.c.bf16 %v6070, %v6069
      %v6082 = vpack.c.bf16 %v6072, %v6071
      %v6083 = vpack.c.bf16 %v6074, %v6073
      %v6084 = vpack.c.bf16 %v6076, %v6075
      %v6085 = vld [vmem:[%s5] sm:$0xf]
      %v6086 = vld [vmem:[%s5 + $0x4] sm:$0xf]
      %v6087 = vld [vmem:[%s5 + $0x8] sm:$0xf]
      %v6088 = vld [vmem:[%s5 + $0xc] sm:$0xf]
      %v6089 = vld [vmem:[%s5 + $0x10] sm:$0xf]
      %v6090 = vld [vmem:[%s5 + $0x14] sm:$0xf]
      %v6091 = vld [vmem:[%s5 + $0x18] sm:$0xf]
      %v6092 = vld [vmem:[%s5 + $0x1c] sm:$0xf]
      %v6093 = vld [vmem:[%s5 + $0x20] sm:$0xf]
      %v6094 = vld [vmem:[%s5 + $0x24] sm:$0xf]
      %v6095 = vld [vmem:[%s5 + $0x28] sm:$0xf]
      %v6096 = vld [vmem:[%s5 + $0x2c] sm:$0xf]
      %v6097 = vld [vmem:[%s5 + $0x30] sm:$0xf]
      %v6098 = vld [vmem:[%s5 + $0x34] sm:$0xf]
      %v6099 = vld [vmem:[%s5 + $0x38] sm:$0xf]
      %v6100 = vld [vmem:[%s5 + $0x3c] sm:$0xf]
      %v6101 = vld [vmem:[%s6] sm:$0x1]
      %v6103 = vlaneseq
      %v6104 = vshrl.u32 %v6103, 7
      %v6105 = vsub.s32 0, %v6104
      %v6106 = vrot.slane %v6101, %v6105
      %v6124 = vunpack.c.l.b16 %v6085
      %v6125 = vunpack.c.l.b16 %v6086
      %v6126 = vunpack.c.l.b16 %v6087
      %v6127 = vunpack.c.l.b16 %v6088
      %v6128 = vunpack.c.l.b16 %v6089
      %v6129 = vunpack.c.l.b16 %v6090
      %v6130 = vunpack.c.l.b16 %v6091
      %v6131 = vunpack.c.l.b16 %v6092
      %v6132 = vunpack.c.l.b16 %v6093
      %v6133 = vunpack.c.l.b16 %v6094
      %v6134 = vunpack.c.l.b16 %v6095
      %v6135 = vunpack.c.l.b16 %v6096
      %v6136 = vunpack.c.l.b16 %v6097
      %v6137 = vunpack.c.l.b16 %v6098
      %v6138 = vunpack.c.l.b16 %v6099
      %v6139 = vunpack.c.l.b16 %v6100
      %v6140 = vpack.c.b16 %v6125, %v6124
      %v6141 = vpack.c.b16 %v6127, %v6126
      %v6142 = vpack.c.b16 %v6129, %v6128
      %v6143 = vpack.c.b16 %v6131, %v6130
      %v6144 = vpack.c.b16 %v6133, %v6132
      %v6145 = vpack.c.b16 %v6135, %v6134
      %v6146 = vpack.c.b16 %v6137, %v6136
      %v6147 = vpack.c.b16 %v6139, %v6138
      %6156 = vmatprep.subr.bf16.mxu0 0
      %6157 = vmatpush1.bf16.msra.mxu0 %v6140
      %6158 = vmatprep.subr.bf16.mxu0 0
      %6159 = vmatpush1.bf16.msra.mxu0 %v6141
      %6160 = vmatprep.subr.bf16.mxu0 0
      %6161 = vmatpush1.bf16.msra.mxu0 %v6142
      %6162 = vmatprep.subr.bf16.mxu0 0
      %6163 = vmatpush1.bf16.msra.mxu0 %v6143
      %6164 = vmatprep.subr.bf16.mxu0 0
      %6165 = vmatpush1.bf16.msra.mxu0 %v6144
      %6166 = vmatprep.subr.bf16.mxu0 0
      %6167 = vmatpush1.bf16.msra.mxu0 %v6145
      %6168 = vmatprep.subr.bf16.mxu0 0
      %6169 = vmatpush1.bf16.msra.mxu0 %v6146
      %6170 = vmatprep.subr.bf16.mxu0 0
      %6171 = vmatpush1.bf16.msra.mxu0 %v6147
      %6172 = vmatprep.subr.bf16.mxu0 0
      %6173 = vmatpush1.bf16.msra.mxu0 0
      %6174 = vmatprep.subr.bf16.mxu0 0
      %6175 = vmatpush1.bf16.msra.mxu0 0
      %6176 = vmatprep.subr.bf16.mxu0 0
      %6177 = vmatpush1.bf16.msra.mxu0 0
      %6178 = vmatprep.subr.bf16.mxu0 0
      %6179 = vmatpush1.bf16.msra.mxu0 0
      %6180 = vmatprep.subr.bf16.mxu0 0
      %6181 = vmatpush1.bf16.msra.mxu0 0
      %6182 = vmatprep.subr.bf16.mxu0 0
      %6183 = vmatpush1.bf16.msra.mxu0 0
      %6184 = vmatprep.subr.bf16.mxu0 0
      %6185 = vmatpush1.bf16.msra.mxu0 0
      %6186 = vmatprep.subr.bf16.mxu0 0
      %6187 = vmatpush1.bf16.msra.mxu0 0
      %6188 = vmatprep.mubr.bf16.mxu0 0
      %6189 = vmatmul.mubr.bf16.gmra.mrb[0].mxu0 %v6077
      %v6190 = vpop.f32.mrb[0].mxu0
      %v6191 = vadd.f32 %v6106, %v6190
      %v6192 = vpop.f32.mrb[0].mxu0
      %v6193 = vpop.f32.mrb[0].mxu0
      %v6194 = vadd.f32 %v6106, %v6193
      %v6195 = vpop.f32.mrb[0].mxu0
      %6196 = vmatprep.mubr.bf16.mxu0 0
      %6197 = vmatmul.mubr.bf16.gmra.mrb[0].mxu0 %v6078
      %v6198 = vpop.f32.mrb[0].mxu0
      %v6199 = vadd.f32 %v6106, %v6198
      %v6200 = vpop.f32.mrb[0].mxu0
      %v6201 = vpop.f32.mrb[0].mxu0
      %v6202 = vadd.f32 %v6106, %v6201
      %v6203 = vpop.f32.mrb[0].mxu0
      %6204 = vmatprep.mubr.bf16.mxu0 0
      %6205 = vmatmul.mubr.bf16.gmra.mrb[0].mxu0 %v6079
      %v6206 = vpop.f32.mrb[0].mxu0
      %v6207 = vadd.f32 %v6106, %v6206
      %v6208 = vpop.f32.mrb[0].mxu0
      %v6209 = vpop.f32.mrb[0].mxu0
      %v6210 = vadd.f32 %v6106, %v6209
      %v6211 = vpop.f32.mrb[0].mxu0
      %6212 = vmatprep.mubr.bf16.mxu0 0
      %6213 = vmatmul.mubr.bf16.gmra.mrb[0].mxu0 %v6080
      %v6214 = vpop.f32.mrb[0].mxu0
      %v6215 = vadd.f32 %v6106, %v6214
      %v6216 = vpop.f32.mrb[0].mxu0
      %v6217 = vpop.f32.mrb[0].mxu0
      %v6218 = vadd.f32 %v6106, %v6217
      %v6219 = vpop.f32.mrb[0].mxu0
      %6220 = vmatprep.mubr.bf16.mxu0 0
      %6221 = vmatmul.mubr.bf16.gmra.mrb[0].mxu0 %v6081
      %v6222 = vpop.f32.mrb[0].mxu0
      %v6223 = vadd.f32 %v6106, %v6222
      %v6224 = vpop.f32.mrb[0].mxu0
      %v6225 = vpop.f32.mrb[0].mxu0
      %v6226 = vadd.f32 %v6106, %v6225
      %v6227 = vpop.f32.mrb[0].mxu0
      %6228 = vmatprep.mubr.bf16.mxu0 0
      %6229 = vmatmul.mubr.bf16.gmra.mrb[0].mxu0 %v6082
      %v6230 = vpop.f32.mrb[0].mxu0
      %v6231 = vadd.f32 %v6106, %v6230
      %v6232 = vpop.f32.mrb[0].mxu0
      %v6233 = vpop.f32.mrb[0].mxu0
      %v6234 = vadd.f32 %v6106, %v6233
      %v6235 = vpop.f32.mrb[0].mxu0
      %6236 = vmatprep.mubr.bf16.mxu0 0
      %6237 = vmatmul.mubr.bf16.gmra.mrb[0].mxu0 %v6083
      %v6238 = vpop.f32.mrb[0].mxu0
      %v6239 = vadd.f32 %v6106, %v6238
      %v6240 = vpop.f32.mrb[0].mxu0
      %v6241 = vpop.f32.mrb[0].mxu0
      %v6242 = vadd.f32 %v6106, %v6241
      %v6243 = vpop.f32.mrb[0].mxu0
      %6244 = vmatprep.mubr.bf16.mxu0 0
      %6245 = vmatmul.mubr.bf16.gmra.mrb[0].mxu0 %v6084
      %v6246 = vpop.f32.mrb[0].mxu0
      %v6247 = vadd.f32 %v6106, %v6246
      %v6248 = vpop.f32.mrb[0].mxu0
      %v6249 = vpop.f32.mrb[0].mxu0
      %v6250 = vadd.f32 %v6106, %v6249
      %v6251 = vpop.f32.mrb[0].mxu0
      %6252 = vdwg.mxu0
      %v6277 = vrot.slane %v315, 3
      %v6278 = vrot.slane %v316, 3
      %v6279 = vsel %vm693, %v6277, %v6278
      %v6280 = vrot.slane %v317, 3
      %v6281 = vsel %vm693, %v6278, %v6280
      %v6282 = vrot.slane %v318, 3
      %v6283 = vrot.slane %v319, 3
      %v6284 = vsel %vm693, %v6282, %v6283
      %v6285 = vrot.slane %v320, 3
      %v6286 = vsel %vm693, %v6283, %v6285
      %v6287 = vrot.slane %v321, 3
      %v6288 = vrot.slane %v322, 3
      %v6289 = vsel %vm693, %v6287, %v6288
      %v6290 = vrot.slane %v323, 3
      %v6291 = vsel %vm693, %v6288, %v6290
      %v6292 = vrot.slane %v324, 3
      %v6293 = vrot.slane %v325, 3
      %v6294 = vsel %vm693, %v6292, %v6293
      %v6295 = vrot.slane %v326, 3
      %v6296 = vsel %vm693, %v6293, %v6295
      %v6297 = vrot.slane %v327, 3
      %v6298 = vrot.slane %v328, 3
      %v6299 = vsel %vm693, %v6297, %v6298
      %v6300 = vrot.slane %v329, 3
      %v6301 = vsel %vm693, %v6298, %v6300
      %v6302 = vrot.slane %v330, 3
      %v6303 = vrot.slane %v331, 3
      %v6304 = vsel %vm693, %v6302, %v6303
      %v6305 = vrot.slane %v332, 3
      %v6306 = vsel %vm693, %v6303, %v6305
      %v6307 = vrot.slane %v333, 3
      %v6308 = vrot.slane %v334, 3
      %v6309 = vsel %vm693, %v6307, %v6308
      %v6310 = vrot.slane %v335, 3
      %v6311 = vsel %vm693, %v6308, %v6310
      %v6312 = vrot.slane %v336, 3
      %v6313 = vrot.slane %v337, 3
      %v6314 = vsel %vm693, %v6312, %v6313
      %v6315 = vrot.slane %v338, 3
      %v6316 = vsel %vm693, %v6313, %v6315
      %v6333 = vadd.f32 %v6191, %v6279
      %v6334 = vadd.f32 %v6194, %v6281
      %v6335 = vadd.f32 %v6199, %v6284
      %v6336 = vadd.f32 %v6202, %v6286
      %v6337 = vadd.f32 %v6207, %v6289
      %v6338 = vadd.f32 %v6210, %v6291
      %v6339 = vadd.f32 %v6215, %v6294
      %v6340 = vadd.f32 %v6218, %v6296
      %v6341 = vadd.f32 %v6223, %v6299
      %v6342 = vadd.f32 %v6226, %v6301
      %v6343 = vadd.f32 %v6231, %v6304
      %v6344 = vadd.f32 %v6234, %v6306
      %v6345 = vadd.f32 %v6239, %v6309
      %v6346 = vadd.f32 %v6242, %v6311
      %v6347 = vadd.f32 %v6247, %v6314
      %v6348 = vadd.f32 %v6250, %v6316
      %6349 = vst.msk [vmem:[%s300] sm:$0xff] %vm5875, %v6333
      %6350 = vst.msk [vmem:[%s300 + $0x8] sm:$0xff] %vm5875, %v6334
      %6351 = vst.msk [vmem:[%s300 + $0x10] sm:$0xff] %vm5875, %v6335
      %6352 = vst.msk [vmem:[%s300 + $0x18] sm:$0xff] %vm5875, %v6336
      %6353 = vst.msk [vmem:[%s300 + $0x20] sm:$0xff] %vm5875, %v6337
      %6354 = vst.msk [vmem:[%s300 + $0x28] sm:$0xff] %vm5875, %v6338
      %6355 = vst.msk [vmem:[%s300 + $0x30] sm:$0xff] %vm5875, %v6339
      %6356 = vst.msk [vmem:[%s300 + $0x38] sm:$0xff] %vm5875, %v6340
      %6357 = vst.msk [vmem:[%s300 + $0x40] sm:$0xff] %vm5875, %v6341
      %6358 = vst.msk [vmem:[%s300 + $0x48] sm:$0xff] %vm5875, %v6342
      %6359 = vst.msk [vmem:[%s300 + $0x50] sm:$0xff] %vm5875, %v6343
      %6360 = vst.msk [vmem:[%s300 + $0x58] sm:$0xff] %vm5875, %v6344
      %6361 = vst.msk [vmem:[%s300 + $0x60] sm:$0xff] %vm5875, %v6345
      %6362 = vst.msk [vmem:[%s300 + $0x68] sm:$0xff] %vm5875, %v6346
      %6363 = vst.msk [vmem:[%s300 + $0x70] sm:$0xff] %vm5875, %v6347
      %6364 = vst.msk [vmem:[%s300 + $0x78] sm:$0xff] %vm5875, %v6348
      %s6365 = smul.u32 16, %s23
      %p6366 = scmp.lt.s32.totalorder %s22, 1
      %s6367 = scalar_select %p6366, %s22, 1
      %p6368 = scmp.lt.s32.totalorder %s6365, 31
      %s6369 = scalar_select %p6368, %s6365, 31
      %s6370 = smul.addr %s6367, 32
      %s6371 = sadd.s32 %s6369, %s6370
      %s6372 = smul.addr %s6371, 8
      %s6373 = scalar_lea.vmem %s7, %s6372
      // Predicated region
      $region49: #{tpu_custom_call.1} parent=47 // pred_check
        %p6374 = pneg %p202
      $region50: #{tpu_custom_call.1} parent=47 // pred_check_branch
        %6376 = sbr.rel (%p6374) target = $region52
      $region51: #{tpu_custom_call.1} parent=47 // pred_region
        %s6377 = smul.u32 16, %s23
      $region52: #{tpu_custom_call.1} parent=47 // pred_fallthru
        _
    $region48: #{tpu_custom_call.1} parent=5 // pred_fallthru
      _
    %p6378 = scmp.le.s32.totalorder 2, %s13
    // Predicated region
    $region53: #{tpu_custom_call.1} parent=5 // pred_check
      %p6379 = pneg %p6378
    $region54: #{tpu_custom_call.1} parent=5 // pred_check_branch
      %6381 = sbr.rel (%p6379) target = $region56
    $region55: #{tpu_custom_call.1} parent=5 // pred_region
      %s6382 = ssub.s32 %s13, 2
      // Predicated region
      $region57: #{tpu_custom_call.1} parent=55 // pred_check
        %p6383 = pneg %p208
      $region58: #{tpu_custom_call.1} parent=55 // pred_check_branch
        %6385 = sbr.rel (%p6383) target = $region60
      $region59: #{tpu_custom_call.1} parent=55 // pred_region
        %s6386 = smul.u32 16, %s25
        %p6387 = scmp.lt.s32.totalorder %s24, 1
        %s6388 = scalar_select %p6387, %s24, 1
        %p6389 = scmp.lt.s32.totalorder %s6386, 31
        %s6390 = scalar_select %p6389, %s6386, 31
        %s6391 = smul.addr %s6388, 32
        %s6392 = sadd.s32 %s6390, %s6391
        %s6393 = smul.addr %s6392, 8
        %s6394 = scalar_lea.vmem %s7, %s6393
      $region60: #{tpu_custom_call.1} parent=55 // pred_fallthru
        _
    $region56: #{tpu_custom_call.1} parent=5 // pred_fallthru
      _
  $region6: #{tpu_custom_call.1} parent=0 // loop_footer
    %s17 = sadd.s32 1, %s13
  $region7: #{tpu_custom_call.1} parent=0 // loop_footer_branch
    %12 = sbr.rel target = $region3
  $region8: #{tpu_custom_call.1} parent=0 // loop_exit
    _

</llo_original>
